<compile_context>
chip_gen: v5e
topology: v5e:2x2
jax: 0.10.0
libtpu: 0.0.40
codegen_flags: <defaults>
</compile_context>

<pallas_src>
import numpy as np
import jax
import jax.numpy as jnp
from jax import lax
from jax.experimental import pallas as pl
from jax.experimental.pallas import tpu as pltpu

# Model constants from the PyTorch module
d_k = d_v = 32
d_model = 128
n_heads = 4
d_ff = 512
LN_EPS = 1e-5  # PyTorch nn.LayerNorm default


def _layernorm(x):
    # nn.LayerNorm(d_model) is constructed fresh each forward -> gamma=1, beta=0
    mean = jnp.mean(x, axis=-1, keepdims=True)
    var = jnp.mean((x - mean) ** 2, axis=-1, keepdims=True)
    return (x - mean) * lax.rsqrt(var + LN_EPS)


def encoder_layer_kernel(mask_ref, x_ref, w_in_ref, wo_ref, w1_ref, w2_ref,
                         out_ref, attn_ref):
    Bt, S, D = x_ref.shape          # static block shape
    M = Bt * S

    # Flatten the (Bt, S, D) block to (M, D) for all dense matmuls.
    # With D = 128 and S a multiple of 8 this reshape is a pure re-indexing.
    x2d = x_ref[...].reshape(M, D)
    masked = mask_ref[...] > 0.5    # (Bt, S, S), True where masked

    # ---- fused input projection: [fc0 | W_Q*(1/sqrt(d_k)) | W_K | W_V] ----
    proj = jnp.dot(x2d, w_in_ref[...], preferred_element_type=jnp.float32)  # (M, 4D)
    residual = proj[:, 0:D]                       # (M, D)
    q = proj[:, D:2 * D].reshape(Bt, S, D)        # score scale already folded in
    k = proj[:, 2 * D:3 * D].reshape(Bt, S, D)
    v = proj[:, 3 * D:4 * D].reshape(Bt, S, D)

    wo = wo_ref[...]                              # (n_heads*d_v, D)

    # Accumulate fc(context) directly onto the residual (output + residual).
    acc = residual
    attn_heads = []
    for h in range(n_heads):
        qh = q[:, :, h * d_k:(h + 1) * d_k]       # (Bt, S, d_k)
        kh = k[:, :, h * d_k:(h + 1) * d_k]
        vh = v[:, :, h * d_v:(h + 1) * d_v]

        # batched dot, contraction over last dims (no explicit transpose)
        scores = jnp.einsum('bqd,bkd->bqk', qh, kh,
                            preferred_element_type=jnp.float32)   # (Bt, S, S)
        scores = jnp.where(masked, jnp.float32(-1e9), scores)

        m = jnp.max(scores, axis=-1, keepdims=True)
        e = jnp.exp(scores - m)
        p = e / jnp.sum(e, axis=-1, keepdims=True)
        attn_heads.append(p)

        ctx = jnp.einsum('bqk,bkd->bqd', p, vh,
                         preferred_element_type=jnp.float32)      # (Bt, S, d_v)
        # accumulate ctx_h @ fc[h*d_v:(h+1)*d_v, :] instead of concatenating
        acc = acc + jnp.dot(ctx.reshape(M, d_v),
                            wo[h * d_v:(h + 1) * d_v, :],
                            preferred_element_type=jnp.float32)

    # single batched store of all head probabilities
    attn_ref[...] = jnp.stack(attn_heads, axis=1)                 # (Bt, H, S, S)

    enc = _layernorm(acc)                                         # (M, D)

    # ---- PoswiseFeedForwardNet ----
    h1 = jnp.maximum(
        jnp.dot(enc, w1_ref[...], preferred_element_type=jnp.float32), 0.0)
    ff = jnp.dot(h1, w2_ref[...], preferred_element_type=jnp.float32)
    out_ref[...] = _layernorm(ff + enc).reshape(Bt, S, D)


def _pick_block_batch(B, S, max_rows=2048):
    """Largest divisor Bt of B with Bt*S <= max_rows, preferring >= 2 grid
    steps so the parallel batch axis can still shard across v7x's 2 cores."""
    candidates = [bt for bt in range(1, B + 1)
                  if B % bt == 0 and bt * S <= max_rows]
    if not candidates:
        return 1
    multi = [bt for bt in candidates if B // bt >= 2]
    return max(multi) if multi else max(candidates)


def encoder_layer(enc_inputs, attn_mask, params, block_batch=None):
    """enc_inputs: (B, S, d_model) f32; attn_mask: (B, S, S) f32 (1.0 = masked)."""
    B, S, D = enc_inputs.shape
    assert D == d_model
    Bt = block_batch if block_batch is not None else _pick_block_batch(B, S)
    assert B % Bt == 0
    grid = (B // Bt,)

    # Fuse the four input projections; fold 1/sqrt(d_k) into the W_Q columns.
    inv_sqrt_dk = np.float32(1.0 / np.sqrt(d_k))
    w_in = jnp.concatenate(
        [params["fc0"], params["wq"] * inv_sqrt_dk, params["wk"], params["wv"]],
        axis=1)                                   # (d_model, 4*d_model)

    # Weights have a constant block index across the grid (DMA'd once).
    # TODO(synk): at larger d_model/d_ff, mark these pl.Buffered(1) (or raise
    # vmem_limit_bytes) to avoid duplicate double-buffered weight copies.
    w_full = lambda shape: pl.BlockSpec(shape, lambda i: (0, 0))

    grid_spec = pltpu.PrefetchScalarGridSpec(
        num_scalar_prefetch=0,
        grid=grid,
        in_specs=[
            pl.BlockSpec((Bt, S, S), lambda i: (i, 0, 0)),        # mask
            pl.BlockSpec((Bt, S, D), lambda i: (i, 0, 0)),        # x
            w_full((d_model, 4 * d_model)),                       # fused in-proj
            w_full((n_heads * d_v, d_model)),                     # fc^T
            w_full((d_model, d_ff)),                              # ffn W1^T
            w_full((d_ff, d_model)),                              # ffn W2^T
        ],
        out_specs=[
            pl.BlockSpec((Bt, S, D), lambda i: (i, 0, 0)),              # enc_outputs
            pl.BlockSpec((Bt, n_heads, S, S), lambda i: (i, 0, 0, 0)),  # attn
        ],
    )

    out_shape = (
        jax.ShapeDtypeStruct((B, S, D), jnp.float32),
        jax.ShapeDtypeStruct((B, n_heads, S, S), jnp.float32),
    )

    return pl.pallas_call(
        encoder_layer_kernel,
        out_shape=out_shape,
        grid_spec=grid_spec,
        compiler_params=pltpu.CompilerParams(
            dimension_semantics=("parallel",),
            vmem_limit_bytes=32 * 1024 * 1024),
    )(attn_mask, enc_inputs, w_in,
      params["fc"], params["w1"], params["w2"])


def encoder_layer_ref(enc_inputs, attn_mask, params):
    """Pure-JAX reference matching the PyTorch forward."""
    B, S, D = enc_inputs.shape
    residual = enc_inputs @ params["fc0"]
    q = (enc_inputs @ params["wq"]).reshape(B, S, n_heads, d_k).transpose(0, 2, 1, 3)
    k = (enc_inputs @ params["wk"]).reshape(B, S, n_heads, d_k).transpose(0, 2, 1, 3)
    v = (enc_inputs @ params["wv"]).reshape(B, S, n_heads, d_v).transpose(0, 2, 1, 3)
    scores = jnp.einsum("bhqd,bhkd->bhqk", q, k) / np.sqrt(d_k)
    scores = jnp.where(attn_mask[:, None, :, :] > 0.5, -1e9, scores)
    attn = jax.nn.softmax(scores, axis=-1)
    context = jnp.einsum("bhqk,bhkd->bhqd", attn, v)
    context = context.transpose(0, 2, 1, 3).reshape(B, S, n_heads * d_v)
    mha_out = context @ params["fc"]
    enc = _layernorm(mha_out + residual)
    ff = jnp.maximum(enc @ params["w1"], 0.0) @ params["w2"]
    out = _layernorm(ff + enc)
    return out, attn


if __name__ == "__main__":
    key = jax.random.PRNGKey(0)
    B, S = 8, 16

    keys = jax.random.split(key, 8)
    scale = 0.05
    # Linear(in, out) weights stored pre-transposed as (in, out)
    params = {
        "fc0": scale * jax.random.normal(keys[0], (d_model, d_model), jnp.float32),
        "wq":  scale * jax.random.normal(keys[1], (d_model, n_heads * d_k), jnp.float32),
        "wk":  scale * jax.random.normal(keys[2], (d_model, n_heads * d_k), jnp.float32),
        "wv":  scale * jax.random.normal(keys[3], (d_model, n_heads * d_v), jnp.float32),
        "fc":  scale * jax.random.normal(keys[4], (n_heads * d_v, d_model), jnp.float32),
        "w1":  scale * jax.random.normal(keys[5], (d_model, d_ff), jnp.float32),
        "w2":  scale * jax.random.normal(keys[6], (d_ff, d_model), jnp.float32),
    }

    enc_inputs = jax.random.normal(keys[7], (B, S, d_model), jnp.float32)

    # Padding-style mask: positions >= length are masked for all queries.
    lengths = jnp.array([16, 12, 9, 16, 5, 8, 13, 3], dtype=jnp.int32)
    key_pos = jnp.arange(S)[None, None, :]                         # (1, 1, S)
    attn_mask = (key_pos >= lengths[:, None, None]).astype(jnp.float32)
    attn_mask = jnp.broadcast_to(attn_mask, (B, S, S))

    enc_out, attn = encoder_layer(enc_inputs, attn_mask, params)
    jax.block_until_ready((enc_out, attn))

    ref_out, ref_attn = encoder_layer_ref(enc_inputs, attn_mask, params)
    np.testing.assert_allclose(np.asarray(enc_out), np.asarray(ref_out),
                               rtol=1e-4, atol=1e-4)
    np.testing.assert_allclose(np.asarray(attn), np.asarray(ref_attn),
                               rtol=1e-4, atol=1e-4)

    print("KERNEL_OK")
</pallas_src>

<mosaic_0001>
module attributes {stable_mosaic.version = 11 : i64} {
  func.func @encoder_layer_kernel(%arg0: i32, %arg1: memref<4x16x16xf32, #tpu.memory_space<vmem>>, %arg2: memref<4x16x128xf32, #tpu.memory_space<vmem>>, %arg3: memref<128x512xf32, #tpu.memory_space<vmem>>, %arg4: memref<128x128xf32, #tpu.memory_space<vmem>>, %arg5: memref<128x512xf32, #tpu.memory_space<vmem>>, %arg6: memref<512x128xf32, #tpu.memory_space<vmem>>, %arg7: memref<4x16x128xf32, #tpu.memory_space<vmem>>, %arg8: memref<4x4x16x16xf32, #tpu.memory_space<vmem>>) attributes {dimension_semantics = [#tpu.dimension_semantics<parallel>], iteration_bounds = array<i64: 2>, scalar_prefetch = 0 : i64, scratch_operands = 0 : i64, tpu.core_type = #tpu.core_type<tc>, window_params = [{transform_indices = @transform_0, window_bounds = array<i64: 4, 16, 16>}, {transform_indices = @transform_1, window_bounds = array<i64: 4, 16, 128>}, {pipeline_mode = #tpu.pipeline_mode<synchronous>, transform_indices = @transform_2, window_bounds = array<i64: 128, 512>}, {pipeline_mode = #tpu.pipeline_mode<synchronous>, transform_indices = @transform_3, window_bounds = array<i64: 128, 128>}, {pipeline_mode = #tpu.pipeline_mode<synchronous>, transform_indices = @transform_4, window_bounds = array<i64: 128, 512>}, {pipeline_mode = #tpu.pipeline_mode<synchronous>, transform_indices = @transform_5, window_bounds = array<i64: 512, 128>}, {transform_indices = @transform_6, window_bounds = array<i64: 4, 16, 128>}, {transform_indices = @transform_7, window_bounds = array<i64: 4, 4, 16, 16>}]} {
    %c0 = arith.constant 0 : index
    %c0_0 = arith.constant 0 : index
    %c0_1 = arith.constant 0 : index
    %0 = vector.load %arg2[%c0, %c0_0, %c0_1] : memref<4x16x128xf32, #tpu.memory_space<vmem>>, vector<4x16x128xf32>
    %1 = vector.shape_cast %0 : vector<4x16x128xf32> to vector<64x128xf32>
    %c0_2 = arith.constant 0 : index
    %c0_3 = arith.constant 0 : index
    %c0_4 = arith.constant 0 : index
    %2 = vector.load %arg1[%c0_2, %c0_3, %c0_4] : memref<4x16x16xf32, #tpu.memory_space<vmem>>, vector<4x16x16xf32>
    %cst = arith.constant 5.000000e-01 : f32
    %3 = vector.broadcast %cst : f32 to vector<4x16x16xf32>
    %4 = arith.cmpf ogt, %2, %3 : vector<4x16x16xf32>
    %c0_5 = arith.constant 0 : index
    %c0_6 = arith.constant 0 : index
    %5 = vector.load %arg3[%c0_5, %c0_6] : memref<128x512xf32, #tpu.memory_space<vmem>>, vector<128x512xf32>
    %cst_7 = arith.constant dense<0.000000e+00> : vector<64x512xf32>
    %6 = tpu.matmul %1, %5, %cst_7 {dimension_numbers = #tpu.dot_dimension_numbers<[1], [0], [0], [1], [0, 0, 1, 1], [], []>} : vector<64x128xf32>, vector<128x512xf32>, vector<64x512xf32> -> vector<64x512xf32>
    %7 = vector.extract_strided_slice %6 {offsets = [0, 0], sizes = [64, 128], strides = [1, 1]} : vector<64x512xf32> to vector<64x128xf32>
    %8 = vector.extract_strided_slice %6 {offsets = [0, 128], sizes = [64, 128], strides = [1, 1]} : vector<64x512xf32> to vector<64x128xf32>
    %9 = vector.shape_cast %8 : vector<64x128xf32> to vector<4x16x128xf32>
    %10 = vector.extract_strided_slice %6 {offsets = [0, 256], sizes = [64, 128], strides = [1, 1]} : vector<64x512xf32> to vector<64x128xf32>
    %11 = vector.shape_cast %10 : vector<64x128xf32> to vector<4x16x128xf32>
    %12 = vector.extract_strided_slice %6 {offsets = [0, 384], sizes = [64, 128], strides = [1, 1]} : vector<64x512xf32> to vector<64x128xf32>
    %13 = vector.shape_cast %12 : vector<64x128xf32> to vector<4x16x128xf32>
    %c0_8 = arith.constant 0 : index
    %c0_9 = arith.constant 0 : index
    %14 = vector.load %arg4[%c0_8, %c0_9] : memref<128x128xf32, #tpu.memory_space<vmem>>, vector<128x128xf32>
    %15 = vector.extract_strided_slice %9 {offsets = [0, 0, 0], sizes = [4, 16, 32], strides = [1, 1, 1]} : vector<4x16x128xf32> to vector<4x16x32xf32>
    %16 = vector.extract_strided_slice %11 {offsets = [0, 0, 0], sizes = [4, 16, 32], strides = [1, 1, 1]} : vector<4x16x128xf32> to vector<4x16x32xf32>
    %17 = vector.extract_strided_slice %13 {offsets = [0, 0, 0], sizes = [4, 16, 32], strides = [1, 1, 1]} : vector<4x16x128xf32> to vector<4x16x32xf32>
    "tpu.trace_start"() <{level = 10 : i32, message = "bqd,bkd->bqk"}> : () -> ()
    %cst_10 = arith.constant dense<0.000000e+00> : vector<4x16x16xf32>
    %18 = tpu.matmul %15, %16, %cst_10 {dimension_numbers = #tpu.dot_dimension_numbers<[2], [2], [1], [1], [0, 0, 0, 1, 1, 1], [0], [0]>} : vector<4x16x32xf32>, vector<4x16x32xf32>, vector<4x16x16xf32> -> vector<4x16x16xf32>
    %cst_11 = arith.constant -1.000000e+09 : f32
    "tpu.trace_stop"() : () -> ()
    %19 = vector.broadcast %cst_11 : f32 to vector<4x16x16xf32>
    %20 = arith.select %4, %19, %18 : vector<4x16x16xi1>, vector<4x16x16xf32>
    %cst_12 = arith.constant dense<0xFF800000> : vector<4x16xf32>
    %21 = vector.multi_reduction <maximumf>, %20, %cst_12 [2] : vector<4x16x16xf32> to vector<4x16xf32>
    %22 = vector.shape_cast %21 : vector<4x16xf32> to vector<4x16x1xf32>
    %23 = vector.broadcast %22 : vector<4x16x1xf32> to vector<4x16x16xf32>
    %24 = arith.subf %20, %23 : vector<4x16x16xf32>
    %25 = math.exp %24 : vector<4x16x16xf32>
    %cst_13 = arith.constant dense<0.000000e+00> : vector<4x16xf32>
    %26 = vector.multi_reduction <add>, %25, %cst_13 [2] : vector<4x16x16xf32> to vector<4x16xf32>
    %27 = vector.shape_cast %26 : vector<4x16xf32> to vector<4x16x1xf32>
    %28 = vector.broadcast %27 : vector<4x16x1xf32> to vector<4x16x16xf32>
    %29 = arith.divf %25, %28 : vector<4x16x16xf32>
    "tpu.trace_start"() <{level = 10 : i32, message = "bqk,bkd->bqd"}> : () -> ()
    %cst_14 = arith.constant dense<0.000000e+00> : vector<4x16x32xf32>
    %30 = tpu.matmul %29, %17, %cst_14 {dimension_numbers = #tpu.dot_dimension_numbers<[2], [1], [1], [2], [0, 0, 0, 1, 1, 2], [0], [0]>} : vector<4x16x16xf32>, vector<4x16x32xf32>, vector<4x16x32xf32> -> vector<4x16x32xf32>
    "tpu.trace_stop"() : () -> ()
    %31 = vector.shape_cast %30 : vector<4x16x32xf32> to vector<64x32xf32>
    %32 = vector.extract_strided_slice %14 {offsets = [0, 0], sizes = [32, 128], strides = [1, 1]} : vector<128x128xf32> to vector<32x128xf32>
    %cst_15 = arith.constant dense<0.000000e+00> : vector<64x128xf32>
    %33 = tpu.matmul %31, %32, %cst_15 {dimension_numbers = #tpu.dot_dimension_numbers<[1], [0], [0], [1], [0, 0, 1, 1], [], []>} : vector<64x32xf32>, vector<32x128xf32>, vector<64x128xf32> -> vector<64x128xf32>
    %34 = arith.addf %7, %33 : vector<64x128xf32>
    %35 = vector.extract_strided_slice %9 {offsets = [0, 0, 32], sizes = [4, 16, 32], strides = [1, 1, 1]} : vector<4x16x128xf32> to vector<4x16x32xf32>
    %36 = vector.extract_strided_slice %11 {offsets = [0, 0, 32], sizes = [4, 16, 32], strides = [1, 1, 1]} : vector<4x16x128xf32> to vector<4x16x32xf32>
    %37 = vector.extract_strided_slice %13 {offsets = [0, 0, 32], sizes = [4, 16, 32], strides = [1, 1, 1]} : vector<4x16x128xf32> to vector<4x16x32xf32>
    "tpu.trace_start"() <{level = 10 : i32, message = "bqd,bkd->bqk"}> : () -> ()
    %cst_16 = arith.constant dense<0.000000e+00> : vector<4x16x16xf32>
    %38 = tpu.matmul %35, %36, %cst_16 {dimension_numbers = #tpu.dot_dimension_numbers<[2], [2], [1], [1], [0, 0, 0, 1, 1, 1], [0], [0]>} : vector<4x16x32xf32>, vector<4x16x32xf32>, vector<4x16x16xf32> -> vector<4x16x16xf32>
    %cst_17 = arith.constant -1.000000e+09 : f32
    "tpu.trace_stop"() : () -> ()
    %39 = vector.broadcast %cst_17 : f32 to vector<4x16x16xf32>
    %40 = arith.select %4, %39, %38 : vector<4x16x16xi1>, vector<4x16x16xf32>
    %cst_18 = arith.constant dense<0xFF800000> : vector<4x16xf32>
    %41 = vector.multi_reduction <maximumf>, %40, %cst_18 [2] : vector<4x16x16xf32> to vector<4x16xf32>
    %42 = vector.shape_cast %41 : vector<4x16xf32> to vector<4x16x1xf32>
    %43 = vector.broadcast %42 : vector<4x16x1xf32> to vector<4x16x16xf32>
    %44 = arith.subf %40, %43 : vector<4x16x16xf32>
    %45 = math.exp %44 : vector<4x16x16xf32>
    %cst_19 = arith.constant dense<0.000000e+00> : vector<4x16xf32>
    %46 = vector.multi_reduction <add>, %45, %cst_19 [2] : vector<4x16x16xf32> to vector<4x16xf32>
    %47 = vector.shape_cast %46 : vector<4x16xf32> to vector<4x16x1xf32>
    %48 = vector.broadcast %47 : vector<4x16x1xf32> to vector<4x16x16xf32>
    %49 = arith.divf %45, %48 : vector<4x16x16xf32>
    "tpu.trace_start"() <{level = 10 : i32, message = "bqk,bkd->bqd"}> : () -> ()
    %cst_20 = arith.constant dense<0.000000e+00> : vector<4x16x32xf32>
    %50 = tpu.matmul %49, %37, %cst_20 {dimension_numbers = #tpu.dot_dimension_numbers<[2], [1], [1], [2], [0, 0, 0, 1, 1, 2], [0], [0]>} : vector<4x16x16xf32>, vector<4x16x32xf32>, vector<4x16x32xf32> -> vector<4x16x32xf32>
    "tpu.trace_stop"() : () -> ()
    %51 = vector.shape_cast %50 : vector<4x16x32xf32> to vector<64x32xf32>
    %52 = vector.extract_strided_slice %14 {offsets = [32, 0], sizes = [32, 128], strides = [1, 1]} : vector<128x128xf32> to vector<32x128xf32>
    %cst_21 = arith.constant dense<0.000000e+00> : vector<64x128xf32>
    %53 = tpu.matmul %51, %52, %cst_21 {dimension_numbers = #tpu.dot_dimension_numbers<[1], [0], [0], [1], [0, 0, 1, 1], [], []>} : vector<64x32xf32>, vector<32x128xf32>, vector<64x128xf32> -> vector<64x128xf32>
    %54 = arith.addf %34, %53 : vector<64x128xf32>
    %55 = vector.extract_strided_slice %9 {offsets = [0, 0, 64], sizes = [4, 16, 32], strides = [1, 1, 1]} : vector<4x16x128xf32> to vector<4x16x32xf32>
    %56 = vector.extract_strided_slice %11 {offsets = [0, 0, 64], sizes = [4, 16, 32], strides = [1, 1, 1]} : vector<4x16x128xf32> to vector<4x16x32xf32>
    %57 = vector.extract_strided_slice %13 {offsets = [0, 0, 64], sizes = [4, 16, 32], strides = [1, 1, 1]} : vector<4x16x128xf32> to vector<4x16x32xf32>
    "tpu.trace_start"() <{level = 10 : i32, message = "bqd,bkd->bqk"}> : () -> ()
    %cst_22 = arith.constant dense<0.000000e+00> : vector<4x16x16xf32>
    %58 = tpu.matmul %55, %56, %cst_22 {dimension_numbers = #tpu.dot_dimension_numbers<[2], [2], [1], [1], [0, 0, 0, 1, 1, 1], [0], [0]>} : vector<4x16x32xf32>, vector<4x16x32xf32>, vector<4x16x16xf32> -> vector<4x16x16xf32>
    %cst_23 = arith.constant -1.000000e+09 : f32
    "tpu.trace_stop"() : () -> ()
    %59 = vector.broadcast %cst_23 : f32 to vector<4x16x16xf32>
    %60 = arith.select %4, %59, %58 : vector<4x16x16xi1>, vector<4x16x16xf32>
    %cst_24 = arith.constant dense<0xFF800000> : vector<4x16xf32>
    %61 = vector.multi_reduction <maximumf>, %60, %cst_24 [2] : vector<4x16x16xf32> to vector<4x16xf32>
    %62 = vector.shape_cast %61 : vector<4x16xf32> to vector<4x16x1xf32>
    %63 = vector.broadcast %62 : vector<4x16x1xf32> to vector<4x16x16xf32>
    %64 = arith.subf %60, %63 : vector<4x16x16xf32>
    %65 = math.exp %64 : vector<4x16x16xf32>
    %cst_25 = arith.constant dense<0.000000e+00> : vector<4x16xf32>
    %66 = vector.multi_reduction <add>, %65, %cst_25 [2] : vector<4x16x16xf32> to vector<4x16xf32>
    %67 = vector.shape_cast %66 : vector<4x16xf32> to vector<4x16x1xf32>
    %68 = vector.broadcast %67 : vector<4x16x1xf32> to vector<4x16x16xf32>
    %69 = arith.divf %65, %68 : vector<4x16x16xf32>
    "tpu.trace_start"() <{level = 10 : i32, message = "bqk,bkd->bqd"}> : () -> ()
    %cst_26 = arith.constant dense<0.000000e+00> : vector<4x16x32xf32>
    %70 = tpu.matmul %69, %57, %cst_26 {dimension_numbers = #tpu.dot_dimension_numbers<[2], [1], [1], [2], [0, 0, 0, 1, 1, 2], [0], [0]>} : vector<4x16x16xf32>, vector<4x16x32xf32>, vector<4x16x32xf32> -> vector<4x16x32xf32>
    "tpu.trace_stop"() : () -> ()
    %71 = vector.shape_cast %70 : vector<4x16x32xf32> to vector<64x32xf32>
    %72 = vector.extract_strided_slice %14 {offsets = [64, 0], sizes = [32, 128], strides = [1, 1]} : vector<128x128xf32> to vector<32x128xf32>
    %cst_27 = arith.constant dense<0.000000e+00> : vector<64x128xf32>
    %73 = tpu.matmul %71, %72, %cst_27 {dimension_numbers = #tpu.dot_dimension_numbers<[1], [0], [0], [1], [0, 0, 1, 1], [], []>} : vector<64x32xf32>, vector<32x128xf32>, vector<64x128xf32> -> vector<64x128xf32>
    %74 = arith.addf %54, %73 : vector<64x128xf32>
    %75 = vector.extract_strided_slice %9 {offsets = [0, 0, 96], sizes = [4, 16, 32], strides = [1, 1, 1]} : vector<4x16x128xf32> to vector<4x16x32xf32>
    %76 = vector.extract_strided_slice %11 {offsets = [0, 0, 96], sizes = [4, 16, 32], strides = [1, 1, 1]} : vector<4x16x128xf32> to vector<4x16x32xf32>
    %77 = vector.extract_strided_slice %13 {offsets = [0, 0, 96], sizes = [4, 16, 32], strides = [1, 1, 1]} : vector<4x16x128xf32> to vector<4x16x32xf32>
    "tpu.trace_start"() <{level = 10 : i32, message = "bqd,bkd->bqk"}> : () -> ()
    %cst_28 = arith.constant dense<0.000000e+00> : vector<4x16x16xf32>
    %78 = tpu.matmul %75, %76, %cst_28 {dimension_numbers = #tpu.dot_dimension_numbers<[2], [2], [1], [1], [0, 0, 0, 1, 1, 1], [0], [0]>} : vector<4x16x32xf32>, vector<4x16x32xf32>, vector<4x16x16xf32> -> vector<4x16x16xf32>
    %cst_29 = arith.constant -1.000000e+09 : f32
    "tpu.trace_stop"() : () -> ()
    %79 = vector.broadcast %cst_29 : f32 to vector<4x16x16xf32>
    %80 = arith.select %4, %79, %78 : vector<4x16x16xi1>, vector<4x16x16xf32>
    %cst_30 = arith.constant dense<0xFF800000> : vector<4x16xf32>
    %81 = vector.multi_reduction <maximumf>, %80, %cst_30 [2] : vector<4x16x16xf32> to vector<4x16xf32>
    %82 = vector.shape_cast %81 : vector<4x16xf32> to vector<4x16x1xf32>
    %83 = vector.broadcast %82 : vector<4x16x1xf32> to vector<4x16x16xf32>
    %84 = arith.subf %80, %83 : vector<4x16x16xf32>
    %85 = math.exp %84 : vector<4x16x16xf32>
    %cst_31 = arith.constant dense<0.000000e+00> : vector<4x16xf32>
    %86 = vector.multi_reduction <add>, %85, %cst_31 [2] : vector<4x16x16xf32> to vector<4x16xf32>
    %87 = vector.shape_cast %86 : vector<4x16xf32> to vector<4x16x1xf32>
    %88 = vector.broadcast %87 : vector<4x16x1xf32> to vector<4x16x16xf32>
    %89 = arith.divf %85, %88 : vector<4x16x16xf32>
    "tpu.trace_start"() <{level = 10 : i32, message = "bqk,bkd->bqd"}> : () -> ()
    %cst_32 = arith.constant dense<0.000000e+00> : vector<4x16x32xf32>
    %90 = tpu.matmul %89, %77, %cst_32 {dimension_numbers = #tpu.dot_dimension_numbers<[2], [1], [1], [2], [0, 0, 0, 1, 1, 2], [0], [0]>} : vector<4x16x16xf32>, vector<4x16x32xf32>, vector<4x16x32xf32> -> vector<4x16x32xf32>
    "tpu.trace_stop"() : () -> ()
    %91 = vector.shape_cast %90 : vector<4x16x32xf32> to vector<64x32xf32>
    %92 = vector.extract_strided_slice %14 {offsets = [96, 0], sizes = [32, 128], strides = [1, 1]} : vector<128x128xf32> to vector<32x128xf32>
    %cst_33 = arith.constant dense<0.000000e+00> : vector<64x128xf32>
    %93 = tpu.matmul %91, %92, %cst_33 {dimension_numbers = #tpu.dot_dimension_numbers<[1], [0], [0], [1], [0, 0, 1, 1], [], []>} : vector<64x32xf32>, vector<32x128xf32>, vector<64x128xf32> -> vector<64x128xf32>
    %94 = arith.addf %74, %93 : vector<64x128xf32>
    %95 = vector.shape_cast %29 : vector<4x16x16xf32> to vector<4x1x16x16xf32>
    %96 = vector.shape_cast %49 : vector<4x16x16xf32> to vector<4x1x16x16xf32>
    %97 = vector.shape_cast %69 : vector<4x16x16xf32> to vector<4x1x16x16xf32>
    %98 = vector.shape_cast %89 : vector<4x16x16xf32> to vector<4x1x16x16xf32>
    %99 = tpu.concatenate %95, %96, %97, %98 in 1 : vector<4x1x16x16xf32>, vector<4x1x16x16xf32>, vector<4x1x16x16xf32>, vector<4x1x16x16xf32> -> vector<4x4x16x16xf32>
    %c0_34 = arith.constant 0 : index
    %c0_35 = arith.constant 0 : index
    %c0_36 = arith.constant 0 : index
    %c0_37 = arith.constant 0 : index
    %100 = vector.load %arg8[%c0_34, %c0_35, %c0_36, %c0_37] : memref<4x4x16x16xf32, #tpu.memory_space<vmem>>, vector<4x4x16x16xf32>
    tpu.vector_store %arg8[%c0_34, %c0_35, %c0_36, %c0_37], %99 {strides = array<i32>} : memref<4x4x16x16xf32, #tpu.memory_space<vmem>>, vector<4x4x16x16xf32>,
    %cst_38 = arith.constant dense<0.000000e+00> : vector<64xf32>
    %101 = vector.multi_reduction <add>, %94, %cst_38 [1] : vector<64x128xf32> to vector<64xf32>
    %102 = vector.shape_cast %101 : vector<64xf32> to vector<64x1xf32>
    %cst_39 = arith.constant 1.280000e+02 : f32
    %103 = vector.broadcast %cst_39 : f32 to vector<64x1xf32>
    %104 = arith.divf %102, %103 : vector<64x1xf32>
    %105 = vector.broadcast %104 : vector<64x1xf32> to vector<64x128xf32>
    %106 = arith.subf %94, %105 : vector<64x128xf32>
    %107 = arith.mulf %106, %106 : vector<64x128xf32>
    %cst_40 = arith.constant dense<0.000000e+00> : vector<64xf32>
    %108 = vector.multi_reduction <add>, %107, %cst_40 [1] : vector<64x128xf32> to vector<64xf32>
    %109 = vector.shape_cast %108 : vector<64xf32> to vector<64x1xf32>
    %cst_41 = arith.constant 1.280000e+02 : f32
    %110 = vector.broadcast %cst_41 : f32 to vector<64x1xf32>
    %111 = arith.divf %109, %110 : vector<64x1xf32>
    %112 = vector.broadcast %104 : vector<64x1xf32> to vector<64x128xf32>
    %113 = arith.subf %94, %112 : vector<64x128xf32>
    %cst_42 = arith.constant 9.99999974E-6 : f32
    %114 = vector.broadcast %cst_42 : f32 to vector<64x1xf32>
    %115 = arith.addf %111, %114 : vector<64x1xf32>
    %116 = math.rsqrt %115 : vector<64x1xf32>
    %117 = vector.broadcast %116 : vector<64x1xf32> to vector<64x128xf32>
    %118 = arith.mulf %113, %117 : vector<64x128xf32>
    %c0_43 = arith.constant 0 : index
    %c0_44 = arith.constant 0 : index
    %119 = vector.load %arg5[%c0_43, %c0_44] : memref<128x512xf32, #tpu.memory_space<vmem>>, vector<128x512xf32>
    %cst_45 = arith.constant dense<0.000000e+00> : vector<64x512xf32>
    %120 = tpu.matmul %118, %119, %cst_45 {dimension_numbers = #tpu.dot_dimension_numbers<[1], [0], [0], [1], [0, 0, 1, 1], [], []>} : vector<64x128xf32>, vector<128x512xf32>, vector<64x512xf32> -> vector<64x512xf32>
    %cst_46 = arith.constant 0.000000e+00 : f32
    %121 = vector.broadcast %cst_46 : f32 to vector<64x512xf32>
    %122 = arith.maximumf %120, %121 : vector<64x512xf32>
    %c0_47 = arith.constant 0 : index
    %c0_48 = arith.constant 0 : index
    %123 = vector.load %arg6[%c0_47, %c0_48] : memref<512x128xf32, #tpu.memory_space<vmem>>, vector<512x128xf32>
    %cst_49 = arith.constant dense<0.000000e+00> : vector<64x128xf32>
    %124 = tpu.matmul %122, %123, %cst_49 {dimension_numbers = #tpu.dot_dimension_numbers<[1], [0], [0], [1], [0, 0, 1, 1], [], []>} : vector<64x512xf32>, vector<512x128xf32>, vector<64x128xf32> -> vector<64x128xf32>
    %125 = arith.addf %124, %118 : vector<64x128xf32>
    %cst_50 = arith.constant dense<0.000000e+00> : vector<64xf32>
    %126 = vector.multi_reduction <add>, %125, %cst_50 [1] : vector<64x128xf32> to vector<64xf32>
    %127 = vector.shape_cast %126 : vector<64xf32> to vector<64x1xf32>
    %cst_51 = arith.constant 1.280000e+02 : f32
    %128 = vector.broadcast %cst_51 : f32 to vector<64x1xf32>
    %129 = arith.divf %127, %128 : vector<64x1xf32>
    %130 = vector.broadcast %129 : vector<64x1xf32> to vector<64x128xf32>
    %131 = arith.subf %125, %130 : vector<64x128xf32>
    %132 = arith.mulf %131, %131 : vector<64x128xf32>
    %cst_52 = arith.constant dense<0.000000e+00> : vector<64xf32>
    %133 = vector.multi_reduction <add>, %132, %cst_52 [1] : vector<64x128xf32> to vector<64xf32>
    %134 = vector.shape_cast %133 : vector<64xf32> to vector<64x1xf32>
    %cst_53 = arith.constant 1.280000e+02 : f32
    %135 = vector.broadcast %cst_53 : f32 to vector<64x1xf32>
    %136 = arith.divf %134, %135 : vector<64x1xf32>
    %137 = vector.broadcast %129 : vector<64x1xf32> to vector<64x128xf32>
    %138 = arith.subf %125, %137 : vector<64x128xf32>
    %cst_54 = arith.constant 9.99999974E-6 : f32
    %139 = vector.broadcast %cst_54 : f32 to vector<64x1xf32>
    %140 = arith.addf %136, %139 : vector<64x1xf32>
    %141 = math.rsqrt %140 : vector<64x1xf32>
    %142 = vector.broadcast %141 : vector<64x1xf32> to vector<64x128xf32>
    %143 = arith.mulf %138, %142 : vector<64x128xf32>
    %144 = vector.shape_cast %143 : vector<64x128xf32> to vector<4x16x128xf32>
    %c0_55 = arith.constant 0 : index
    %c0_56 = arith.constant 0 : index
    %c0_57 = arith.constant 0 : index
    %145 = vector.load %arg7[%c0_55, %c0_56, %c0_57] : memref<4x16x128xf32, #tpu.memory_space<vmem>>, vector<4x16x128xf32>
    tpu.vector_store %arg7[%c0_55, %c0_56, %c0_57], %144 {strides = array<i32>} : memref<4x16x128xf32, #tpu.memory_space<vmem>>, vector<4x16x128xf32>,
    return
  }
  func.func @transform_0(%arg0: i32) -> (i32, i32, i32) {
    %c0_i32 = arith.constant 0 : i32
    %c0_i32_0 = arith.constant 0 : i32
    %c0_i32_1 = arith.constant 0 : i32
    return %arg0, %c0_i32, %c0_i32_0 : i32, i32, i32
  }
  func.func @transform_1(%arg0: i32) -> (i32, i32, i32) {
    %c0_i32 = arith.constant 0 : i32
    %c0_i32_0 = arith.constant 0 : i32
    %c0_i32_1 = arith.constant 0 : i32
    return %arg0, %c0_i32, %c0_i32_0 : i32, i32, i32
  }
  func.func @transform_2(%arg0: i32) -> (i32, i32) {
    %c0_i32 = arith.constant 0 : i32
    %c0_i32_0 = arith.constant 0 : i32
    %c0_i32_1 = arith.constant 0 : i32
    return %c0_i32, %c0_i32_0 : i32, i32
  }
  func.func @transform_3(%arg0: i32) -> (i32, i32) {
    %c0_i32 = arith.constant 0 : i32
    %c0_i32_0 = arith.constant 0 : i32
    %c0_i32_1 = arith.constant 0 : i32
    return %c0_i32, %c0_i32_0 : i32, i32
  }
  func.func @transform_4(%arg0: i32) -> (i32, i32) {
    %c0_i32 = arith.constant 0 : i32
    %c0_i32_0 = arith.constant 0 : i32
    %c0_i32_1 = arith.constant 0 : i32
    return %c0_i32, %c0_i32_0 : i32, i32
  }
  func.func @transform_5(%arg0: i32) -> (i32, i32) {
    %c0_i32 = arith.constant 0 : i32
    %c0_i32_0 = arith.constant 0 : i32
    %c0_i32_1 = arith.constant 0 : i32
    return %c0_i32, %c0_i32_0 : i32, i32
  }
  func.func @transform_6(%arg0: i32) -> (i32, i32, i32) {
    %c0_i32 = arith.constant 0 : i32
    %c0_i32_0 = arith.constant 0 : i32
    %c0_i32_1 = arith.constant 0 : i32
    return %arg0, %c0_i32, %c0_i32_0 : i32, i32, i32
  }
  func.func @transform_7(%arg0: i32) -> (i32, i32, i32, i32) {
    %c0_i32 = arith.constant 0 : i32
    %c0_i32_0 = arith.constant 0 : i32
    %c0_i32_1 = arith.constant 0 : i32
    %c0_i32_2 = arith.constant 0 : i32
    return %arg0, %c0_i32, %c0_i32_0, %c0_i32_1 : i32, i32, i32, i32
  }
}

</mosaic_0001>

<llo_original>
// kernel: tpu_custom_call.1
$region0: #{tpu_custom_call.1}
  #allocation0 [shape = 'u32[]', space=smem, size = 0x4, offset = 0x4, fixed_abs, tag = 'smem constant byte address 0x4 - core index']
  #allocation1 [shape = 'u32[72,128]{1,0:T(1,128)}', space=vmem, size = 0x9000, scoped, tag = 'internal scratch']
  %s0 = inlined_call_operand.hbm [shape: f32[8,16,16], index: 0, kind: input, shape index: {}]
  %s1 = inlined_call_operand.hbm [shape: f32[8,16,128], index: 1, kind: input, shape index: {}]
  %s2 = inlined_call_operand.hbm [shape: f32[128,512], index: 2, kind: input, shape index: {}]
  %s3 = inlined_call_operand.hbm [shape: f32[128,128], index: 3, kind: input, shape index: {}]
  %s4 = inlined_call_operand.hbm [shape: f32[128,512], index: 4, kind: input, shape index: {}]
  %s5 = inlined_call_operand.hbm [shape: f32[512,128], index: 5, kind: input, shape index: {}]
  %s6 = inlined_call_operand.hbm [shape: f32[8,16,128], index: 6, kind: output, shape index: {0}]
  %s7 = inlined_call_operand.hbm [shape: f32[8,4,16,16], index: 7, kind: output, shape index: {1}]
  %8 = xla_tuple %s6, %s7
  %s9 = sld [smem:[#allocation0]]
  $region89: #{tpu_custom_call.1} parent=0
    _
  %s11 = ssub.s32 1, %s9
  %s12 = scalar_select 0, %s11, %s9
  $region1: #{tpu_custom_call.1} parent=0
    #allocation2 [shape = 'u8[65536]{0}', space=vmem, size = 0x10000, scoped, tag = 'input window, operand 0']
    #allocation3 [shape = 's32[2]{0}', space=sflag, size = 0x8, scoped, tag = 'scoped memory for tpu_custom_call.1']
    #allocation4 [shape = 's32[2]{0}', space=sflag, size = 0x8, scoped, tag = 'scoped memory for tpu_custom_call.1']
    #allocation5 [shape = 'u8[65536]{0}', space=vmem, size = 0x10000, scoped, tag = 'input window, operand 1']
    #allocation6 [shape = 's32[2]{0}', space=sflag, size = 0x8, scoped, tag = 'scoped memory for tpu_custom_call.1']
    #allocation7 [shape = 'u8[262144]{0}', space=vmem, size = 0x40000, scoped, tag = 'input window, operand 2, single buffered']
    #allocation8 [shape = 'u8[65536]{0}', space=vmem, size = 0x10000, scoped, tag = 'input window, operand 3, single buffered']
    #allocation9 [shape = 's32[1]{0}', space=sflag, size = 0x4, scoped, tag = 'scoped memory for tpu_custom_call.1']
    #allocation10 [shape = 'u8[262144]{0}', space=vmem, size = 0x40000, scoped, tag = 'input window, operand 4, single buffered']
    #allocation11 [shape = 'u8[262144]{0}', space=vmem, size = 0x40000, scoped, tag = 'input window, operand 5, single buffered']
    #allocation12 [shape = 's32[1]{0}', space=sflag, size = 0x4, scoped, tag = 'scoped memory for tpu_custom_call.1']
    #allocation13 [shape = 'u8[65536]{0}', space=vmem, size = 0x10000, scoped, tag = 'output window, operand 0']
    #allocation14 [shape = 'u8[262144]{0}', space=vmem, size = 0x40000, scoped, tag = 'output window, operand 1']
    #allocation15 [shape = 's32[2]{0}', space=sflag, size = 0x8, scoped, tag = 'scoped memory for tpu_custom_call.1']
    %13 = vsyncpa [#allocation3], 0
    %s14 = scalar_lea.sflag [#allocation3], 1
    %15 = vsyncpa %s14, 0
    %16 = vsyncpa [#allocation6], 0
    %s17 = scalar_lea.sflag [#allocation6], 1
    %18 = vsyncpa %s17, 0
    %19 = vsyncpa [#allocation9], 0
    %20 = vsyncpa [#allocation12], 0
    %21 = vsyncpa [#allocation4], 0
    %s22 = scalar_lea.sflag [#allocation4], 1
    %23 = vsyncpa %s22, 0
    %24 = vsyncpa [#allocation15], 0
    %s25 = scalar_lea.sflag [#allocation15], 1
    %26 = vsyncpa %s25, 0
    loop: start=0, step=1, limit=4
    $region2: #{tpu_custom_call.1} parent=1 // loop_pre_header
      _
    $region3: #{tpu_custom_call.1} parent=1 // loop_header
      %s28 = sphi 0, %s32
      %p29 = scmp.ge.s32.totalorder %s28, 4
      %s38 = sphi 0, %s40
      %s41 = sphi 0, %s38
      %s42 = sphi 0, %s41
      %s58 = sphi 0, %s42
      %s64 = sphi 0, %s66
      %s67 = sphi 0, %s64
      %s68 = sphi 0, %s67
      %s84 = sphi 0, %s68
      %s88 = sphi 0, %s88
      %s90 = sphi 0, %s88
      %s91 = sphi 0, %s90
      %s105 = sphi 0, %s91
      %s109 = sphi 0, %s109
      %s111 = sphi 0, %s109
      %s112 = sphi 0, %s111
      %s126 = sphi 0, %s112
      %s130 = sphi 0, %s130
      %s132 = sphi 0, %s130
      %s133 = sphi 0, %s132
      %s147 = sphi 0, %s133
      %s151 = sphi 0, %s151
      %s153 = sphi 0, %s151
      %s154 = sphi 0, %s153
      %s168 = sphi 0, %s154
      %s174 = sphi 0, %s176
      %s177 = sphi 0, %s174
      %s178 = sphi 0, %s177
      %s194 = sphi 0, %s178
      %s200 = sphi 0, %s202
      %s203 = sphi 0, %s200
      %s204 = sphi 0, %s203
      %s220 = sphi 0, %s204
    $region4: #{tpu_custom_call.1} parent=1 // loop_header_branch
      %31 = sbr.rel (%p29) target = $region8
    $region5: #{tpu_custom_call.1} parent=1 // loop_body
      %s33 = ssub.s32 %s28, 1
      %s34 = ssub.s32 %s28, 2
      %s35 = sadd.s32 %s28, 1
      %s36 = ssub.s32 %s28, %s35
      %p37 = scmp.eq.s32.totalorder %s36, 0
      %s39 = sadd.s32 %s38, 1
      %s40 = scalar_select %p37, %s38, %s39
      %p43 = pneg %p37
      %p44 = scmp.eq.s32.totalorder %s28, 1
      %p45 = por %p43, %p44
      %p46 = scmp.ne.s32.totalorder %s38, %s41
      %p47 = scmp.eq.s32.totalorder %s28, 0
      %p48 = por %p46, %p47
      %p49 = scmp.ne.s32.totalorder %s38, %s41
      %p50 = scmp.eq.s32.totalorder %s33, 1
      %p51 = por %p49, %p50
      %p52 = scmp.ne.s32.totalorder %s41, %s42
      %p53 = scmp.eq.s32.totalorder %s33, 0
      %p54 = por %p52, %p53
      %p55 = scmp.ne.s32.totalorder %s41, %s42
      %p56 = scmp.eq.s32.totalorder %s34, 1
      %p57 = por %p55, %p56
      %p59 = scmp.ne.s32.totalorder %s42, %s58
      %p60 = scmp.eq.s32.totalorder %s34, 0
      %p61 = por %p59, %p60
      %s62 = ssub.s32 %s28, %s35
      %p63 = scmp.eq.s32.totalorder %s62, 0
      %s65 = sadd.s32 %s64, 1
      %s66 = scalar_select %p63, %s64, %s65
      %p69 = pneg %p63
      %p70 = scmp.eq.s32.totalorder %s28, 1
      %p71 = por %p69, %p70
      %p72 = scmp.ne.s32.totalorder %s64, %s67
      %p73 = scmp.eq.s32.totalorder %s28, 0
      %p74 = por %p72, %p73
      %p75 = scmp.ne.s32.totalorder %s64, %s67
      %p76 = scmp.eq.s32.totalorder %s33, 1
      %p77 = por %p75, %p76
      %p78 = scmp.ne.s32.totalorder %s67, %s68
      %p79 = scmp.eq.s32.totalorder %s33, 0
      %p80 = por %p78, %p79
      %p81 = scmp.ne.s32.totalorder %s67, %s68
      %p82 = scmp.eq.s32.totalorder %s34, 1
      %p83 = por %p81, %p82
      %p85 = scmp.ne.s32.totalorder %s68, %s84
      %p86 = scmp.eq.s32.totalorder %s34, 0
      %p87 = por %p85, %p86
      %s89 = sadd.s32 %s88, 1
      %p92 = scmp.eq.s32.totalorder %s28, 1
      %p93 = scmp.ne.s32.totalorder %s88, %s90
      %p94 = scmp.eq.s32.totalorder %s28, 0
      %p95 = por %p93, %p94
      %p96 = scmp.ne.s32.totalorder %s88, %s90
      %p97 = scmp.eq.s32.totalorder %s33, 1
      %p98 = por %p96, %p97
      %p99 = scmp.ne.s32.totalorder %s90, %s91
      %p100 = scmp.eq.s32.totalorder %s33, 0
      %p101 = por %p99, %p100
      %p102 = scmp.ne.s32.totalorder %s90, %s91
      %p103 = scmp.eq.s32.totalorder %s34, 1
      %p104 = por %p102, %p103
      %p106 = scmp.ne.s32.totalorder %s91, %s105
      %p107 = scmp.eq.s32.totalorder %s34, 0
      %p108 = por %p106, %p107
      %s110 = sadd.s32 %s109, 1
      %p113 = scmp.eq.s32.totalorder %s28, 1
      %p114 = scmp.ne.s32.totalorder %s109, %s111
      %p115 = scmp.eq.s32.totalorder %s28, 0
      %p116 = por %p114, %p115
      %p117 = scmp.ne.s32.totalorder %s109, %s111
      %p118 = scmp.eq.s32.totalorder %s33, 1
      %p119 = por %p117, %p118
      %p120 = scmp.ne.s32.totalorder %s111, %s112
      %p121 = scmp.eq.s32.totalorder %s33, 0
      %p122 = por %p120, %p121
      %p123 = scmp.ne.s32.totalorder %s111, %s112
      %p124 = scmp.eq.s32.totalorder %s34, 1
      %p125 = por %p123, %p124
      %p127 = scmp.ne.s32.totalorder %s112, %s126
      %p128 = scmp.eq.s32.totalorder %s34, 0
      %p129 = por %p127, %p128
      %s131 = sadd.s32 %s130, 1
      %p134 = scmp.eq.s32.totalorder %s28, 1
      %p135 = scmp.ne.s32.totalorder %s130, %s132
      %p136 = scmp.eq.s32.totalorder %s28, 0
      %p137 = por %p135, %p136
      %p138 = scmp.ne.s32.totalorder %s130, %s132
      %p139 = scmp.eq.s32.totalorder %s33, 1
      %p140 = por %p138, %p139
      %p141 = scmp.ne.s32.totalorder %s132, %s133
      %p142 = scmp.eq.s32.totalorder %s33, 0
      %p143 = por %p141, %p142
      %p144 = scmp.ne.s32.totalorder %s132, %s133
      %p145 = scmp.eq.s32.totalorder %s34, 1
      %p146 = por %p144, %p145
      %p148 = scmp.ne.s32.totalorder %s133, %s147
      %p149 = scmp.eq.s32.totalorder %s34, 0
      %p150 = por %p148, %p149
      %s152 = sadd.s32 %s151, 1
      %p155 = scmp.eq.s32.totalorder %s28, 1
      %p156 = scmp.ne.s32.totalorder %s151, %s153
      %p157 = scmp.eq.s32.totalorder %s28, 0
      %p158 = por %p156, %p157
      %p159 = scmp.ne.s32.totalorder %s151, %s153
      %p160 = scmp.eq.s32.totalorder %s33, 1
      %p161 = por %p159, %p160
      %p162 = scmp.ne.s32.totalorder %s153, %s154
      %p163 = scmp.eq.s32.totalorder %s33, 0
      %p164 = por %p162, %p163
      %p165 = scmp.ne.s32.totalorder %s153, %s154
      %p166 = scmp.eq.s32.totalorder %s34, 1
      %p167 = por %p165, %p166
      %p169 = scmp.ne.s32.totalorder %s154, %s168
      %p170 = scmp.eq.s32.totalorder %s34, 0
      %p171 = por %p169, %p170
      %s172 = ssub.s32 %s28, %s35
      %p173 = scmp.eq.s32.totalorder %s172, 0
      %s175 = sadd.s32 %s174, 1
      %s176 = scalar_select %p173, %s174, %s175
      %p179 = pneg %p173
      %p180 = scmp.eq.s32.totalorder %s28, 1
      %p181 = por %p179, %p180
      %p182 = scmp.ne.s32.totalorder %s174, %s177
      %p183 = scmp.eq.s32.totalorder %s28, 0
      %p184 = por %p182, %p183
      %p185 = scmp.ne.s32.totalorder %s174, %s177
      %p186 = scmp.eq.s32.totalorder %s33, 1
      %p187 = por %p185, %p186
      %p188 = scmp.ne.s32.totalorder %s177, %s178
      %p189 = scmp.eq.s32.totalorder %s33, 0
      %p190 = por %p188, %p189
      %p191 = scmp.ne.s32.totalorder %s177, %s178
      %p192 = scmp.eq.s32.totalorder %s34, 1
      %p193 = por %p191, %p192
      %p195 = scmp.ne.s32.totalorder %s178, %s194
      %p196 = scmp.eq.s32.totalorder %s34, 0
      %p197 = por %p195, %p196
      %s198 = ssub.s32 %s28, %s35
      %p199 = scmp.eq.s32.totalorder %s198, 0
      %s201 = sadd.s32 %s200, 1
      %s202 = scalar_select %p199, %s200, %s201
      %p205 = pneg %p199
      %p206 = scmp.eq.s32.totalorder %s28, 1
      %p207 = por %p205, %p206
      %p208 = scmp.ne.s32.totalorder %s200, %s203
      %p209 = scmp.eq.s32.totalorder %s28, 0
      %p210 = por %p208, %p209
      %p211 = scmp.ne.s32.totalorder %s200, %s203
      %p212 = scmp.eq.s32.totalorder %s33, 1
      %p213 = por %p211, %p212
      %p214 = scmp.ne.s32.totalorder %s203, %s204
      %p215 = scmp.eq.s32.totalorder %s33, 0
      %p216 = por %p214, %p215
      %p217 = scmp.ne.s32.totalorder %s203, %s204
      %p218 = scmp.eq.s32.totalorder %s34, 1
      %p219 = por %p217, %p218
      %p221 = scmp.ne.s32.totalorder %s204, %s220
      %p222 = scmp.eq.s32.totalorder %s34, 0
      %p223 = por %p221, %p222
      %p224 = scmp.le.s32.totalorder 1, %s28
      %p225 = scmp.lt.s32.totalorder %s28, 3
      %p226 = pnand %p224, %p225
      %p227 = pneg %p226
      // Predicated region
      $region9: #{tpu_custom_call.1} parent=5 // pred_check
        _
      $region10: #{tpu_custom_call.1} parent=5 // pred_check_branch
        %229 = sbr.rel (%p226) target = $region12
      $region11: #{tpu_custom_call.1} parent=5 // pred_region
        %s230 = ssub.s32 %s28, 1
        // Predicated region
        $region13: #{tpu_custom_call.1} parent=11 // pred_check
          %p231 = pneg %p101
        $region14: #{tpu_custom_call.1} parent=11 // pred_check_branch
          %233 = sbr.rel (%p231) target = $region16
        $region15: #{tpu_custom_call.1} parent=11 // pred_region
          %235 = vsyncadd [#allocation6], 0
          %s236 = sshll.u32 %s2, 4
          %s237 = int_to_ptr.hbm [resolvable:$true] %s236
          %s238 = sshll.u32 [#allocation7], 4
          %s239 = int_to_ptr.vmem [resolvable:$true] %s238
          %244 = dma.hbm_to_vmem [thread:$0]  %s237, 8192, %s239, [#allocation6], 512, 512, 32
        $region16: #{tpu_custom_call.1} parent=11 // pred_fallthru
          _
        // Predicated region
        $region17: #{tpu_custom_call.1} parent=11 // pred_check
          %p245 = pneg %p122
        $region18: #{tpu_custom_call.1} parent=11 // pred_check_branch
          %247 = sbr.rel (%p245) target = $region20
        $region19: #{tpu_custom_call.1} parent=11 // pred_region
          %249 = vsyncadd [#allocation9], 0
          %s250 = sshll.u32 %s3, 4
          %s251 = int_to_ptr.hbm [resolvable:$true] %s250
          %s252 = sshll.u32 [#allocation8], 4
          %s253 = int_to_ptr.vmem [resolvable:$true] %s252
          %258 = dma.hbm_to_vmem [thread:$0]  %s251, 2048, %s253, [#allocation9], 128, 128, 8
        $region20: #{tpu_custom_call.1} parent=11 // pred_fallthru
          _
        // Predicated region
        $region21: #{tpu_custom_call.1} parent=11 // pred_check
          %p259 = pneg %p143
        $region22: #{tpu_custom_call.1} parent=11 // pred_check_branch
          %261 = sbr.rel (%p259) target = $region24
        $region23: #{tpu_custom_call.1} parent=11 // pred_region
          %263 = vsyncadd [#allocation9], 0
          %s264 = sshll.u32 %s4, 4
          %s265 = int_to_ptr.hbm [resolvable:$true] %s264
          %s266 = sshll.u32 [#allocation10], 4
          %s267 = int_to_ptr.vmem [resolvable:$true] %s266
          %272 = dma.hbm_to_vmem [thread:$0]  %s265, 8192, %s267, [#allocation9], 512, 512, 32
        $region24: #{tpu_custom_call.1} parent=11 // pred_fallthru
          _
        // Predicated region
        $region25: #{tpu_custom_call.1} parent=11 // pred_check
          %p273 = pneg %p164
        $region26: #{tpu_custom_call.1} parent=11 // pred_check_branch
          %275 = sbr.rel (%p273) target = $region28
        $region27: #{tpu_custom_call.1} parent=11 // pred_region
          %277 = vsyncadd [#allocation12], 0
          %s278 = sshll.u32 %s5, 4
          %s279 = int_to_ptr.hbm [resolvable:$true] %s278
          %s280 = sshll.u32 [#allocation11], 4
          %s281 = int_to_ptr.vmem [resolvable:$true] %s280
          %286 = dma.hbm_to_vmem [thread:$0]  %s279, 8192, %s281, [#allocation12], 128, 128, 8
        $region28: #{tpu_custom_call.1} parent=11 // pred_fallthru
          _
      $region12: #{tpu_custom_call.1} parent=5 // pred_fallthru
        _
      %p287 = scmp.lt.s32.totalorder %s28, 2
      // Predicated region
      $region29: #{tpu_custom_call.1} parent=5 // pred_check
        %p288 = pneg %p287
      $region30: #{tpu_custom_call.1} parent=5 // pred_check_branch
        %290 = sbr.rel (%p288) target = $region32
      $region31: #{tpu_custom_call.1} parent=5 // pred_region
        // Predicated region
        $region33: #{tpu_custom_call.1} parent=31 // pred_check
          %p291 = pneg %p48
        $region34: #{tpu_custom_call.1} parent=31 // pred_check_branch
          %293 = sbr.rel (%p291) target = $region36
        $region35: #{tpu_custom_call.1} parent=31 // pred_region
          %s294 = sand.u32 %s38, 1
          %s295 = scalar_lea.sflag [#allocation3], %s294
          %s296 = sand.u32 %s38, 1
          %s297 = smul.addr %s296, 64
          %s298 = scalar_lea.vmem [#allocation2], %s297
          %s299 = smul.u32 4, %s28
          %301 = vsyncadd %s295, 0
          %s302 = smul.addr %s299, 2
          %s303 = smul.addr %s302, 8
          %s304 = scalar_lea.hbm %s0, %s303
          %s305 = sshll.u32 %s304, 4
          %s306 = int_to_ptr.hbm [resolvable:$true] %s305
          %s307 = sshll.u32 %s298, 4
          %s308 = int_to_ptr.vmem [resolvable:$true] %s307
          %313 = dma.hbm_to_vmem [thread:$0]  %s306, 1024, %s308, %s295, 128, 128, 8
        $region36: #{tpu_custom_call.1} parent=31 // pred_fallthru
          _
        // Predicated region
        $region37: #{tpu_custom_call.1} parent=31 // pred_check
          %p314 = pneg %p74
        $region38: #{tpu_custom_call.1} parent=31 // pred_check_branch
          %316 = sbr.rel (%p314) target = $region40
        $region39: #{tpu_custom_call.1} parent=31 // pred_region
          %s317 = sand.u32 %s28, 1
          %s318 = scalar_lea.sflag [#allocation6], %s317
          %s319 = sand.u32 %s64, 1
          %s320 = smul.addr %s319, 64
          %s321 = scalar_lea.vmem [#allocation5], %s320
          %s322 = smul.u32 4, %s28
          %324 = vsyncadd %s318, 0
          %s325 = smul.addr %s322, 2
          %s326 = smul.addr %s325, 8
          %s327 = scalar_lea.hbm %s1, %s326
          %s328 = sshll.u32 %s327, 4
          %s329 = int_to_ptr.hbm [resolvable:$true] %s328
          %s330 = sshll.u32 %s321, 4
          %s331 = int_to_ptr.vmem [resolvable:$true] %s330
          %336 = dma.hbm_to_vmem [thread:$0]  %s329, 1024, %s331, %s318, 128, 128, 8
        $region40: #{tpu_custom_call.1} parent=31 // pred_fallthru
          _
      $region32: #{tpu_custom_call.1} parent=5 // pred_fallthru
        _
      %p337 = scmp.le.s32.totalorder 1, %s28
      %p338 = scmp.lt.s32.totalorder %s28, 3
      %p339 = pnand %p337, %p338
      %p340 = pneg %p339
      // Predicated region
      $region41: #{tpu_custom_call.1} parent=5 // pred_check
        _
      $region42: #{tpu_custom_call.1} parent=5 // pred_check_branch
        %342 = sbr.rel (%p339) target = $region44
      $region43: #{tpu_custom_call.1} parent=5 // pred_region
        %s343 = ssub.s32 %s28, 1
        %s344 = sand.u32 %s41, 1
        %s345 = scalar_lea.sflag [#allocation3], %s344
        %s346 = sand.u32 %s41, 1
        %s347 = smul.addr %s346, 64
        %s348 = scalar_lea.vmem [#allocation2], %s347
        // Predicated region
        $region45: #{tpu_custom_call.1} parent=43 // pred_check
          %p349 = pneg %p54
        $region46: #{tpu_custom_call.1} parent=43 // pred_check_branch
          %351 = sbr.rel (%p349) target = $region48
        $region47: #{tpu_custom_call.1} parent=43 // pred_region
          %353 = dma.done %s345, 1024
        $region48: #{tpu_custom_call.1} parent=43 // pred_fallthru
          _
        %s354 = sand.u32 %s33, 1
        %s355 = scalar_lea.sflag [#allocation6], %s354
        %s356 = sand.u32 %s67, 1
        %s357 = smul.addr %s356, 64
        %s358 = scalar_lea.vmem [#allocation5], %s357
        // Predicated region
        $region49: #{tpu_custom_call.1} parent=43 // pred_check
          %p359 = pneg %p80
        $region50: #{tpu_custom_call.1} parent=43 // pred_check_branch
          %361 = sbr.rel (%p359) target = $region52
        $region51: #{tpu_custom_call.1} parent=43 // pred_region
          %363 = dma.done %s355, 1024
        $region52: #{tpu_custom_call.1} parent=43 // pred_fallthru
          _
        // Predicated region
        $region53: #{tpu_custom_call.1} parent=43 // pred_check
          %p364 = pneg %p101
        $region54: #{tpu_custom_call.1} parent=43 // pred_check_branch
          %366 = sbr.rel (%p364) target = $region56
        $region55: #{tpu_custom_call.1} parent=43 // pred_region
          %368 = dma.done [#allocation6], 8192
        $region56: #{tpu_custom_call.1} parent=43 // pred_fallthru
          _
        // Predicated region
        $region57: #{tpu_custom_call.1} parent=43 // pred_check
          %p369 = pneg %p122
        $region58: #{tpu_custom_call.1} parent=43 // pred_check_branch
          %371 = sbr.rel (%p369) target = $region60
        $region59: #{tpu_custom_call.1} parent=43 // pred_region
          %373 = dma.done [#allocation9], 2048
        $region60: #{tpu_custom_call.1} parent=43 // pred_fallthru
          _
        // Predicated region
        $region61: #{tpu_custom_call.1} parent=43 // pred_check
          %p374 = pneg %p143
        $region62: #{tpu_custom_call.1} parent=43 // pred_check_branch
          %376 = sbr.rel (%p374) target = $region64
        $region63: #{tpu_custom_call.1} parent=43 // pred_region
          %378 = dma.done [#allocation9], 8192
        $region64: #{tpu_custom_call.1} parent=43 // pred_fallthru
          _
        // Predicated region
        $region65: #{tpu_custom_call.1} parent=43 // pred_check
          %p379 = pneg %p164
        $region66: #{tpu_custom_call.1} parent=43 // pred_check_branch
          %381 = sbr.rel (%p379) target = $region68
        $region67: #{tpu_custom_call.1} parent=43 // pred_region
          %383 = dma.done [#allocation12], 8192
        $region68: #{tpu_custom_call.1} parent=43 // pred_fallthru
          _
        %s384 = sand.u32 %s41, 1
        %s385 = scalar_lea.sflag [#allocation3], %s384
        %s386 = sand.u32 %s41, 1
        %s387 = smul.addr %s386, 64
        %s388 = scalar_lea.vmem [#allocation2], %s387
        %p389 = pneg %p54
        %p390 = pneg %p51
        %s391 = sand.u32 %s33, 1
        %s392 = scalar_lea.sflag [#allocation6], %s391
        %s393 = sand.u32 %s67, 1
        %s394 = smul.addr %s393, 64
        %s395 = scalar_lea.vmem [#allocation5], %s394
        %p396 = pneg %p80
        %p397 = pneg %p77
        %p398 = pneg %p101
        %p399 = pneg %p98
        %p400 = pneg %p122
        %p401 = pneg %p119
        %p402 = pneg %p143
        %p403 = pneg %p140
        %p404 = pneg %p164
        %p405 = pneg %p161
        %p406 = pneg %p190
        %p407 = pneg %p187
        %s408 = sand.u32 %s177, 1
        %s409 = scalar_lea.sflag [#allocation4], %s408
        %s410 = sand.u32 %s177, 1
        %s411 = smul.addr %s410, 64
        %s412 = scalar_lea.vmem [#allocation13], %s411
        %p413 = pneg %p216
        %p414 = pneg %p213
        %s415 = sand.u32 %s203, 1
        %s416 = scalar_lea.sflag [#allocation15], %s415
        %s417 = sand.u32 %s203, 1
        %s418 = smul.addr %s417, 256
        %s419 = scalar_lea.vmem [#allocation14], %s418
        %s420 = smul.u32 4, %s33
        %s421 = smul.u32 4, %s33
        %s422 = smul.u32 4, %s33
        %s423 = smul.u32 4, %s33
        %v424 = vld [vmem:[%s358] sm:$0xff]
        %v425 = vld [vmem:[%s358 + $0x8] sm:$0xff]
        %v426 = vld [vmem:[%s358 + $0x10] sm:$0xff]
        %v427 = vld [vmem:[%s358 + $0x18] sm:$0xff]
        %v428 = vld [vmem:[%s358 + $0x20] sm:$0xff]
        %v429 = vld [vmem:[%s358 + $0x28] sm:$0xff]
        %v430 = vld [vmem:[%s358 + $0x30] sm:$0xff]
        %v431 = vld [vmem:[%s358 + $0x38] sm:$0xff]
        %v432 = vld [vmem:[%s348] sm:$0xff]
        %v433 = vld [vmem:[%s348 + $0x8] sm:$0xff]
        %v434 = vld [vmem:[%s348 + $0x10] sm:$0xff]
        %v435 = vld [vmem:[%s348 + $0x18] sm:$0xff]
        %v436 = vld [vmem:[%s348 + $0x20] sm:$0xff]
        %v437 = vld [vmem:[%s348 + $0x28] sm:$0xff]
        %v438 = vld [vmem:[%s348 + $0x30] sm:$0xff]
        %v439 = vld [vmem:[%s348 + $0x38] sm:$0xff]
        %vm440 = vcmp.gt.f32.partialorder %v432, 0.5
        %vm441 = vcmp.gt.f32.partialorder %v433, 0.5
        %vm442 = vcmp.gt.f32.partialorder %v434, 0.5
        %vm443 = vcmp.gt.f32.partialorder %v435, 0.5
        %vm444 = vcmp.gt.f32.partialorder %v436, 0.5
        %vm445 = vcmp.gt.f32.partialorder %v437, 0.5
        %vm446 = vcmp.gt.f32.partialorder %v438, 0.5
        %vm447 = vcmp.gt.f32.partialorder %v439, 0.5
        %v448 = vld [vmem:[#allocation7] sm:$0xff]
        %v449 = vld [vmem:[#allocation7 + $0x8] sm:$0xff]
        %v450 = vld [vmem:[#allocation7 + $0x10] sm:$0xff]
        %v451 = vld [vmem:[#allocation7 + $0x18] sm:$0xff]
        %v452 = vld [vmem:[#allocation7 + $0x20] sm:$0xff]
        %v453 = vld [vmem:[#allocation7 + $0x28] sm:$0xff]
        %v454 = vld [vmem:[#allocation7 + $0x30] sm:$0xff]
        %v455 = vld [vmem:[#allocation7 + $0x38] sm:$0xff]
        %v456 = vld [vmem:[#allocation7 + $0x40] sm:$0xff]
        %v457 = vld [vmem:[#allocation7 + $0x48] sm:$0xff]
        %v458 = vld [vmem:[#allocation7 + $0x50] sm:$0xff]
        %v459 = vld [vmem:[#allocation7 + $0x58] sm:$0xff]
        %v460 = vld [vmem:[#allocation7 + $0x60] sm:$0xff]
        %v461 = vld [vmem:[#allocation7 + $0x68] sm:$0xff]
        %v462 = vld [vmem:[#allocation7 + $0x70] sm:$0xff]
        %v463 = vld [vmem:[#allocation7 + $0x78] sm:$0xff]
        %v464 = vld [vmem:[#allocation7 + $0x80] sm:$0xff]
        %v465 = vld [vmem:[#allocation7 + $0x88] sm:$0xff]
        %v466 = vld [vmem:[#allocation7 + $0x90] sm:$0xff]
        %v467 = vld [vmem:[#allocation7 + $0x98] sm:$0xff]
        %v468 = vld [vmem:[#allocation7 + $0xa0] sm:$0xff]
        %v469 = vld [vmem:[#allocation7 + $0xa8] sm:$0xff]
        %v470 = vld [vmem:[#allocation7 + $0xb0] sm:$0xff]
        %v471 = vld [vmem:[#allocation7 + $0xb8] sm:$0xff]
        %v472 = vld [vmem:[#allocation7 + $0xc0] sm:$0xff]
        %v473 = vld [vmem:[#allocation7 + $0xc8] sm:$0xff]
        %v474 = vld [vmem:[#allocation7 + $0xd0] sm:$0xff]
        %v475 = vld [vmem:[#allocation7 + $0xd8] sm:$0xff]
        %v476 = vld [vmem:[#allocation7 + $0xe0] sm:$0xff]
        %v477 = vld [vmem:[#allocation7 + $0xe8] sm:$0xff]
        %v478 = vld [vmem:[#allocation7 + $0xf0] sm:$0xff]
        %v479 = vld [vmem:[#allocation7 + $0xf8] sm:$0xff]
        %v480 = vld [vmem:[#allocation7 + $0x100] sm:$0xff]
        %v481 = vld [vmem:[#allocation7 + $0x108] sm:$0xff]
        %v482 = vld [vmem:[#allocation7 + $0x110] sm:$0xff]
        %v483 = vld [vmem:[#allocation7 + $0x118] sm:$0xff]
        %v484 = vld [vmem:[#allocation7 + $0x120] sm:$0xff]
        %v485 = vld [vmem:[#allocation7 + $0x128] sm:$0xff]
        %v486 = vld [vmem:[#allocation7 + $0x130] sm:$0xff]
        %v487 = vld [vmem:[#allocation7 + $0x138] sm:$0xff]
        %v488 = vld [vmem:[#allocation7 + $0x140] sm:$0xff]
        %v489 = vld [vmem:[#allocation7 + $0x148] sm:$0xff]
        %v490 = vld [vmem:[#allocation7 + $0x150] sm:$0xff]
        %v491 = vld [vmem:[#allocation7 + $0x158] sm:$0xff]
        %v492 = vld [vmem:[#allocation7 + $0x160] sm:$0xff]
        %v493 = vld [vmem:[#allocation7 + $0x168] sm:$0xff]
        %v494 = vld [vmem:[#allocation7 + $0x170] sm:$0xff]
        %v495 = vld [vmem:[#allocation7 + $0x178] sm:$0xff]
        %v496 = vld [vmem:[#allocation7 + $0x180] sm:$0xff]
        %v497 = vld [vmem:[#allocation7 + $0x188] sm:$0xff]
        %v498 = vld [vmem:[#allocation7 + $0x190] sm:$0xff]
        %v499 = vld [vmem:[#allocation7 + $0x198] sm:$0xff]
        %v500 = vld [vmem:[#allocation7 + $0x1a0] sm:$0xff]
        %v501 = vld [vmem:[#allocation7 + $0x1a8] sm:$0xff]
        %v502 = vld [vmem:[#allocation7 + $0x1b0] sm:$0xff]
        %v503 = vld [vmem:[#allocation7 + $0x1b8] sm:$0xff]
        %v504 = vld [vmem:[#allocation7 + $0x1c0] sm:$0xff]
        %v505 = vld [vmem:[#allocation7 + $0x1c8] sm:$0xff]
        %v506 = vld [vmem:[#allocation7 + $0x1d0] sm:$0xff]
        %v507 = vld [vmem:[#allocation7 + $0x1d8] sm:$0xff]
        %v508 = vld [vmem:[#allocation7 + $0x1e0] sm:$0xff]
        %v509 = vld [vmem:[#allocation7 + $0x1e8] sm:$0xff]
        %v510 = vld [vmem:[#allocation7 + $0x1f0] sm:$0xff]
        %v511 = vld [vmem:[#allocation7 + $0x1f8] sm:$0xff]
        %512 = vmatpush.msra.mxu0 %v508
        %513 = vmatpush.msra.mxu0 %v504
        %514 = vmatpush.msra.mxu0 %v500
        %515 = vmatpush.msra.mxu0 %v496
        %516 = vmatpush.msra.mxu0 %v492
        %517 = vmatpush.msra.mxu0 %v488
        %518 = vmatpush.msra.mxu0 %v484
        %519 = vmatpush.msra.mxu0 %v480
        %520 = vmatpush.msra.mxu0 %v476
        %521 = vmatpush.msra.mxu0 %v472
        %522 = vmatpush.msra.mxu0 %v468
        %523 = vmatpush.msra.mxu0 %v464
        %524 = vmatpush.msra.mxu0 %v460
        %525 = vmatpush.msra.mxu0 %v456
        %526 = vmatpush.msra.mxu0 %v452
        %527 = vmatpush.msra.mxu0 %v448
        %528 = vmatmul.f32.gmra.mxu0 %v424
        %v529 = vpop.f32.mrf.mxu0
        %v530 = vadd.f32 0.0, %v529
        %531 = vmatmul.f32.gmra.mxu0 %v425
        %v532 = vpop.f32.mrf.mxu0
        %v533 = vadd.f32 0.0, %v532
        %534 = vmatmul.f32.gmra.mxu0 %v426
        %v535 = vpop.f32.mrf.mxu0
        %v536 = vadd.f32 0.0, %v535
        %537 = vmatmul.f32.gmra.mxu0 %v427
        %v538 = vpop.f32.mrf.mxu0
        %v539 = vadd.f32 0.0, %v538
        %540 = vmatmul.f32.gmra.mxu0 %v428
        %v541 = vpop.f32.mrf.mxu0
        %v542 = vadd.f32 0.0, %v541
        %543 = vmatmul.f32.gmra.mxu0 %v429
        %v544 = vpop.f32.mrf.mxu0
        %v545 = vadd.f32 0.0, %v544
        %546 = vmatmul.f32.gmra.mxu0 %v430
        %v547 = vpop.f32.mrf.mxu0
        %v548 = vadd.f32 0.0, %v547
        %549 = vmatmul.f32.gmra.mxu0 %v431
        %v550 = vpop.f32.mrf.mxu0
        %v551 = vadd.f32 0.0, %v550
        %552 = vdwg.mxu0
        %553 = vmatpush.msra.mxu0 %v509
        %554 = vmatpush.msra.mxu0 %v505
        %555 = vmatpush.msra.mxu0 %v501
        %556 = vmatpush.msra.mxu0 %v497
        %557 = vmatpush.msra.mxu0 %v493
        %558 = vmatpush.msra.mxu0 %v489
        %559 = vmatpush.msra.mxu0 %v485
        %560 = vmatpush.msra.mxu0 %v481
        %561 = vmatpush.msra.mxu0 %v477
        %562 = vmatpush.msra.mxu0 %v473
        %563 = vmatpush.msra.mxu0 %v469
        %564 = vmatpush.msra.mxu0 %v465
        %565 = vmatpush.msra.mxu0 %v461
        %566 = vmatpush.msra.mxu0 %v457
        %567 = vmatpush.msra.mxu0 %v453
        %568 = vmatpush.msra.mxu0 %v449
        %569 = vmatmul.f32.gmra.mxu0 %v424
        %v570 = vpop.f32.mrf.mxu0
        %v571 = vadd.f32 0.0, %v570
        %572 = vmatmul.f32.gmra.mxu0 %v425
        %v573 = vpop.f32.mrf.mxu0
        %v574 = vadd.f32 0.0, %v573
        %575 = vmatmul.f32.gmra.mxu0 %v426
        %v576 = vpop.f32.mrf.mxu0
        %v577 = vadd.f32 0.0, %v576
        %578 = vmatmul.f32.gmra.mxu0 %v427
        %v579 = vpop.f32.mrf.mxu0
        %v580 = vadd.f32 0.0, %v579
        %581 = vmatmul.f32.gmra.mxu0 %v428
        %v582 = vpop.f32.mrf.mxu0
        %v583 = vadd.f32 0.0, %v582
        %584 = vmatmul.f32.gmra.mxu0 %v429
        %v585 = vpop.f32.mrf.mxu0
        %v586 = vadd.f32 0.0, %v585
        %587 = vmatmul.f32.gmra.mxu0 %v430
        %v588 = vpop.f32.mrf.mxu0
        %v589 = vadd.f32 0.0, %v588
        %590 = vmatmul.f32.gmra.mxu0 %v431
        %v591 = vpop.f32.mrf.mxu0
        %v592 = vadd.f32 0.0, %v591
        %593 = vdwg.mxu0
        %594 = vmatpush.msra.mxu0 %v510
        %595 = vmatpush.msra.mxu0 %v506
        %596 = vmatpush.msra.mxu0 %v502
        %597 = vmatpush.msra.mxu0 %v498
        %598 = vmatpush.msra.mxu0 %v494
        %599 = vmatpush.msra.mxu0 %v490
        %600 = vmatpush.msra.mxu0 %v486
        %601 = vmatpush.msra.mxu0 %v482
        %602 = vmatpush.msra.mxu0 %v478
        %603 = vmatpush.msra.mxu0 %v474
        %604 = vmatpush.msra.mxu0 %v470
        %605 = vmatpush.msra.mxu0 %v466
        %606 = vmatpush.msra.mxu0 %v462
        %607 = vmatpush.msra.mxu0 %v458
        %608 = vmatpush.msra.mxu0 %v454
        %609 = vmatpush.msra.mxu0 %v450
        %610 = vmatmul.f32.gmra.mxu0 %v424
        %v611 = vpop.f32.mrf.mxu0
        %v612 = vadd.f32 0.0, %v611
        %613 = vmatmul.f32.gmra.mxu0 %v425
        %v614 = vpop.f32.mrf.mxu0
        %v615 = vadd.f32 0.0, %v614
        %616 = vmatmul.f32.gmra.mxu0 %v426
        %v617 = vpop.f32.mrf.mxu0
        %v618 = vadd.f32 0.0, %v617
        %619 = vmatmul.f32.gmra.mxu0 %v427
        %v620 = vpop.f32.mrf.mxu0
        %v621 = vadd.f32 0.0, %v620
        %622 = vmatmul.f32.gmra.mxu0 %v428
        %v623 = vpop.f32.mrf.mxu0
        %v624 = vadd.f32 0.0, %v623
        %625 = vmatmul.f32.gmra.mxu0 %v429
        %v626 = vpop.f32.mrf.mxu0
        %v627 = vadd.f32 0.0, %v626
        %628 = vmatmul.f32.gmra.mxu0 %v430
        %v629 = vpop.f32.mrf.mxu0
        %v630 = vadd.f32 0.0, %v629
        %631 = vmatmul.f32.gmra.mxu0 %v431
        %v632 = vpop.f32.mrf.mxu0
        %v633 = vadd.f32 0.0, %v632
        %634 = vdwg.mxu0
        %635 = vmatpush.msra.mxu0 %v511
        %636 = vmatpush.msra.mxu0 %v507
        %637 = vmatpush.msra.mxu0 %v503
        %638 = vmatpush.msra.mxu0 %v499
        %639 = vmatpush.msra.mxu0 %v495
        %640 = vmatpush.msra.mxu0 %v491
        %641 = vmatpush.msra.mxu0 %v487
        %642 = vmatpush.msra.mxu0 %v483
        %643 = vmatpush.msra.mxu0 %v479
        %644 = vmatpush.msra.mxu0 %v475
        %645 = vmatpush.msra.mxu0 %v471
        %646 = vmatpush.msra.mxu0 %v467
        %647 = vmatpush.msra.mxu0 %v463
        %648 = vmatpush.msra.mxu0 %v459
        %649 = vmatpush.msra.mxu0 %v455
        %650 = vmatpush.msra.mxu0 %v451
        %651 = vmatmul.f32.gmra.mxu0 %v424
        %v652 = vpop.f32.mrf.mxu0
        %v653 = vadd.f32 0.0, %v652
        %654 = vmatmul.f32.gmra.mxu0 %v425
        %v655 = vpop.f32.mrf.mxu0
        %v656 = vadd.f32 0.0, %v655
        %657 = vmatmul.f32.gmra.mxu0 %v426
        %v658 = vpop.f32.mrf.mxu0
        %v659 = vadd.f32 0.0, %v658
        %660 = vmatmul.f32.gmra.mxu0 %v427
        %v661 = vpop.f32.mrf.mxu0
        %v662 = vadd.f32 0.0, %v661
        %663 = vmatmul.f32.gmra.mxu0 %v428
        %v664 = vpop.f32.mrf.mxu0
        %v665 = vadd.f32 0.0, %v664
        %666 = vmatmul.f32.gmra.mxu0 %v429
        %v667 = vpop.f32.mrf.mxu0
        %v668 = vadd.f32 0.0, %v667
        %669 = vmatmul.f32.gmra.mxu0 %v430
        %v670 = vpop.f32.mrf.mxu0
        %v671 = vadd.f32 0.0, %v670
        %672 = vmatmul.f32.gmra.mxu0 %v431
        %v673 = vpop.f32.mrf.mxu0
        %v674 = vadd.f32 0.0, %v673
        %675 = vdwg.mxu0
        %v676 = vld [vmem:[#allocation8] sm:$0xff]
        %v677 = vld [vmem:[#allocation8 + $0x8] sm:$0xff]
        %v678 = vld [vmem:[#allocation8 + $0x10] sm:$0xff]
        %v679 = vld [vmem:[#allocation8 + $0x18] sm:$0xff]
        %v680 = vld [vmem:[#allocation8 + $0x20] sm:$0xff]
        %v681 = vld [vmem:[#allocation8 + $0x28] sm:$0xff]
        %v682 = vld [vmem:[#allocation8 + $0x30] sm:$0xff]
        %v683 = vld [vmem:[#allocation8 + $0x38] sm:$0xff]
        %v684 = vld [vmem:[#allocation8 + $0x40] sm:$0xff]
        %v685 = vld [vmem:[#allocation8 + $0x48] sm:$0xff]
        %v686 = vld [vmem:[#allocation8 + $0x50] sm:$0xff]
        %v687 = vld [vmem:[#allocation8 + $0x58] sm:$0xff]
        %v688 = vld [vmem:[#allocation8 + $0x60] sm:$0xff]
        %v689 = vld [vmem:[#allocation8 + $0x68] sm:$0xff]
        %v690 = vld [vmem:[#allocation8 + $0x70] sm:$0xff]
        %v691 = vld [vmem:[#allocation8 + $0x78] sm:$0xff]
        %vm692 = vcmask 261120
        %v694 = vsel %vm692, %v571, 0
        %v697 = vsel %vm692, %v574, 0
        %v700 = vsel %vm692, %v612, 0
        %v703 = vsel %vm692, %v615, 0
        %705 = vmatpush.xpose.msra.mxu0 0.0
        %706 = vmatpush.xpose.msra.mxu0 0.0
        %707 = vmatpush.xpose.msra.mxu0 0.0
        %708 = vmatpush.xpose.msra.mxu0 0.0
        %709 = vmatpush.xpose.msra.mxu0 0.0
        %710 = vmatpush.xpose.msra.mxu0 0.0
        %711 = vmatpush.xpose.msra.mxu0 0.0
        %712 = vmatpush.xpose.msra.mxu0 0.0
        %713 = vmatpush.xpose.msra.mxu0 0.0
        %714 = vmatpush.xpose.msra.mxu0 0.0
        %715 = vmatpush.xpose.msra.mxu0 0.0
        %716 = vmatpush.xpose.msra.mxu0 0.0
        %717 = vmatpush.xpose.msra.mxu0 0.0
        %718 = vmatpush.xpose.msra.mxu0 0.0
        %719 = vmatpush.xpose.msra.mxu0 %v703
        %720 = vmatpush.xpose.msra.mxu0 %v700
        %721 = vmatmul.f32.gmra.mxu0 %v694
        %v722 = vpop.f32.mrf.mxu0
        %v723 = vadd.f32 0.0, %v722
        %724 = vmatmul.f32.gmra.mxu0 %v697
        %v725 = vpop.f32.mrf.mxu0
        %v726 = vadd.f32 0.0, %v725
        %727 = vdwg.mxu0
        %v729 = vsel %vm692, %v577, 0
        %v732 = vsel %vm692, %v580, 0
        %v735 = vsel %vm692, %v618, 0
        %v738 = vsel %vm692, %v621, 0
        %740 = vmatpush.xpose.msra.mxu0 0.0
        %741 = vmatpush.xpose.msra.mxu0 0.0
        %742 = vmatpush.xpose.msra.mxu0 0.0
        %743 = vmatpush.xpose.msra.mxu0 0.0
        %744 = vmatpush.xpose.msra.mxu0 0.0
        %745 = vmatpush.xpose.msra.mxu0 0.0
        %746 = vmatpush.xpose.msra.mxu0 0.0
        %747 = vmatpush.xpose.msra.mxu0 0.0
        %748 = vmatpush.xpose.msra.mxu0 0.0
        %749 = vmatpush.xpose.msra.mxu0 0.0
        %750 = vmatpush.xpose.msra.mxu0 0.0
        %751 = vmatpush.xpose.msra.mxu0 0.0
        %752 = vmatpush.xpose.msra.mxu0 0.0
        %753 = vmatpush.xpose.msra.mxu0 0.0
        %754 = vmatpush.xpose.msra.mxu0 %v738
        %755 = vmatpush.xpose.msra.mxu0 %v735
        %756 = vmatmul.f32.gmra.mxu0 %v729
        %v757 = vpop.f32.mrf.mxu0
        %v758 = vadd.f32 0.0, %v757
        %759 = vmatmul.f32.gmra.mxu0 %v732
        %v760 = vpop.f32.mrf.mxu0
        %v761 = vadd.f32 0.0, %v760
        %762 = vdwg.mxu0
        %v764 = vsel %vm692, %v583, 0
        %v767 = vsel %vm692, %v586, 0
        %v770 = vsel %vm692, %v624, 0
        %v773 = vsel %vm692, %v627, 0
        %775 = vmatpush.xpose.msra.mxu0 0.0
        %776 = vmatpush.xpose.msra.mxu0 0.0
        %777 = vmatpush.xpose.msra.mxu0 0.0
        %778 = vmatpush.xpose.msra.mxu0 0.0
        %779 = vmatpush.xpose.msra.mxu0 0.0
        %780 = vmatpush.xpose.msra.mxu0 0.0
        %781 = vmatpush.xpose.msra.mxu0 0.0
        %782 = vmatpush.xpose.msra.mxu0 0.0
        %783 = vmatpush.xpose.msra.mxu0 0.0
        %784 = vmatpush.xpose.msra.mxu0 0.0
        %785 = vmatpush.xpose.msra.mxu0 0.0
        %786 = vmatpush.xpose.msra.mxu0 0.0
        %787 = vmatpush.xpose.msra.mxu0 0.0
        %788 = vmatpush.xpose.msra.mxu0 0.0
        %789 = vmatpush.xpose.msra.mxu0 %v773
        %790 = vmatpush.xpose.msra.mxu0 %v770
        %791 = vmatmul.f32.gmra.mxu0 %v764
        %v792 = vpop.f32.mrf.mxu0
        %v793 = vadd.f32 0.0, %v792
        %794 = vmatmul.f32.gmra.mxu0 %v767
        %v795 = vpop.f32.mrf.mxu0
        %v796 = vadd.f32 0.0, %v795
        %797 = vdwg.mxu0
        %v799 = vsel %vm692, %v589, 0
        %v802 = vsel %vm692, %v592, 0
        %v805 = vsel %vm692, %v630, 0
        %v808 = vsel %vm692, %v633, 0
        %810 = vmatpush.xpose.msra.mxu0 0.0
        %811 = vmatpush.xpose.msra.mxu0 0.0
        %812 = vmatpush.xpose.msra.mxu0 0.0
        %813 = vmatpush.xpose.msra.mxu0 0.0
        %814 = vmatpush.xpose.msra.mxu0 0.0
        %815 = vmatpush.xpose.msra.mxu0 0.0
        %816 = vmatpush.xpose.msra.mxu0 0.0
        %817 = vmatpush.xpose.msra.mxu0 0.0
        %818 = vmatpush.xpose.msra.mxu0 0.0
        %819 = vmatpush.xpose.msra.mxu0 0.0
        %820 = vmatpush.xpose.msra.mxu0 0.0
        %821 = vmatpush.xpose.msra.mxu0 0.0
        %822 = vmatpush.xpose.msra.mxu0 0.0
        %823 = vmatpush.xpose.msra.mxu0 0.0
        %824 = vmatpush.xpose.msra.mxu0 %v808
        %825 = vmatpush.xpose.msra.mxu0 %v805
        %826 = vmatmul.f32.gmra.mxu0 %v799
        %v827 = vpop.f32.mrf.mxu0
        %v828 = vadd.f32 0.0, %v827
        %829 = vmatmul.f32.gmra.mxu0 %v802
        %v830 = vpop.f32.mrf.mxu0
        %v831 = vadd.f32 0.0, %v830
        %832 = vdwg.mxu0
        %v833 = vsel %vm440, -1e+09, %v723
        %v834 = vsel %vm441, -1e+09, %v726
        %v835 = vsel %vm442, -1e+09, %v758
        %v836 = vsel %vm443, -1e+09, %v761
        %v837 = vsel %vm444, -1e+09, %v793
        %v838 = vsel %vm445, -1e+09, %v796
        %v839 = vsel %vm446, -1e+09, %v828
        %v840 = vsel %vm447, -1e+09, %v831
        %vm841 = vcmask 130048
        %v842 = vsel %vm841, %v833, -inf
        %843 = vmax.xlane.f32.xlu0 %v842
        %v844 = vpop.xlane.xlu0 %843
        %v845 = vsel %vm841, %v834, -inf
        %846 = vmax.xlane.f32.xlu0 %v845
        %v847 = vpop.xlane.xlu0 %846
        %v848 = vsel %vm841, %v835, -inf
        %849 = vmax.xlane.f32.xlu0 %v848
        %v850 = vpop.xlane.xlu0 %849
        %v851 = vsel %vm841, %v836, -inf
        %852 = vmax.xlane.f32.xlu0 %v851
        %v853 = vpop.xlane.xlu0 %852
        %v854 = vsel %vm841, %v837, -inf
        %855 = vmax.xlane.f32.xlu0 %v854
        %v856 = vpop.xlane.xlu0 %855
        %v857 = vsel %vm841, %v838, -inf
        %858 = vmax.xlane.f32.xlu0 %v857
        %v859 = vpop.xlane.xlu0 %858
        %v860 = vsel %vm841, %v839, -inf
        %861 = vmax.xlane.f32.xlu0 %v860
        %v862 = vpop.xlane.xlu0 %861
        %v863 = vsel %vm841, %v840, -inf
        %864 = vmax.xlane.f32.xlu0 %v863
        %v865 = vpop.xlane.xlu0 %864
        %v866 = vsub.f32 %v833, %v844
        %v867 = vsub.f32 %v834, %v847
        %v868 = vsub.f32 %v835, %v850
        %v869 = vsub.f32 %v836, %v853
        %v870 = vsub.f32 %v837, %v856
        %v871 = vsub.f32 %v838, %v859
        %v872 = vsub.f32 %v839, %v862
        %v873 = vsub.f32 %v840, %v865
        %v874 = vmul.f32 %v866, 1.442695
        %v875 = vpow.pop %v874
        %v876 = vmul.f32 %v867, 1.442695
        %v877 = vpow.pop %v876
        %v878 = vmul.f32 %v868, 1.442695
        %v879 = vpow.pop %v878
        %v880 = vmul.f32 %v869, 1.442695
        %v881 = vpow.pop %v880
        %v882 = vmul.f32 %v870, 1.442695
        %v883 = vpow.pop %v882
        %v884 = vmul.f32 %v871, 1.442695
        %v885 = vpow.pop %v884
        %v886 = vmul.f32 %v872, 1.442695
        %v887 = vpow.pop %v886
        %v888 = vmul.f32 %v873, 1.442695
        %v889 = vpow.pop %v888
        %v890 = vsel %vm841, %v875, 0.0
        %891 = vadd.xlane.f32.xlu0 %v890
        %v892 = vpop.xlane.xlu0 %891
        %v893 = vsel %vm841, %v877, 0.0
        %894 = vadd.xlane.f32.xlu0 %v893
        %v895 = vpop.xlane.xlu0 %894
        %v896 = vsel %vm841, %v879, 0.0
        %897 = vadd.xlane.f32.xlu0 %v896
        %v898 = vpop.xlane.xlu0 %897
        %v899 = vsel %vm841, %v881, 0.0
        %900 = vadd.xlane.f32.xlu0 %v899
        %v901 = vpop.xlane.xlu0 %900
        %v902 = vsel %vm841, %v883, 0.0
        %903 = vadd.xlane.f32.xlu0 %v902
        %v904 = vpop.xlane.xlu0 %903
        %v905 = vsel %vm841, %v885, 0.0
        %906 = vadd.xlane.f32.xlu0 %v905
        %v907 = vpop.xlane.xlu0 %906
        %v908 = vsel %vm841, %v887, 0.0
        %909 = vadd.xlane.f32.xlu0 %v908
        %v910 = vpop.xlane.xlu0 %909
        %v911 = vsel %vm841, %v889, 0.0
        %912 = vadd.xlane.f32.xlu0 %v911
        %v913 = vpop.xlane.xlu0 %912
        %v914 = vrcp.pop %v892
        %v915 = vmul.f32 %v892, %v914
        %v916 = vsub.f32 1.0, %v915
        %v917 = vmul.f32 %v914, %v916
        %v918 = vadd.f32 %v914, %v917
        %vm919 = vweird.f32 %v892
        %vm920 = vweird.f32 %v914
        %vm921 = vmor %vm919, %vm920
        %v922 = vsel %vm921, %v914, %v918
        %v923 = vand.u32 2147483647, %v892
        %vm924 = vcmp.eq.f32.partialorder %v923, 8.507059e+37
        %v925 = vand.u32 %v892, 2147483648
        %v926 = vor.u32 1.1754944e-38, %v925
        %v927 = vsel %vm924, %v926, %v922
        %v928 = vmul.f32 %v875, %v927
        %v929 = vrcp.pop %v895
        %v930 = vmul.f32 %v895, %v929
        %v931 = vsub.f32 1.0, %v930
        %v932 = vmul.f32 %v929, %v931
        %v933 = vadd.f32 %v929, %v932
        %vm934 = vweird.f32 %v895
        %vm935 = vweird.f32 %v929
        %vm936 = vmor %vm934, %vm935
        %v937 = vsel %vm936, %v929, %v933
        %v938 = vand.u32 2147483647, %v895
        %vm939 = vcmp.eq.f32.partialorder %v938, 8.507059e+37
        %v940 = vand.u32 %v895, 2147483648
        %v941 = vor.u32 1.1754944e-38, %v940
        %v942 = vsel %vm939, %v941, %v937
        %v943 = vmul.f32 %v877, %v942
        %v944 = vrcp.pop %v898
        %v945 = vmul.f32 %v898, %v944
        %v946 = vsub.f32 1.0, %v945
        %v947 = vmul.f32 %v944, %v946
        %v948 = vadd.f32 %v944, %v947
        %vm949 = vweird.f32 %v898
        %vm950 = vweird.f32 %v944
        %vm951 = vmor %vm949, %vm950
        %v952 = vsel %vm951, %v944, %v948
        %v953 = vand.u32 2147483647, %v898
        %vm954 = vcmp.eq.f32.partialorder %v953, 8.507059e+37
        %v955 = vand.u32 %v898, 2147483648
        %v956 = vor.u32 1.1754944e-38, %v955
        %v957 = vsel %vm954, %v956, %v952
        %v958 = vmul.f32 %v879, %v957
        %v959 = vrcp.pop %v901
        %v960 = vmul.f32 %v901, %v959
        %v961 = vsub.f32 1.0, %v960
        %v962 = vmul.f32 %v959, %v961
        %v963 = vadd.f32 %v959, %v962
        %vm964 = vweird.f32 %v901
        %vm965 = vweird.f32 %v959
        %vm966 = vmor %vm964, %vm965
        %v967 = vsel %vm966, %v959, %v963
        %v968 = vand.u32 2147483647, %v901
        %vm969 = vcmp.eq.f32.partialorder %v968, 8.507059e+37
        %v970 = vand.u32 %v901, 2147483648
        %v971 = vor.u32 1.1754944e-38, %v970
        %v972 = vsel %vm969, %v971, %v967
        %v973 = vmul.f32 %v881, %v972
        %v974 = vrcp.pop %v904
        %v975 = vmul.f32 %v904, %v974
        %v976 = vsub.f32 1.0, %v975
        %v977 = vmul.f32 %v974, %v976
        %v978 = vadd.f32 %v974, %v977
        %vm979 = vweird.f32 %v904
        %vm980 = vweird.f32 %v974
        %vm981 = vmor %vm979, %vm980
        %v982 = vsel %vm981, %v974, %v978
        %v983 = vand.u32 2147483647, %v904
        %vm984 = vcmp.eq.f32.partialorder %v983, 8.507059e+37
        %v985 = vand.u32 %v904, 2147483648
        %v986 = vor.u32 1.1754944e-38, %v985
        %v987 = vsel %vm984, %v986, %v982
        %v988 = vmul.f32 %v883, %v987
        %v989 = vrcp.pop %v907
        %v990 = vmul.f32 %v907, %v989
        %v991 = vsub.f32 1.0, %v990
        %v992 = vmul.f32 %v989, %v991
        %v993 = vadd.f32 %v989, %v992
        %vm994 = vweird.f32 %v907
        %vm995 = vweird.f32 %v989
        %vm996 = vmor %vm994, %vm995
        %v997 = vsel %vm996, %v989, %v993
        %v998 = vand.u32 2147483647, %v907
        %vm999 = vcmp.eq.f32.partialorder %v998, 8.507059e+37
        %v1000 = vand.u32 %v907, 2147483648
        %v1001 = vor.u32 1.1754944e-38, %v1000
        %v1002 = vsel %vm999, %v1001, %v997
        %v1003 = vmul.f32 %v885, %v1002
        %v1004 = vrcp.pop %v910
        %v1005 = vmul.f32 %v910, %v1004
        %v1006 = vsub.f32 1.0, %v1005
        %v1007 = vmul.f32 %v1004, %v1006
        %v1008 = vadd.f32 %v1004, %v1007
        %vm1009 = vweird.f32 %v910
        %vm1010 = vweird.f32 %v1004
        %vm1011 = vmor %vm1009, %vm1010
        %v1012 = vsel %vm1011, %v1004, %v1008
        %v1013 = vand.u32 2147483647, %v910
        %vm1014 = vcmp.eq.f32.partialorder %v1013, 8.507059e+37
        %v1015 = vand.u32 %v910, 2147483648
        %v1016 = vor.u32 1.1754944e-38, %v1015
        %v1017 = vsel %vm1014, %v1016, %v1012
        %v1018 = vmul.f32 %v887, %v1017
        %v1019 = vrcp.pop %v913
        %v1020 = vmul.f32 %v913, %v1019
        %v1021 = vsub.f32 1.0, %v1020
        %v1022 = vmul.f32 %v1019, %v1021
        %v1023 = vadd.f32 %v1019, %v1022
        %vm1024 = vweird.f32 %v913
        %vm1025 = vweird.f32 %v1019
        %vm1026 = vmor %vm1024, %vm1025
        %v1027 = vsel %vm1026, %v1019, %v1023
        %v1028 = vand.u32 2147483647, %v913
        %vm1029 = vcmp.eq.f32.partialorder %v1028, 8.507059e+37
        %v1030 = vand.u32 %v913, 2147483648
        %v1031 = vor.u32 1.1754944e-38, %v1030
        %v1032 = vsel %vm1029, %v1031, %v1027
        %v1033 = vmul.f32 %v889, %v1032
        %v1035 = vsel %vm841, %v928, 0
        %v1038 = vsel %vm841, %v943, 0
        %1040 = vmatpush.msra.mxu0 0.0
        %1041 = vmatpush.msra.mxu0 0.0
        %1042 = vmatpush.msra.mxu0 0.0
        %1043 = vmatpush.msra.mxu0 0.0
        %1044 = vmatpush.msra.mxu0 0.0
        %1045 = vmatpush.msra.mxu0 0.0
        %1046 = vmatpush.msra.mxu0 0.0
        %1047 = vmatpush.msra.mxu0 0.0
        %1048 = vmatpush.msra.mxu0 0.0
        %1049 = vmatpush.msra.mxu0 0.0
        %1050 = vmatpush.msra.mxu0 0.0
        %1051 = vmatpush.msra.mxu0 0.0
        %1052 = vmatpush.msra.mxu0 0.0
        %1053 = vmatpush.msra.mxu0 0.0
        %1054 = vmatpush.msra.mxu0 %v656
        %1055 = vmatpush.msra.mxu0 %v653
        %1056 = vmatmul.f32.gmra.mxu0 %v1035
        %v1057 = vpop.f32.mrf.mxu0
        %v1058 = vadd.f32 0.0, %v1057
        %1059 = vmatmul.f32.gmra.mxu0 %v1038
        %v1060 = vpop.f32.mrf.mxu0
        %v1061 = vadd.f32 0.0, %v1060
        %1062 = vdwg.mxu0
        %v1064 = vsel %vm841, %v958, 0
        %v1067 = vsel %vm841, %v973, 0
        %1069 = vmatpush.msra.mxu0 0.0
        %1070 = vmatpush.msra.mxu0 0.0
        %1071 = vmatpush.msra.mxu0 0.0
        %1072 = vmatpush.msra.mxu0 0.0
        %1073 = vmatpush.msra.mxu0 0.0
        %1074 = vmatpush.msra.mxu0 0.0
        %1075 = vmatpush.msra.mxu0 0.0
        %1076 = vmatpush.msra.mxu0 0.0
        %1077 = vmatpush.msra.mxu0 0.0
        %1078 = vmatpush.msra.mxu0 0.0
        %1079 = vmatpush.msra.mxu0 0.0
        %1080 = vmatpush.msra.mxu0 0.0
        %1081 = vmatpush.msra.mxu0 0.0
        %1082 = vmatpush.msra.mxu0 0.0
        %1083 = vmatpush.msra.mxu0 %v662
        %1084 = vmatpush.msra.mxu0 %v659
        %1085 = vmatmul.f32.gmra.mxu0 %v1064
        %v1086 = vpop.f32.mrf.mxu0
        %v1087 = vadd.f32 0.0, %v1086
        %1088 = vmatmul.f32.gmra.mxu0 %v1067
        %v1089 = vpop.f32.mrf.mxu0
        %v1090 = vadd.f32 0.0, %v1089
        %1091 = vdwg.mxu0
        %v1093 = vsel %vm841, %v988, 0
        %v1096 = vsel %vm841, %v1003, 0
        %1098 = vmatpush.msra.mxu0 0.0
        %1099 = vmatpush.msra.mxu0 0.0
        %1100 = vmatpush.msra.mxu0 0.0
        %1101 = vmatpush.msra.mxu0 0.0
        %1102 = vmatpush.msra.mxu0 0.0
        %1103 = vmatpush.msra.mxu0 0.0
        %1104 = vmatpush.msra.mxu0 0.0
        %1105 = vmatpush.msra.mxu0 0.0
        %1106 = vmatpush.msra.mxu0 0.0
        %1107 = vmatpush.msra.mxu0 0.0
        %1108 = vmatpush.msra.mxu0 0.0
        %1109 = vmatpush.msra.mxu0 0.0
        %1110 = vmatpush.msra.mxu0 0.0
        %1111 = vmatpush.msra.mxu0 0.0
        %1112 = vmatpush.msra.mxu0 %v668
        %1113 = vmatpush.msra.mxu0 %v665
        %1114 = vmatmul.f32.gmra.mxu0 %v1093
        %v1115 = vpop.f32.mrf.mxu0
        %v1116 = vadd.f32 0.0, %v1115
        %1117 = vmatmul.f32.gmra.mxu0 %v1096
        %v1118 = vpop.f32.mrf.mxu0
        %v1119 = vadd.f32 0.0, %v1118
        %1120 = vdwg.mxu0
        %v1122 = vsel %vm841, %v1018, 0
        %v1125 = vsel %vm841, %v1033, 0
        %1127 = vmatpush.msra.mxu0 0.0
        %1128 = vmatpush.msra.mxu0 0.0
        %1129 = vmatpush.msra.mxu0 0.0
        %1130 = vmatpush.msra.mxu0 0.0
        %1131 = vmatpush.msra.mxu0 0.0
        %1132 = vmatpush.msra.mxu0 0.0
        %1133 = vmatpush.msra.mxu0 0.0
        %1134 = vmatpush.msra.mxu0 0.0
        %1135 = vmatpush.msra.mxu0 0.0
        %1136 = vmatpush.msra.mxu0 0.0
        %1137 = vmatpush.msra.mxu0 0.0
        %1138 = vmatpush.msra.mxu0 0.0
        %1139 = vmatpush.msra.mxu0 0.0
        %1140 = vmatpush.msra.mxu0 0.0
        %1141 = vmatpush.msra.mxu0 %v674
        %1142 = vmatpush.msra.mxu0 %v671
        %1143 = vmatmul.f32.gmra.mxu0 %v1122
        %v1144 = vpop.f32.mrf.mxu0
        %v1145 = vadd.f32 0.0, %v1144
        %1146 = vmatmul.f32.gmra.mxu0 %v1125
        %v1147 = vpop.f32.mrf.mxu0
        %v1148 = vadd.f32 0.0, %v1147
        %1149 = vdwg.mxu0
        %v1151 = vsel %vm692, %v1058, 0
        %v1154 = vsel %vm692, %v1061, 0
        %v1157 = vsel %vm692, %v1087, 0
        %v1160 = vsel %vm692, %v1090, 0
        %v1163 = vsel %vm692, %v1116, 0
        %v1166 = vsel %vm692, %v1119, 0
        %v1169 = vsel %vm692, %v1145, 0
        %v1172 = vsel %vm692, %v1148, 0
        %1174 = vmatpush.msra.mxu0 0.0
        %1175 = vmatpush.msra.mxu0 0.0
        %1176 = vmatpush.msra.mxu0 0.0
        %1177 = vmatpush.msra.mxu0 0.0
        %1178 = vmatpush.msra.mxu0 0.0
        %1179 = vmatpush.msra.mxu0 0.0
        %1180 = vmatpush.msra.mxu0 0.0
        %1181 = vmatpush.msra.mxu0 0.0
        %1182 = vmatpush.msra.mxu0 0.0
        %1183 = vmatpush.msra.mxu0 0.0
        %1184 = vmatpush.msra.mxu0 0.0
        %1185 = vmatpush.msra.mxu0 0.0
        %1186 = vmatpush.msra.mxu0 %v679
        %1187 = vmatpush.msra.mxu0 %v678
        %1188 = vmatpush.msra.mxu0 %v677
        %1189 = vmatpush.msra.mxu0 %v676
        %1190 = vmatmul.f32.gmra.mxu0 %v1151
        %v1191 = vpop.f32.mrf.mxu0
        %v1192 = vadd.f32 0.0, %v1191
        %1193 = vmatmul.f32.gmra.mxu0 %v1154
        %v1194 = vpop.f32.mrf.mxu0
        %v1195 = vadd.f32 0.0, %v1194
        %1196 = vmatmul.f32.gmra.mxu0 %v1157
        %v1197 = vpop.f32.mrf.mxu0
        %v1198 = vadd.f32 0.0, %v1197
        %1199 = vmatmul.f32.gmra.mxu0 %v1160
        %v1200 = vpop.f32.mrf.mxu0
        %v1201 = vadd.f32 0.0, %v1200
        %1202 = vmatmul.f32.gmra.mxu0 %v1163
        %v1203 = vpop.f32.mrf.mxu0
        %v1204 = vadd.f32 0.0, %v1203
        %1205 = vmatmul.f32.gmra.mxu0 %v1166
        %v1206 = vpop.f32.mrf.mxu0
        %v1207 = vadd.f32 0.0, %v1206
        %1208 = vmatmul.f32.gmra.mxu0 %v1169
        %v1209 = vpop.f32.mrf.mxu0
        %v1210 = vadd.f32 0.0, %v1209
        %1211 = vmatmul.f32.gmra.mxu0 %v1172
        %v1212 = vpop.f32.mrf.mxu0
        %v1213 = vadd.f32 0.0, %v1212
        %1214 = vdwg.mxu0
        %v1215 = vadd.f32 %v530, %v1192
        %v1216 = vadd.f32 %v533, %v1195
        %v1217 = vadd.f32 %v536, %v1198
        %v1218 = vadd.f32 %v539, %v1201
        %v1219 = vadd.f32 %v542, %v1204
        %v1220 = vadd.f32 %v545, %v1207
        %v1221 = vadd.f32 %v548, %v1210
        %v1222 = vadd.f32 %v551, %v1213
        %1223 = vrot.lane.b32.xlu0 %v571, 96
        %v1224 = vpop.permute.xlu0 %1223
        %1225 = vrot.lane.b32.xlu0 %v574, 96
        %v1226 = vpop.permute.xlu0 %1225
        %1227 = vrot.lane.b32.xlu0 %v612, 96
        %v1228 = vpop.permute.xlu0 %1227
        %1229 = vrot.lane.b32.xlu0 %v615, 96
        %v1230 = vpop.permute.xlu0 %1229
        %v1231 = vsel %vm692, %v1224, 0
        %v1233 = vsel %vm692, %v1226, 0
        %v1235 = vsel %vm692, %v1228, 0
        %v1237 = vsel %vm692, %v1230, 0
        %1239 = vmatpush.xpose.msra.mxu0 0.0
        %1240 = vmatpush.xpose.msra.mxu0 0.0
        %1241 = vmatpush.xpose.msra.mxu0 0.0
        %1242 = vmatpush.xpose.msra.mxu0 0.0
        %1243 = vmatpush.xpose.msra.mxu0 0.0
        %1244 = vmatpush.xpose.msra.mxu0 0.0
        %1245 = vmatpush.xpose.msra.mxu0 0.0
        %1246 = vmatpush.xpose.msra.mxu0 0.0
        %1247 = vmatpush.xpose.msra.mxu0 0.0
        %1248 = vmatpush.xpose.msra.mxu0 0.0
        %1249 = vmatpush.xpose.msra.mxu0 0.0
        %1250 = vmatpush.xpose.msra.mxu0 0.0
        %1251 = vmatpush.xpose.msra.mxu0 0.0
        %1252 = vmatpush.xpose.msra.mxu0 0.0
        %1253 = vmatpush.xpose.msra.mxu0 %v1237
        %1254 = vmatpush.xpose.msra.mxu0 %v1235
        %1255 = vmatmul.f32.gmra.mxu0 %v1231
        %v1256 = vpop.f32.mrf.mxu0
        %v1257 = vadd.f32 0.0, %v1256
        %1258 = vmatmul.f32.gmra.mxu0 %v1233
        %v1259 = vpop.f32.mrf.mxu0
        %v1260 = vadd.f32 0.0, %v1259
        %1261 = vdwg.mxu0
        %1262 = vrot.lane.b32.xlu0 %v577, 96
        %v1263 = vpop.permute.xlu0 %1262
        %1264 = vrot.lane.b32.xlu0 %v580, 96
        %v1265 = vpop.permute.xlu0 %1264
        %1266 = vrot.lane.b32.xlu0 %v618, 96
        %v1267 = vpop.permute.xlu0 %1266
        %1268 = vrot.lane.b32.xlu0 %v621, 96
        %v1269 = vpop.permute.xlu0 %1268
        %v1270 = vsel %vm692, %v1263, 0
        %v1272 = vsel %vm692, %v1265, 0
        %v1274 = vsel %vm692, %v1267, 0
        %v1276 = vsel %vm692, %v1269, 0
        %1278 = vmatpush.xpose.msra.mxu0 0.0
        %1279 = vmatpush.xpose.msra.mxu0 0.0
        %1280 = vmatpush.xpose.msra.mxu0 0.0
        %1281 = vmatpush.xpose.msra.mxu0 0.0
        %1282 = vmatpush.xpose.msra.mxu0 0.0
        %1283 = vmatpush.xpose.msra.mxu0 0.0
        %1284 = vmatpush.xpose.msra.mxu0 0.0
        %1285 = vmatpush.xpose.msra.mxu0 0.0
        %1286 = vmatpush.xpose.msra.mxu0 0.0
        %1287 = vmatpush.xpose.msra.mxu0 0.0
        %1288 = vmatpush.xpose.msra.mxu0 0.0
        %1289 = vmatpush.xpose.msra.mxu0 0.0
        %1290 = vmatpush.xpose.msra.mxu0 0.0
        %1291 = vmatpush.xpose.msra.mxu0 0.0
        %1292 = vmatpush.xpose.msra.mxu0 %v1276
        %1293 = vmatpush.xpose.msra.mxu0 %v1274
        %1294 = vmatmul.f32.gmra.mxu0 %v1270
        %v1295 = vpop.f32.mrf.mxu0
        %v1296 = vadd.f32 0.0, %v1295
        %1297 = vmatmul.f32.gmra.mxu0 %v1272
        %v1298 = vpop.f32.mrf.mxu0
        %v1299 = vadd.f32 0.0, %v1298
        %1300 = vdwg.mxu0
        %1301 = vrot.lane.b32.xlu0 %v583, 96
        %v1302 = vpop.permute.xlu0 %1301
        %1303 = vrot.lane.b32.xlu0 %v586, 96
        %v1304 = vpop.permute.xlu0 %1303
        %1305 = vrot.lane.b32.xlu0 %v624, 96
        %v1306 = vpop.permute.xlu0 %1305
        %1307 = vrot.lane.b32.xlu0 %v627, 96
        %v1308 = vpop.permute.xlu0 %1307
        %v1309 = vsel %vm692, %v1302, 0
        %v1311 = vsel %vm692, %v1304, 0
        %v1313 = vsel %vm692, %v1306, 0
        %v1315 = vsel %vm692, %v1308, 0
        %1317 = vmatpush.xpose.msra.mxu0 0.0
        %1318 = vmatpush.xpose.msra.mxu0 0.0
        %1319 = vmatpush.xpose.msra.mxu0 0.0
        %1320 = vmatpush.xpose.msra.mxu0 0.0
        %1321 = vmatpush.xpose.msra.mxu0 0.0
        %1322 = vmatpush.xpose.msra.mxu0 0.0
        %1323 = vmatpush.xpose.msra.mxu0 0.0
        %1324 = vmatpush.xpose.msra.mxu0 0.0
        %1325 = vmatpush.xpose.msra.mxu0 0.0
        %1326 = vmatpush.xpose.msra.mxu0 0.0
        %1327 = vmatpush.xpose.msra.mxu0 0.0
        %1328 = vmatpush.xpose.msra.mxu0 0.0
        %1329 = vmatpush.xpose.msra.mxu0 0.0
        %1330 = vmatpush.xpose.msra.mxu0 0.0
        %1331 = vmatpush.xpose.msra.mxu0 %v1315
        %1332 = vmatpush.xpose.msra.mxu0 %v1313
        %1333 = vmatmul.f32.gmra.mxu0 %v1309
        %v1334 = vpop.f32.mrf.mxu0
        %v1335 = vadd.f32 0.0, %v1334
        %1336 = vmatmul.f32.gmra.mxu0 %v1311
        %v1337 = vpop.f32.mrf.mxu0
        %v1338 = vadd.f32 0.0, %v1337
        %1339 = vdwg.mxu0
        %1340 = vrot.lane.b32.xlu0 %v589, 96
        %v1341 = vpop.permute.xlu0 %1340
        %1342 = vrot.lane.b32.xlu0 %v592, 96
        %v1343 = vpop.permute.xlu0 %1342
        %1344 = vrot.lane.b32.xlu0 %v630, 96
        %v1345 = vpop.permute.xlu0 %1344
        %1346 = vrot.lane.b32.xlu0 %v633, 96
        %v1347 = vpop.permute.xlu0 %1346
        %v1348 = vsel %vm692, %v1341, 0
        %v1350 = vsel %vm692, %v1343, 0
        %v1352 = vsel %vm692, %v1345, 0
        %v1354 = vsel %vm692, %v1347, 0
        %1356 = vmatpush.xpose.msra.mxu0 0.0
        %1357 = vmatpush.xpose.msra.mxu0 0.0
        %1358 = vmatpush.xpose.msra.mxu0 0.0
        %1359 = vmatpush.xpose.msra.mxu0 0.0
        %1360 = vmatpush.xpose.msra.mxu0 0.0
        %1361 = vmatpush.xpose.msra.mxu0 0.0
        %1362 = vmatpush.xpose.msra.mxu0 0.0
        %1363 = vmatpush.xpose.msra.mxu0 0.0
        %1364 = vmatpush.xpose.msra.mxu0 0.0
        %1365 = vmatpush.xpose.msra.mxu0 0.0
        %1366 = vmatpush.xpose.msra.mxu0 0.0
        %1367 = vmatpush.xpose.msra.mxu0 0.0
        %1368 = vmatpush.xpose.msra.mxu0 0.0
        %1369 = vmatpush.xpose.msra.mxu0 0.0
        %1370 = vmatpush.xpose.msra.mxu0 %v1354
        %1371 = vmatpush.xpose.msra.mxu0 %v1352
        %1372 = vmatmul.f32.gmra.mxu0 %v1348
        %v1373 = vpop.f32.mrf.mxu0
        %v1374 = vadd.f32 0.0, %v1373
        %1375 = vmatmul.f32.gmra.mxu0 %v1350
        %v1376 = vpop.f32.mrf.mxu0
        %v1377 = vadd.f32 0.0, %v1376
        %1378 = vdwg.mxu0
        %v1379 = vsel %vm440, -1e+09, %v1257
        %v1380 = vsel %vm441, -1e+09, %v1260
        %v1381 = vsel %vm442, -1e+09, %v1296
        %v1382 = vsel %vm443, -1e+09, %v1299
        %v1383 = vsel %vm444, -1e+09, %v1335
        %v1384 = vsel %vm445, -1e+09, %v1338
        %v1385 = vsel %vm446, -1e+09, %v1374
        %v1386 = vsel %vm447, -1e+09, %v1377
        %v1387 = vsel %vm841, %v1379, -inf
        %1388 = vmax.xlane.f32.xlu0 %v1387
        %v1389 = vpop.xlane.xlu0 %1388
        %v1390 = vsel %vm841, %v1380, -inf
        %1391 = vmax.xlane.f32.xlu0 %v1390
        %v1392 = vpop.xlane.xlu0 %1391
        %v1393 = vsel %vm841, %v1381, -inf
        %1394 = vmax.xlane.f32.xlu0 %v1393
        %v1395 = vpop.xlane.xlu0 %1394
        %v1396 = vsel %vm841, %v1382, -inf
        %1397 = vmax.xlane.f32.xlu0 %v1396
        %v1398 = vpop.xlane.xlu0 %1397
        %v1399 = vsel %vm841, %v1383, -inf
        %1400 = vmax.xlane.f32.xlu0 %v1399
        %v1401 = vpop.xlane.xlu0 %1400
        %v1402 = vsel %vm841, %v1384, -inf
        %1403 = vmax.xlane.f32.xlu0 %v1402
        %v1404 = vpop.xlane.xlu0 %1403
        %v1405 = vsel %vm841, %v1385, -inf
        %1406 = vmax.xlane.f32.xlu0 %v1405
        %v1407 = vpop.xlane.xlu0 %1406
        %v1408 = vsel %vm841, %v1386, -inf
        %1409 = vmax.xlane.f32.xlu0 %v1408
        %v1410 = vpop.xlane.xlu0 %1409
        %v1411 = vsub.f32 %v1379, %v1389
        %v1412 = vsub.f32 %v1380, %v1392
        %v1413 = vsub.f32 %v1381, %v1395
        %v1414 = vsub.f32 %v1382, %v1398
        %v1415 = vsub.f32 %v1383, %v1401
        %v1416 = vsub.f32 %v1384, %v1404
        %v1417 = vsub.f32 %v1385, %v1407
        %v1418 = vsub.f32 %v1386, %v1410
        %v1419 = vmul.f32 %v1411, 1.442695
        %v1420 = vpow.pop %v1419
        %v1421 = vmul.f32 %v1412, 1.442695
        %v1422 = vpow.pop %v1421
        %v1423 = vmul.f32 %v1413, 1.442695
        %v1424 = vpow.pop %v1423
        %v1425 = vmul.f32 %v1414, 1.442695
        %v1426 = vpow.pop %v1425
        %v1427 = vmul.f32 %v1415, 1.442695
        %v1428 = vpow.pop %v1427
        %v1429 = vmul.f32 %v1416, 1.442695
        %v1430 = vpow.pop %v1429
        %v1431 = vmul.f32 %v1417, 1.442695
        %v1432 = vpow.pop %v1431
        %v1433 = vmul.f32 %v1418, 1.442695
        %v1434 = vpow.pop %v1433
        %v1435 = vsel %vm841, %v1420, 0.0
        %1436 = vadd.xlane.f32.xlu0 %v1435
        %v1437 = vpop.xlane.xlu0 %1436
        %v1438 = vsel %vm841, %v1422, 0.0
        %1439 = vadd.xlane.f32.xlu0 %v1438
        %v1440 = vpop.xlane.xlu0 %1439
        %v1441 = vsel %vm841, %v1424, 0.0
        %1442 = vadd.xlane.f32.xlu0 %v1441
        %v1443 = vpop.xlane.xlu0 %1442
        %v1444 = vsel %vm841, %v1426, 0.0
        %1445 = vadd.xlane.f32.xlu0 %v1444
        %v1446 = vpop.xlane.xlu0 %1445
        %v1447 = vsel %vm841, %v1428, 0.0
        %1448 = vadd.xlane.f32.xlu0 %v1447
        %v1449 = vpop.xlane.xlu0 %1448
        %v1450 = vsel %vm841, %v1430, 0.0
        %1451 = vadd.xlane.f32.xlu0 %v1450
        %v1452 = vpop.xlane.xlu0 %1451
        %v1453 = vsel %vm841, %v1432, 0.0
        %1454 = vadd.xlane.f32.xlu0 %v1453
        %v1455 = vpop.xlane.xlu0 %1454
        %v1456 = vsel %vm841, %v1434, 0.0
        %1457 = vadd.xlane.f32.xlu0 %v1456
        %v1458 = vpop.xlane.xlu0 %1457
        %v1459 = vrcp.pop %v1437
        %v1460 = vmul.f32 %v1437, %v1459
        %v1461 = vsub.f32 1.0, %v1460
        %v1462 = vmul.f32 %v1459, %v1461
        %v1463 = vadd.f32 %v1459, %v1462
        %vm1464 = vweird.f32 %v1437
        %vm1465 = vweird.f32 %v1459
        %vm1466 = vmor %vm1464, %vm1465
        %v1467 = vsel %vm1466, %v1459, %v1463
        %v1468 = vand.u32 2147483647, %v1437
        %vm1469 = vcmp.eq.f32.partialorder %v1468, 8.507059e+37
        %v1470 = vand.u32 %v1437, 2147483648
        %v1471 = vor.u32 1.1754944e-38, %v1470
        %v1472 = vsel %vm1469, %v1471, %v1467
        %v1473 = vmul.f32 %v1420, %v1472
        %v1474 = vrcp.pop %v1440
        %v1475 = vmul.f32 %v1440, %v1474
        %v1476 = vsub.f32 1.0, %v1475
        %v1477 = vmul.f32 %v1474, %v1476
        %v1478 = vadd.f32 %v1474, %v1477
        %vm1479 = vweird.f32 %v1440
        %vm1480 = vweird.f32 %v1474
        %vm1481 = vmor %vm1479, %vm1480
        %v1482 = vsel %vm1481, %v1474, %v1478
        %v1483 = vand.u32 2147483647, %v1440
        %vm1484 = vcmp.eq.f32.partialorder %v1483, 8.507059e+37
        %v1485 = vand.u32 %v1440, 2147483648
        %v1486 = vor.u32 1.1754944e-38, %v1485
        %v1487 = vsel %vm1484, %v1486, %v1482
        %v1488 = vmul.f32 %v1422, %v1487
        %v1489 = vrcp.pop %v1443
        %v1490 = vmul.f32 %v1443, %v1489
        %v1491 = vsub.f32 1.0, %v1490
        %v1492 = vmul.f32 %v1489, %v1491
        %v1493 = vadd.f32 %v1489, %v1492
        %vm1494 = vweird.f32 %v1443
        %vm1495 = vweird.f32 %v1489
        %vm1496 = vmor %vm1494, %vm1495
        %v1497 = vsel %vm1496, %v1489, %v1493
        %v1498 = vand.u32 2147483647, %v1443
        %vm1499 = vcmp.eq.f32.partialorder %v1498, 8.507059e+37
        %v1500 = vand.u32 %v1443, 2147483648
        %v1501 = vor.u32 1.1754944e-38, %v1500
        %v1502 = vsel %vm1499, %v1501, %v1497
        %v1503 = vmul.f32 %v1424, %v1502
        %v1504 = vrcp.pop %v1446
        %v1505 = vmul.f32 %v1446, %v1504
        %v1506 = vsub.f32 1.0, %v1505
        %v1507 = vmul.f32 %v1504, %v1506
        %v1508 = vadd.f32 %v1504, %v1507
        %vm1509 = vweird.f32 %v1446
        %vm1510 = vweird.f32 %v1504
        %vm1511 = vmor %vm1509, %vm1510
        %v1512 = vsel %vm1511, %v1504, %v1508
        %v1513 = vand.u32 2147483647, %v1446
        %vm1514 = vcmp.eq.f32.partialorder %v1513, 8.507059e+37
        %v1515 = vand.u32 %v1446, 2147483648
        %v1516 = vor.u32 1.1754944e-38, %v1515
        %v1517 = vsel %vm1514, %v1516, %v1512
        %v1518 = vmul.f32 %v1426, %v1517
        %v1519 = vrcp.pop %v1449
        %v1520 = vmul.f32 %v1449, %v1519
        %v1521 = vsub.f32 1.0, %v1520
        %v1522 = vmul.f32 %v1519, %v1521
        %v1523 = vadd.f32 %v1519, %v1522
        %vm1524 = vweird.f32 %v1449
        %vm1525 = vweird.f32 %v1519
        %vm1526 = vmor %vm1524, %vm1525
        %v1527 = vsel %vm1526, %v1519, %v1523
        %v1528 = vand.u32 2147483647, %v1449
        %vm1529 = vcmp.eq.f32.partialorder %v1528, 8.507059e+37
        %v1530 = vand.u32 %v1449, 2147483648
        %v1531 = vor.u32 1.1754944e-38, %v1530
        %v1532 = vsel %vm1529, %v1531, %v1527
        %v1533 = vmul.f32 %v1428, %v1532
        %v1534 = vrcp.pop %v1452
        %v1535 = vmul.f32 %v1452, %v1534
        %v1536 = vsub.f32 1.0, %v1535
        %v1537 = vmul.f32 %v1534, %v1536
        %v1538 = vadd.f32 %v1534, %v1537
        %vm1539 = vweird.f32 %v1452
        %vm1540 = vweird.f32 %v1534
        %vm1541 = vmor %vm1539, %vm1540
        %v1542 = vsel %vm1541, %v1534, %v1538
        %v1543 = vand.u32 2147483647, %v1452
        %vm1544 = vcmp.eq.f32.partialorder %v1543, 8.507059e+37
        %v1545 = vand.u32 %v1452, 2147483648
        %v1546 = vor.u32 1.1754944e-38, %v1545
        %v1547 = vsel %vm1544, %v1546, %v1542
        %v1548 = vmul.f32 %v1430, %v1547
        %v1549 = vrcp.pop %v1455
        %v1550 = vmul.f32 %v1455, %v1549
        %v1551 = vsub.f32 1.0, %v1550
        %v1552 = vmul.f32 %v1549, %v1551
        %v1553 = vadd.f32 %v1549, %v1552
        %vm1554 = vweird.f32 %v1455
        %vm1555 = vweird.f32 %v1549
        %vm1556 = vmor %vm1554, %vm1555
        %v1557 = vsel %vm1556, %v1549, %v1553
        %v1558 = vand.u32 2147483647, %v1455
        %vm1559 = vcmp.eq.f32.partialorder %v1558, 8.507059e+37
        %v1560 = vand.u32 %v1455, 2147483648
        %v1561 = vor.u32 1.1754944e-38, %v1560
        %v1562 = vsel %vm1559, %v1561, %v1557
        %v1563 = vmul.f32 %v1432, %v1562
        %v1564 = vrcp.pop %v1458
        %v1565 = vmul.f32 %v1458, %v1564
        %v1566 = vsub.f32 1.0, %v1565
        %v1567 = vmul.f32 %v1564, %v1566
        %v1568 = vadd.f32 %v1564, %v1567
        %vm1569 = vweird.f32 %v1458
        %vm1570 = vweird.f32 %v1564
        %vm1571 = vmor %vm1569, %vm1570
        %v1572 = vsel %vm1571, %v1564, %v1568
        %v1573 = vand.u32 2147483647, %v1458
        %vm1574 = vcmp.eq.f32.partialorder %v1573, 8.507059e+37
        %v1575 = vand.u32 %v1458, 2147483648
        %v1576 = vor.u32 1.1754944e-38, %v1575
        %v1577 = vsel %vm1574, %v1576, %v1572
        %v1578 = vmul.f32 %v1434, %v1577
        %1581 = vrot.lane.b32.xlu0 %v653, 96
        %v1582 = vpop.permute.xlu0 %1581
        %1583 = vrot.lane.b32.xlu0 %v656, 96
        %v1584 = vpop.permute.xlu0 %1583
        %v1588 = vsel %vm841, %v1473, 0
        %v1591 = vsel %vm841, %v1488, 0
        %1593 = vmatpush.msra.mxu0 0.0
        %1594 = vmatpush.msra.mxu0 0.0
        %1595 = vmatpush.msra.mxu0 0.0
        %1596 = vmatpush.msra.mxu0 0.0
        %1597 = vmatpush.msra.mxu0 0.0
        %1598 = vmatpush.msra.mxu0 0.0
        %1599 = vmatpush.msra.mxu0 0.0
        %1600 = vmatpush.msra.mxu0 0.0
        %1601 = vmatpush.msra.mxu0 0.0
        %1602 = vmatpush.msra.mxu0 0.0
        %1603 = vmatpush.msra.mxu0 0.0
        %1604 = vmatpush.msra.mxu0 0.0
        %1605 = vmatpush.msra.mxu0 0.0
        %1606 = vmatpush.msra.mxu0 0.0
        %1607 = vmatpush.msra.mxu0 %v1584
        %1608 = vmatpush.msra.mxu0 %v1582
        %1609 = vmatmul.f32.gmra.mxu0 %v1588
        %v1610 = vpop.f32.mrf.mxu0
        %v1611 = vadd.f32 0.0, %v1610
        %1612 = vmatmul.f32.gmra.mxu0 %v1591
        %v1613 = vpop.f32.mrf.mxu0
        %v1614 = vadd.f32 0.0, %v1613
        %1615 = vdwg.mxu0
        %1618 = vrot.lane.b32.xlu0 %v659, 96
        %v1619 = vpop.permute.xlu0 %1618
        %1620 = vrot.lane.b32.xlu0 %v662, 96
        %v1621 = vpop.permute.xlu0 %1620
        %v1625 = vsel %vm841, %v1503, 0
        %v1628 = vsel %vm841, %v1518, 0
        %1630 = vmatpush.msra.mxu0 0.0
        %1631 = vmatpush.msra.mxu0 0.0
        %1632 = vmatpush.msra.mxu0 0.0
        %1633 = vmatpush.msra.mxu0 0.0
        %1634 = vmatpush.msra.mxu0 0.0
        %1635 = vmatpush.msra.mxu0 0.0
        %1636 = vmatpush.msra.mxu0 0.0
        %1637 = vmatpush.msra.mxu0 0.0
        %1638 = vmatpush.msra.mxu0 0.0
        %1639 = vmatpush.msra.mxu0 0.0
        %1640 = vmatpush.msra.mxu0 0.0
        %1641 = vmatpush.msra.mxu0 0.0
        %1642 = vmatpush.msra.mxu0 0.0
        %1643 = vmatpush.msra.mxu0 0.0
        %1644 = vmatpush.msra.mxu0 %v1621
        %1645 = vmatpush.msra.mxu0 %v1619
        %1646 = vmatmul.f32.gmra.mxu0 %v1625
        %v1647 = vpop.f32.mrf.mxu0
        %v1648 = vadd.f32 0.0, %v1647
        %1649 = vmatmul.f32.gmra.mxu0 %v1628
        %v1650 = vpop.f32.mrf.mxu0
        %v1651 = vadd.f32 0.0, %v1650
        %1652 = vdwg.mxu0
        %1655 = vrot.lane.b32.xlu0 %v665, 96
        %v1656 = vpop.permute.xlu0 %1655
        %1657 = vrot.lane.b32.xlu0 %v668, 96
        %v1658 = vpop.permute.xlu0 %1657
        %v1662 = vsel %vm841, %v1533, 0
        %v1665 = vsel %vm841, %v1548, 0
        %1667 = vmatpush.msra.mxu0 0.0
        %1668 = vmatpush.msra.mxu0 0.0
        %1669 = vmatpush.msra.mxu0 0.0
        %1670 = vmatpush.msra.mxu0 0.0
        %1671 = vmatpush.msra.mxu0 0.0
        %1672 = vmatpush.msra.mxu0 0.0
        %1673 = vmatpush.msra.mxu0 0.0
        %1674 = vmatpush.msra.mxu0 0.0
        %1675 = vmatpush.msra.mxu0 0.0
        %1676 = vmatpush.msra.mxu0 0.0
        %1677 = vmatpush.msra.mxu0 0.0
        %1678 = vmatpush.msra.mxu0 0.0
        %1679 = vmatpush.msra.mxu0 0.0
        %1680 = vmatpush.msra.mxu0 0.0
        %1681 = vmatpush.msra.mxu0 %v1658
        %1682 = vmatpush.msra.mxu0 %v1656
        %1683 = vmatmul.f32.gmra.mxu0 %v1662
        %v1684 = vpop.f32.mrf.mxu0
        %v1685 = vadd.f32 0.0, %v1684
        %1686 = vmatmul.f32.gmra.mxu0 %v1665
        %v1687 = vpop.f32.mrf.mxu0
        %v1688 = vadd.f32 0.0, %v1687
        %1689 = vdwg.mxu0
        %1692 = vrot.lane.b32.xlu0 %v671, 96
        %v1693 = vpop.permute.xlu0 %1692
        %1694 = vrot.lane.b32.xlu0 %v674, 96
        %v1695 = vpop.permute.xlu0 %1694
        %v1699 = vsel %vm841, %v1563, 0
        %v1702 = vsel %vm841, %v1578, 0
        %1704 = vmatpush.msra.mxu0 0.0
        %1705 = vmatpush.msra.mxu0 0.0
        %1706 = vmatpush.msra.mxu0 0.0
        %1707 = vmatpush.msra.mxu0 0.0
        %1708 = vmatpush.msra.mxu0 0.0
        %1709 = vmatpush.msra.mxu0 0.0
        %1710 = vmatpush.msra.mxu0 0.0
        %1711 = vmatpush.msra.mxu0 0.0
        %1712 = vmatpush.msra.mxu0 0.0
        %1713 = vmatpush.msra.mxu0 0.0
        %1714 = vmatpush.msra.mxu0 0.0
        %1715 = vmatpush.msra.mxu0 0.0
        %1716 = vmatpush.msra.mxu0 0.0
        %1717 = vmatpush.msra.mxu0 0.0
        %1718 = vmatpush.msra.mxu0 %v1695
        %1719 = vmatpush.msra.mxu0 %v1693
        %1720 = vmatmul.f32.gmra.mxu0 %v1699
        %v1721 = vpop.f32.mrf.mxu0
        %v1722 = vadd.f32 0.0, %v1721
        %1723 = vmatmul.f32.gmra.mxu0 %v1702
        %v1724 = vpop.f32.mrf.mxu0
        %v1725 = vadd.f32 0.0, %v1724
        %1726 = vdwg.mxu0
        %v1728 = vsel %vm692, %v1611, 0
        %v1731 = vsel %vm692, %v1614, 0
        %v1734 = vsel %vm692, %v1648, 0
        %v1737 = vsel %vm692, %v1651, 0
        %v1740 = vsel %vm692, %v1685, 0
        %v1743 = vsel %vm692, %v1688, 0
        %v1746 = vsel %vm692, %v1722, 0
        %v1749 = vsel %vm692, %v1725, 0
        %1751 = vmatpush.msra.mxu0 0.0
        %1752 = vmatpush.msra.mxu0 0.0
        %1753 = vmatpush.msra.mxu0 0.0
        %1754 = vmatpush.msra.mxu0 0.0
        %1755 = vmatpush.msra.mxu0 0.0
        %1756 = vmatpush.msra.mxu0 0.0
        %1757 = vmatpush.msra.mxu0 0.0
        %1758 = vmatpush.msra.mxu0 0.0
        %1759 = vmatpush.msra.mxu0 0.0
        %1760 = vmatpush.msra.mxu0 0.0
        %1761 = vmatpush.msra.mxu0 0.0
        %1762 = vmatpush.msra.mxu0 0.0
        %1763 = vmatpush.msra.mxu0 %v683
        %1764 = vmatpush.msra.mxu0 %v682
        %1765 = vmatpush.msra.mxu0 %v681
        %1766 = vmatpush.msra.mxu0 %v680
        %1767 = vmatmul.f32.gmra.mxu0 %v1728
        %v1768 = vpop.f32.mrf.mxu0
        %v1769 = vadd.f32 0.0, %v1768
        %1770 = vmatmul.f32.gmra.mxu0 %v1731
        %v1771 = vpop.f32.mrf.mxu0
        %v1772 = vadd.f32 0.0, %v1771
        %1773 = vmatmul.f32.gmra.mxu0 %v1734
        %v1774 = vpop.f32.mrf.mxu0
        %v1775 = vadd.f32 0.0, %v1774
        %1776 = vmatmul.f32.gmra.mxu0 %v1737
        %v1777 = vpop.f32.mrf.mxu0
        %v1778 = vadd.f32 0.0, %v1777
        %1779 = vmatmul.f32.gmra.mxu0 %v1740
        %v1780 = vpop.f32.mrf.mxu0
        %v1781 = vadd.f32 0.0, %v1780
        %1782 = vmatmul.f32.gmra.mxu0 %v1743
        %v1783 = vpop.f32.mrf.mxu0
        %v1784 = vadd.f32 0.0, %v1783
        %1785 = vmatmul.f32.gmra.mxu0 %v1746
        %v1786 = vpop.f32.mrf.mxu0
        %v1787 = vadd.f32 0.0, %v1786
        %1788 = vmatmul.f32.gmra.mxu0 %v1749
        %v1789 = vpop.f32.mrf.mxu0
        %v1790 = vadd.f32 0.0, %v1789
        %1791 = vdwg.mxu0
        %v1792 = vadd.f32 %v1215, %v1769
        %v1793 = vadd.f32 %v1216, %v1772
        %v1794 = vadd.f32 %v1217, %v1775
        %v1795 = vadd.f32 %v1218, %v1778
        %v1796 = vadd.f32 %v1219, %v1781
        %v1797 = vadd.f32 %v1220, %v1784
        %v1798 = vadd.f32 %v1221, %v1787
        %v1799 = vadd.f32 %v1222, %v1790
        %1800 = vrot.lane.b32.xlu0 %v571, 64
        %v1801 = vpop.permute.xlu0 %1800
        %1802 = vrot.lane.b32.xlu0 %v574, 64
        %v1803 = vpop.permute.xlu0 %1802
        %1804 = vrot.lane.b32.xlu0 %v612, 64
        %v1805 = vpop.permute.xlu0 %1804
        %1806 = vrot.lane.b32.xlu0 %v615, 64
        %v1807 = vpop.permute.xlu0 %1806
        %v1808 = vsel %vm692, %v1801, 0
        %v1810 = vsel %vm692, %v1803, 0
        %v1812 = vsel %vm692, %v1805, 0
        %v1814 = vsel %vm692, %v1807, 0
        %1816 = vmatpush.xpose.msra.mxu0 0.0
        %1817 = vmatpush.xpose.msra.mxu0 0.0
        %1818 = vmatpush.xpose.msra.mxu0 0.0
        %1819 = vmatpush.xpose.msra.mxu0 0.0
        %1820 = vmatpush.xpose.msra.mxu0 0.0
        %1821 = vmatpush.xpose.msra.mxu0 0.0
        %1822 = vmatpush.xpose.msra.mxu0 0.0
        %1823 = vmatpush.xpose.msra.mxu0 0.0
        %1824 = vmatpush.xpose.msra.mxu0 0.0
        %1825 = vmatpush.xpose.msra.mxu0 0.0
        %1826 = vmatpush.xpose.msra.mxu0 0.0
        %1827 = vmatpush.xpose.msra.mxu0 0.0
        %1828 = vmatpush.xpose.msra.mxu0 0.0
        %1829 = vmatpush.xpose.msra.mxu0 0.0
        %1830 = vmatpush.xpose.msra.mxu0 %v1814
        %1831 = vmatpush.xpose.msra.mxu0 %v1812
        %1832 = vmatmul.f32.gmra.mxu0 %v1808
        %v1833 = vpop.f32.mrf.mxu0
        %v1834 = vadd.f32 0.0, %v1833
        %1835 = vmatmul.f32.gmra.mxu0 %v1810
        %v1836 = vpop.f32.mrf.mxu0
        %v1837 = vadd.f32 0.0, %v1836
        %1838 = vdwg.mxu0
        %1839 = vrot.lane.b32.xlu0 %v577, 64
        %v1840 = vpop.permute.xlu0 %1839
        %1841 = vrot.lane.b32.xlu0 %v580, 64
        %v1842 = vpop.permute.xlu0 %1841
        %1843 = vrot.lane.b32.xlu0 %v618, 64
        %v1844 = vpop.permute.xlu0 %1843
        %1845 = vrot.lane.b32.xlu0 %v621, 64
        %v1846 = vpop.permute.xlu0 %1845
        %v1847 = vsel %vm692, %v1840, 0
        %v1849 = vsel %vm692, %v1842, 0
        %v1851 = vsel %vm692, %v1844, 0
        %v1853 = vsel %vm692, %v1846, 0
        %1855 = vmatpush.xpose.msra.mxu0 0.0
        %1856 = vmatpush.xpose.msra.mxu0 0.0
        %1857 = vmatpush.xpose.msra.mxu0 0.0
        %1858 = vmatpush.xpose.msra.mxu0 0.0
        %1859 = vmatpush.xpose.msra.mxu0 0.0
        %1860 = vmatpush.xpose.msra.mxu0 0.0
        %1861 = vmatpush.xpose.msra.mxu0 0.0
        %1862 = vmatpush.xpose.msra.mxu0 0.0
        %1863 = vmatpush.xpose.msra.mxu0 0.0
        %1864 = vmatpush.xpose.msra.mxu0 0.0
        %1865 = vmatpush.xpose.msra.mxu0 0.0
        %1866 = vmatpush.xpose.msra.mxu0 0.0
        %1867 = vmatpush.xpose.msra.mxu0 0.0
        %1868 = vmatpush.xpose.msra.mxu0 0.0
        %1869 = vmatpush.xpose.msra.mxu0 %v1853
        %1870 = vmatpush.xpose.msra.mxu0 %v1851
        %1871 = vmatmul.f32.gmra.mxu0 %v1847
        %v1872 = vpop.f32.mrf.mxu0
        %v1873 = vadd.f32 0.0, %v1872
        %1874 = vmatmul.f32.gmra.mxu0 %v1849
        %v1875 = vpop.f32.mrf.mxu0
        %v1876 = vadd.f32 0.0, %v1875
        %1877 = vdwg.mxu0
        %1878 = vrot.lane.b32.xlu0 %v583, 64
        %v1879 = vpop.permute.xlu0 %1878
        %1880 = vrot.lane.b32.xlu0 %v586, 64
        %v1881 = vpop.permute.xlu0 %1880
        %1882 = vrot.lane.b32.xlu0 %v624, 64
        %v1883 = vpop.permute.xlu0 %1882
        %1884 = vrot.lane.b32.xlu0 %v627, 64
        %v1885 = vpop.permute.xlu0 %1884
        %v1886 = vsel %vm692, %v1879, 0
        %v1888 = vsel %vm692, %v1881, 0
        %v1890 = vsel %vm692, %v1883, 0
        %v1892 = vsel %vm692, %v1885, 0
        %1894 = vmatpush.xpose.msra.mxu0 0.0
        %1895 = vmatpush.xpose.msra.mxu0 0.0
        %1896 = vmatpush.xpose.msra.mxu0 0.0
        %1897 = vmatpush.xpose.msra.mxu0 0.0
        %1898 = vmatpush.xpose.msra.mxu0 0.0
        %1899 = vmatpush.xpose.msra.mxu0 0.0
        %1900 = vmatpush.xpose.msra.mxu0 0.0
        %1901 = vmatpush.xpose.msra.mxu0 0.0
        %1902 = vmatpush.xpose.msra.mxu0 0.0
        %1903 = vmatpush.xpose.msra.mxu0 0.0
        %1904 = vmatpush.xpose.msra.mxu0 0.0
        %1905 = vmatpush.xpose.msra.mxu0 0.0
        %1906 = vmatpush.xpose.msra.mxu0 0.0
        %1907 = vmatpush.xpose.msra.mxu0 0.0
        %1908 = vmatpush.xpose.msra.mxu0 %v1892
        %1909 = vmatpush.xpose.msra.mxu0 %v1890
        %1910 = vmatmul.f32.gmra.mxu0 %v1886
        %v1911 = vpop.f32.mrf.mxu0
        %v1912 = vadd.f32 0.0, %v1911
        %1913 = vmatmul.f32.gmra.mxu0 %v1888
        %v1914 = vpop.f32.mrf.mxu0
        %v1915 = vadd.f32 0.0, %v1914
        %1916 = vdwg.mxu0
        %1917 = vrot.lane.b32.xlu0 %v589, 64
        %v1918 = vpop.permute.xlu0 %1917
        %1919 = vrot.lane.b32.xlu0 %v592, 64
        %v1920 = vpop.permute.xlu0 %1919
        %1921 = vrot.lane.b32.xlu0 %v630, 64
        %v1922 = vpop.permute.xlu0 %1921
        %1923 = vrot.lane.b32.xlu0 %v633, 64
        %v1924 = vpop.permute.xlu0 %1923
        %v1925 = vsel %vm692, %v1918, 0
        %v1927 = vsel %vm692, %v1920, 0
        %v1929 = vsel %vm692, %v1922, 0
        %v1931 = vsel %vm692, %v1924, 0
        %1933 = vmatpush.xpose.msra.mxu0 0.0
        %1934 = vmatpush.xpose.msra.mxu0 0.0
        %1935 = vmatpush.xpose.msra.mxu0 0.0
        %1936 = vmatpush.xpose.msra.mxu0 0.0
        %1937 = vmatpush.xpose.msra.mxu0 0.0
        %1938 = vmatpush.xpose.msra.mxu0 0.0
        %1939 = vmatpush.xpose.msra.mxu0 0.0
        %1940 = vmatpush.xpose.msra.mxu0 0.0
        %1941 = vmatpush.xpose.msra.mxu0 0.0
        %1942 = vmatpush.xpose.msra.mxu0 0.0
        %1943 = vmatpush.xpose.msra.mxu0 0.0
        %1944 = vmatpush.xpose.msra.mxu0 0.0
        %1945 = vmatpush.xpose.msra.mxu0 0.0
        %1946 = vmatpush.xpose.msra.mxu0 0.0
        %1947 = vmatpush.xpose.msra.mxu0 %v1931
        %1948 = vmatpush.xpose.msra.mxu0 %v1929
        %1949 = vmatmul.f32.gmra.mxu0 %v1925
        %v1950 = vpop.f32.mrf.mxu0
        %v1951 = vadd.f32 0.0, %v1950
        %1952 = vmatmul.f32.gmra.mxu0 %v1927
        %v1953 = vpop.f32.mrf.mxu0
        %v1954 = vadd.f32 0.0, %v1953
        %1955 = vdwg.mxu0
        %v1956 = vsel %vm440, -1e+09, %v1834
        %v1957 = vsel %vm441, -1e+09, %v1837
        %v1958 = vsel %vm442, -1e+09, %v1873
        %v1959 = vsel %vm443, -1e+09, %v1876
        %v1960 = vsel %vm444, -1e+09, %v1912
        %v1961 = vsel %vm445, -1e+09, %v1915
        %v1962 = vsel %vm446, -1e+09, %v1951
        %v1963 = vsel %vm447, -1e+09, %v1954
        %v1964 = vsel %vm841, %v1956, -inf
        %1965 = vmax.xlane.f32.xlu0 %v1964
        %v1966 = vpop.xlane.xlu0 %1965
        %v1967 = vsel %vm841, %v1957, -inf
        %1968 = vmax.xlane.f32.xlu0 %v1967
        %v1969 = vpop.xlane.xlu0 %1968
        %v1970 = vsel %vm841, %v1958, -inf
        %1971 = vmax.xlane.f32.xlu0 %v1970
        %v1972 = vpop.xlane.xlu0 %1971
        %v1973 = vsel %vm841, %v1959, -inf
        %1974 = vmax.xlane.f32.xlu0 %v1973
        %v1975 = vpop.xlane.xlu0 %1974
        %v1976 = vsel %vm841, %v1960, -inf
        %1977 = vmax.xlane.f32.xlu0 %v1976
        %v1978 = vpop.xlane.xlu0 %1977
        %v1979 = vsel %vm841, %v1961, -inf
        %1980 = vmax.xlane.f32.xlu0 %v1979
        %v1981 = vpop.xlane.xlu0 %1980
        %v1982 = vsel %vm841, %v1962, -inf
        %1983 = vmax.xlane.f32.xlu0 %v1982
        %v1984 = vpop.xlane.xlu0 %1983
        %v1985 = vsel %vm841, %v1963, -inf
        %1986 = vmax.xlane.f32.xlu0 %v1985
        %v1987 = vpop.xlane.xlu0 %1986
        %v1988 = vsub.f32 %v1956, %v1966
        %v1989 = vsub.f32 %v1957, %v1969
        %v1990 = vsub.f32 %v1958, %v1972
        %v1991 = vsub.f32 %v1959, %v1975
        %v1992 = vsub.f32 %v1960, %v1978
        %v1993 = vsub.f32 %v1961, %v1981
        %v1994 = vsub.f32 %v1962, %v1984
        %v1995 = vsub.f32 %v1963, %v1987
        %v1996 = vmul.f32 %v1988, 1.442695
        %v1997 = vpow.pop %v1996
        %v1998 = vmul.f32 %v1989, 1.442695
        %v1999 = vpow.pop %v1998
        %v2000 = vmul.f32 %v1990, 1.442695
        %v2001 = vpow.pop %v2000
        %v2002 = vmul.f32 %v1991, 1.442695
        %v2003 = vpow.pop %v2002
        %v2004 = vmul.f32 %v1992, 1.442695
        %v2005 = vpow.pop %v2004
        %v2006 = vmul.f32 %v1993, 1.442695
        %v2007 = vpow.pop %v2006
        %v2008 = vmul.f32 %v1994, 1.442695
        %v2009 = vpow.pop %v2008
        %v2010 = vmul.f32 %v1995, 1.442695
        %v2011 = vpow.pop %v2010
        %v2012 = vsel %vm841, %v1997, 0.0
        %2013 = vadd.xlane.f32.xlu0 %v2012
        %v2014 = vpop.xlane.xlu0 %2013
        %v2015 = vsel %vm841, %v1999, 0.0
        %2016 = vadd.xlane.f32.xlu0 %v2015
        %v2017 = vpop.xlane.xlu0 %2016
        %v2018 = vsel %vm841, %v2001, 0.0
        %2019 = vadd.xlane.f32.xlu0 %v2018
        %v2020 = vpop.xlane.xlu0 %2019
        %v2021 = vsel %vm841, %v2003, 0.0
        %2022 = vadd.xlane.f32.xlu0 %v2021
        %v2023 = vpop.xlane.xlu0 %2022
        %v2024 = vsel %vm841, %v2005, 0.0
        %2025 = vadd.xlane.f32.xlu0 %v2024
        %v2026 = vpop.xlane.xlu0 %2025
        %v2027 = vsel %vm841, %v2007, 0.0
        %2028 = vadd.xlane.f32.xlu0 %v2027
        %v2029 = vpop.xlane.xlu0 %2028
        %v2030 = vsel %vm841, %v2009, 0.0
        %2031 = vadd.xlane.f32.xlu0 %v2030
        %v2032 = vpop.xlane.xlu0 %2031
        %v2033 = vsel %vm841, %v2011, 0.0
        %2034 = vadd.xlane.f32.xlu0 %v2033
        %v2035 = vpop.xlane.xlu0 %2034
        %v2036 = vrcp.pop %v2014
        %v2037 = vmul.f32 %v2014, %v2036
        %v2038 = vsub.f32 1.0, %v2037
        %v2039 = vmul.f32 %v2036, %v2038
        %v2040 = vadd.f32 %v2036, %v2039
        %vm2041 = vweird.f32 %v2014
        %vm2042 = vweird.f32 %v2036
        %vm2043 = vmor %vm2041, %vm2042
        %v2044 = vsel %vm2043, %v2036, %v2040
        %v2045 = vand.u32 2147483647, %v2014
        %vm2046 = vcmp.eq.f32.partialorder %v2045, 8.507059e+37
        %v2047 = vand.u32 %v2014, 2147483648
        %v2048 = vor.u32 1.1754944e-38, %v2047
        %v2049 = vsel %vm2046, %v2048, %v2044
        %v2050 = vmul.f32 %v1997, %v2049
        %v2051 = vrcp.pop %v2017
        %v2052 = vmul.f32 %v2017, %v2051
        %v2053 = vsub.f32 1.0, %v2052
        %v2054 = vmul.f32 %v2051, %v2053
        %v2055 = vadd.f32 %v2051, %v2054
        %vm2056 = vweird.f32 %v2017
        %vm2057 = vweird.f32 %v2051
        %vm2058 = vmor %vm2056, %vm2057
        %v2059 = vsel %vm2058, %v2051, %v2055
        %v2060 = vand.u32 2147483647, %v2017
        %vm2061 = vcmp.eq.f32.partialorder %v2060, 8.507059e+37
        %v2062 = vand.u32 %v2017, 2147483648
        %v2063 = vor.u32 1.1754944e-38, %v2062
        %v2064 = vsel %vm2061, %v2063, %v2059
        %v2065 = vmul.f32 %v1999, %v2064
        %v2066 = vrcp.pop %v2020
        %v2067 = vmul.f32 %v2020, %v2066
        %v2068 = vsub.f32 1.0, %v2067
        %v2069 = vmul.f32 %v2066, %v2068
        %v2070 = vadd.f32 %v2066, %v2069
        %vm2071 = vweird.f32 %v2020
        %vm2072 = vweird.f32 %v2066
        %vm2073 = vmor %vm2071, %vm2072
        %v2074 = vsel %vm2073, %v2066, %v2070
        %v2075 = vand.u32 2147483647, %v2020
        %vm2076 = vcmp.eq.f32.partialorder %v2075, 8.507059e+37
        %v2077 = vand.u32 %v2020, 2147483648
        %v2078 = vor.u32 1.1754944e-38, %v2077
        %v2079 = vsel %vm2076, %v2078, %v2074
        %v2080 = vmul.f32 %v2001, %v2079
        %v2081 = vrcp.pop %v2023
        %v2082 = vmul.f32 %v2023, %v2081
        %v2083 = vsub.f32 1.0, %v2082
        %v2084 = vmul.f32 %v2081, %v2083
        %v2085 = vadd.f32 %v2081, %v2084
        %vm2086 = vweird.f32 %v2023
        %vm2087 = vweird.f32 %v2081
        %vm2088 = vmor %vm2086, %vm2087
        %v2089 = vsel %vm2088, %v2081, %v2085
        %v2090 = vand.u32 2147483647, %v2023
        %vm2091 = vcmp.eq.f32.partialorder %v2090, 8.507059e+37
        %v2092 = vand.u32 %v2023, 2147483648
        %v2093 = vor.u32 1.1754944e-38, %v2092
        %v2094 = vsel %vm2091, %v2093, %v2089
        %v2095 = vmul.f32 %v2003, %v2094
        %v2096 = vrcp.pop %v2026
        %v2097 = vmul.f32 %v2026, %v2096
        %v2098 = vsub.f32 1.0, %v2097
        %v2099 = vmul.f32 %v2096, %v2098
        %v2100 = vadd.f32 %v2096, %v2099
        %vm2101 = vweird.f32 %v2026
        %vm2102 = vweird.f32 %v2096
        %vm2103 = vmor %vm2101, %vm2102
        %v2104 = vsel %vm2103, %v2096, %v2100
        %v2105 = vand.u32 2147483647, %v2026
        %vm2106 = vcmp.eq.f32.partialorder %v2105, 8.507059e+37
        %v2107 = vand.u32 %v2026, 2147483648
        %v2108 = vor.u32 1.1754944e-38, %v2107
        %v2109 = vsel %vm2106, %v2108, %v2104
        %v2110 = vmul.f32 %v2005, %v2109
        %v2111 = vrcp.pop %v2029
        %v2112 = vmul.f32 %v2029, %v2111
        %v2113 = vsub.f32 1.0, %v2112
        %v2114 = vmul.f32 %v2111, %v2113
        %v2115 = vadd.f32 %v2111, %v2114
        %vm2116 = vweird.f32 %v2029
        %vm2117 = vweird.f32 %v2111
        %vm2118 = vmor %vm2116, %vm2117
        %v2119 = vsel %vm2118, %v2111, %v2115
        %v2120 = vand.u32 2147483647, %v2029
        %vm2121 = vcmp.eq.f32.partialorder %v2120, 8.507059e+37
        %v2122 = vand.u32 %v2029, 2147483648
        %v2123 = vor.u32 1.1754944e-38, %v2122
        %v2124 = vsel %vm2121, %v2123, %v2119
        %v2125 = vmul.f32 %v2007, %v2124
        %v2126 = vrcp.pop %v2032
        %v2127 = vmul.f32 %v2032, %v2126
        %v2128 = vsub.f32 1.0, %v2127
        %v2129 = vmul.f32 %v2126, %v2128
        %v2130 = vadd.f32 %v2126, %v2129
        %vm2131 = vweird.f32 %v2032
        %vm2132 = vweird.f32 %v2126
        %vm2133 = vmor %vm2131, %vm2132
        %v2134 = vsel %vm2133, %v2126, %v2130
        %v2135 = vand.u32 2147483647, %v2032
        %vm2136 = vcmp.eq.f32.partialorder %v2135, 8.507059e+37
        %v2137 = vand.u32 %v2032, 2147483648
        %v2138 = vor.u32 1.1754944e-38, %v2137
        %v2139 = vsel %vm2136, %v2138, %v2134
        %v2140 = vmul.f32 %v2009, %v2139
        %v2141 = vrcp.pop %v2035
        %v2142 = vmul.f32 %v2035, %v2141
        %v2143 = vsub.f32 1.0, %v2142
        %v2144 = vmul.f32 %v2141, %v2143
        %v2145 = vadd.f32 %v2141, %v2144
        %vm2146 = vweird.f32 %v2035
        %vm2147 = vweird.f32 %v2141
        %vm2148 = vmor %vm2146, %vm2147
        %v2149 = vsel %vm2148, %v2141, %v2145
        %v2150 = vand.u32 2147483647, %v2035
        %vm2151 = vcmp.eq.f32.partialorder %v2150, 8.507059e+37
        %v2152 = vand.u32 %v2035, 2147483648
        %v2153 = vor.u32 1.1754944e-38, %v2152
        %v2154 = vsel %vm2151, %v2153, %v2149
        %v2155 = vmul.f32 %v2011, %v2154
        %2156 = vrot.lane.b32.xlu0 %v653, 64
        %v2157 = vpop.permute.xlu0 %2156
        %2158 = vrot.lane.b32.xlu0 %v656, 64
        %v2159 = vpop.permute.xlu0 %2158
        %v2163 = vsel %vm841, %v2050, 0
        %v2166 = vsel %vm841, %v2065, 0
        %2168 = vmatpush.msra.mxu0 0.0
        %2169 = vmatpush.msra.mxu0 0.0
        %2170 = vmatpush.msra.mxu0 0.0
        %2171 = vmatpush.msra.mxu0 0.0
        %2172 = vmatpush.msra.mxu0 0.0
        %2173 = vmatpush.msra.mxu0 0.0
        %2174 = vmatpush.msra.mxu0 0.0
        %2175 = vmatpush.msra.mxu0 0.0
        %2176 = vmatpush.msra.mxu0 0.0
        %2177 = vmatpush.msra.mxu0 0.0
        %2178 = vmatpush.msra.mxu0 0.0
        %2179 = vmatpush.msra.mxu0 0.0
        %2180 = vmatpush.msra.mxu0 0.0
        %2181 = vmatpush.msra.mxu0 0.0
        %2182 = vmatpush.msra.mxu0 %v2159
        %2183 = vmatpush.msra.mxu0 %v2157
        %2184 = vmatmul.f32.gmra.mxu0 %v2163
        %v2185 = vpop.f32.mrf.mxu0
        %v2186 = vadd.f32 0.0, %v2185
        %2187 = vmatmul.f32.gmra.mxu0 %v2166
        %v2188 = vpop.f32.mrf.mxu0
        %v2189 = vadd.f32 0.0, %v2188
        %2190 = vdwg.mxu0
        %2191 = vrot.lane.b32.xlu0 %v659, 64
        %v2192 = vpop.permute.xlu0 %2191
        %2193 = vrot.lane.b32.xlu0 %v662, 64
        %v2194 = vpop.permute.xlu0 %2193
        %v2198 = vsel %vm841, %v2080, 0
        %v2201 = vsel %vm841, %v2095, 0
        %2203 = vmatpush.msra.mxu0 0.0
        %2204 = vmatpush.msra.mxu0 0.0
        %2205 = vmatpush.msra.mxu0 0.0
        %2206 = vmatpush.msra.mxu0 0.0
        %2207 = vmatpush.msra.mxu0 0.0
        %2208 = vmatpush.msra.mxu0 0.0
        %2209 = vmatpush.msra.mxu0 0.0
        %2210 = vmatpush.msra.mxu0 0.0
        %2211 = vmatpush.msra.mxu0 0.0
        %2212 = vmatpush.msra.mxu0 0.0
        %2213 = vmatpush.msra.mxu0 0.0
        %2214 = vmatpush.msra.mxu0 0.0
        %2215 = vmatpush.msra.mxu0 0.0
        %2216 = vmatpush.msra.mxu0 0.0
        %2217 = vmatpush.msra.mxu0 %v2194
        %2218 = vmatpush.msra.mxu0 %v2192
        %2219 = vmatmul.f32.gmra.mxu0 %v2198
        %v2220 = vpop.f32.mrf.mxu0
        %v2221 = vadd.f32 0.0, %v2220
        %2222 = vmatmul.f32.gmra.mxu0 %v2201
        %v2223 = vpop.f32.mrf.mxu0
        %v2224 = vadd.f32 0.0, %v2223
        %2225 = vdwg.mxu0
        %2226 = vrot.lane.b32.xlu0 %v665, 64
        %v2227 = vpop.permute.xlu0 %2226
        %2228 = vrot.lane.b32.xlu0 %v668, 64
        %v2229 = vpop.permute.xlu0 %2228
        %v2233 = vsel %vm841, %v2110, 0
        %v2236 = vsel %vm841, %v2125, 0
        %2238 = vmatpush.msra.mxu0 0.0
        %2239 = vmatpush.msra.mxu0 0.0
        %2240 = vmatpush.msra.mxu0 0.0
        %2241 = vmatpush.msra.mxu0 0.0
        %2242 = vmatpush.msra.mxu0 0.0
        %2243 = vmatpush.msra.mxu0 0.0
        %2244 = vmatpush.msra.mxu0 0.0
        %2245 = vmatpush.msra.mxu0 0.0
        %2246 = vmatpush.msra.mxu0 0.0
        %2247 = vmatpush.msra.mxu0 0.0
        %2248 = vmatpush.msra.mxu0 0.0
        %2249 = vmatpush.msra.mxu0 0.0
        %2250 = vmatpush.msra.mxu0 0.0
        %2251 = vmatpush.msra.mxu0 0.0
        %2252 = vmatpush.msra.mxu0 %v2229
        %2253 = vmatpush.msra.mxu0 %v2227
        %2254 = vmatmul.f32.gmra.mxu0 %v2233
        %v2255 = vpop.f32.mrf.mxu0
        %v2256 = vadd.f32 0.0, %v2255
        %2257 = vmatmul.f32.gmra.mxu0 %v2236
        %v2258 = vpop.f32.mrf.mxu0
        %v2259 = vadd.f32 0.0, %v2258
        %2260 = vdwg.mxu0
        %2261 = vrot.lane.b32.xlu0 %v671, 64
        %v2262 = vpop.permute.xlu0 %2261
        %2263 = vrot.lane.b32.xlu0 %v674, 64
        %v2264 = vpop.permute.xlu0 %2263
        %v2268 = vsel %vm841, %v2140, 0
        %v2271 = vsel %vm841, %v2155, 0
        %2273 = vmatpush.msra.mxu0 0.0
        %2274 = vmatpush.msra.mxu0 0.0
        %2275 = vmatpush.msra.mxu0 0.0
        %2276 = vmatpush.msra.mxu0 0.0
        %2277 = vmatpush.msra.mxu0 0.0
        %2278 = vmatpush.msra.mxu0 0.0
        %2279 = vmatpush.msra.mxu0 0.0
        %2280 = vmatpush.msra.mxu0 0.0
        %2281 = vmatpush.msra.mxu0 0.0
        %2282 = vmatpush.msra.mxu0 0.0
        %2283 = vmatpush.msra.mxu0 0.0
        %2284 = vmatpush.msra.mxu0 0.0
        %2285 = vmatpush.msra.mxu0 0.0
        %2286 = vmatpush.msra.mxu0 0.0
        %2287 = vmatpush.msra.mxu0 %v2264
        %2288 = vmatpush.msra.mxu0 %v2262
        %2289 = vmatmul.f32.gmra.mxu0 %v2268
        %v2290 = vpop.f32.mrf.mxu0
        %v2291 = vadd.f32 0.0, %v2290
        %2292 = vmatmul.f32.gmra.mxu0 %v2271
        %v2293 = vpop.f32.mrf.mxu0
        %v2294 = vadd.f32 0.0, %v2293
        %2295 = vdwg.mxu0
        %v2297 = vsel %vm692, %v2186, 0
        %v2300 = vsel %vm692, %v2189, 0
        %v2303 = vsel %vm692, %v2221, 0
        %v2306 = vsel %vm692, %v2224, 0
        %v2309 = vsel %vm692, %v2256, 0
        %v2312 = vsel %vm692, %v2259, 0
        %v2315 = vsel %vm692, %v2291, 0
        %v2318 = vsel %vm692, %v2294, 0
        %2320 = vmatpush.msra.mxu0 0.0
        %2321 = vmatpush.msra.mxu0 0.0
        %2322 = vmatpush.msra.mxu0 0.0
        %2323 = vmatpush.msra.mxu0 0.0
        %2324 = vmatpush.msra.mxu0 0.0
        %2325 = vmatpush.msra.mxu0 0.0
        %2326 = vmatpush.msra.mxu0 0.0
        %2327 = vmatpush.msra.mxu0 0.0
        %2328 = vmatpush.msra.mxu0 0.0
        %2329 = vmatpush.msra.mxu0 0.0
        %2330 = vmatpush.msra.mxu0 0.0
        %2331 = vmatpush.msra.mxu0 0.0
        %2332 = vmatpush.msra.mxu0 %v687
        %2333 = vmatpush.msra.mxu0 %v686
        %2334 = vmatpush.msra.mxu0 %v685
        %2335 = vmatpush.msra.mxu0 %v684
        %2336 = vmatmul.f32.gmra.mxu0 %v2297
        %v2337 = vpop.f32.mrf.mxu0
        %v2338 = vadd.f32 0.0, %v2337
        %2339 = vmatmul.f32.gmra.mxu0 %v2300
        %v2340 = vpop.f32.mrf.mxu0
        %v2341 = vadd.f32 0.0, %v2340
        %2342 = vmatmul.f32.gmra.mxu0 %v2303
        %v2343 = vpop.f32.mrf.mxu0
        %v2344 = vadd.f32 0.0, %v2343
        %2345 = vmatmul.f32.gmra.mxu0 %v2306
        %v2346 = vpop.f32.mrf.mxu0
        %v2347 = vadd.f32 0.0, %v2346
        %2348 = vmatmul.f32.gmra.mxu0 %v2309
        %v2349 = vpop.f32.mrf.mxu0
        %v2350 = vadd.f32 0.0, %v2349
        %2351 = vmatmul.f32.gmra.mxu0 %v2312
        %v2352 = vpop.f32.mrf.mxu0
        %v2353 = vadd.f32 0.0, %v2352
        %2354 = vmatmul.f32.gmra.mxu0 %v2315
        %v2355 = vpop.f32.mrf.mxu0
        %v2356 = vadd.f32 0.0, %v2355
        %2357 = vmatmul.f32.gmra.mxu0 %v2318
        %v2358 = vpop.f32.mrf.mxu0
        %v2359 = vadd.f32 0.0, %v2358
        %2360 = vdwg.mxu0
        %v2361 = vadd.f32 %v1792, %v2338
        %v2362 = vadd.f32 %v1793, %v2341
        %v2363 = vadd.f32 %v1794, %v2344
        %v2364 = vadd.f32 %v1795, %v2347
        %v2365 = vadd.f32 %v1796, %v2350
        %v2366 = vadd.f32 %v1797, %v2353
        %v2367 = vadd.f32 %v1798, %v2356
        %v2368 = vadd.f32 %v1799, %v2359
        %2369 = vrot.lane.b32.xlu0 %v571, 32
        %v2370 = vpop.permute.xlu0 %2369
        %2371 = vrot.lane.b32.xlu0 %v574, 32
        %v2372 = vpop.permute.xlu0 %2371
        %2373 = vrot.lane.b32.xlu0 %v612, 32
        %v2374 = vpop.permute.xlu0 %2373
        %2375 = vrot.lane.b32.xlu0 %v615, 32
        %v2376 = vpop.permute.xlu0 %2375
        %v2377 = vsel %vm692, %v2370, 0
        %v2379 = vsel %vm692, %v2372, 0
        %v2381 = vsel %vm692, %v2374, 0
        %v2383 = vsel %vm692, %v2376, 0
        %2385 = vmatpush.xpose.msra.mxu0 0.0
        %2386 = vmatpush.xpose.msra.mxu0 0.0
        %2387 = vmatpush.xpose.msra.mxu0 0.0
        %2388 = vmatpush.xpose.msra.mxu0 0.0
        %2389 = vmatpush.xpose.msra.mxu0 0.0
        %2390 = vmatpush.xpose.msra.mxu0 0.0
        %2391 = vmatpush.xpose.msra.mxu0 0.0
        %2392 = vmatpush.xpose.msra.mxu0 0.0
        %2393 = vmatpush.xpose.msra.mxu0 0.0
        %2394 = vmatpush.xpose.msra.mxu0 0.0
        %2395 = vmatpush.xpose.msra.mxu0 0.0
        %2396 = vmatpush.xpose.msra.mxu0 0.0
        %2397 = vmatpush.xpose.msra.mxu0 0.0
        %2398 = vmatpush.xpose.msra.mxu0 0.0
        %2399 = vmatpush.xpose.msra.mxu0 %v2383
        %2400 = vmatpush.xpose.msra.mxu0 %v2381
        %2401 = vmatmul.f32.gmra.mxu0 %v2377
        %v2402 = vpop.f32.mrf.mxu0
        %v2403 = vadd.f32 0.0, %v2402
        %2404 = vmatmul.f32.gmra.mxu0 %v2379
        %v2405 = vpop.f32.mrf.mxu0
        %v2406 = vadd.f32 0.0, %v2405
        %2407 = vdwg.mxu0
        %2408 = vrot.lane.b32.xlu0 %v577, 32
        %v2409 = vpop.permute.xlu0 %2408
        %2410 = vrot.lane.b32.xlu0 %v580, 32
        %v2411 = vpop.permute.xlu0 %2410
        %2412 = vrot.lane.b32.xlu0 %v618, 32
        %v2413 = vpop.permute.xlu0 %2412
        %2414 = vrot.lane.b32.xlu0 %v621, 32
        %v2415 = vpop.permute.xlu0 %2414
        %v2416 = vsel %vm692, %v2409, 0
        %v2418 = vsel %vm692, %v2411, 0
        %v2420 = vsel %vm692, %v2413, 0
        %v2422 = vsel %vm692, %v2415, 0
        %2424 = vmatpush.xpose.msra.mxu0 0.0
        %2425 = vmatpush.xpose.msra.mxu0 0.0
        %2426 = vmatpush.xpose.msra.mxu0 0.0
        %2427 = vmatpush.xpose.msra.mxu0 0.0
        %2428 = vmatpush.xpose.msra.mxu0 0.0
        %2429 = vmatpush.xpose.msra.mxu0 0.0
        %2430 = vmatpush.xpose.msra.mxu0 0.0
        %2431 = vmatpush.xpose.msra.mxu0 0.0
        %2432 = vmatpush.xpose.msra.mxu0 0.0
        %2433 = vmatpush.xpose.msra.mxu0 0.0
        %2434 = vmatpush.xpose.msra.mxu0 0.0
        %2435 = vmatpush.xpose.msra.mxu0 0.0
        %2436 = vmatpush.xpose.msra.mxu0 0.0
        %2437 = vmatpush.xpose.msra.mxu0 0.0
        %2438 = vmatpush.xpose.msra.mxu0 %v2422
        %2439 = vmatpush.xpose.msra.mxu0 %v2420
        %2440 = vmatmul.f32.gmra.mxu0 %v2416
        %v2441 = vpop.f32.mrf.mxu0
        %v2442 = vadd.f32 0.0, %v2441
        %2443 = vmatmul.f32.gmra.mxu0 %v2418
        %v2444 = vpop.f32.mrf.mxu0
        %v2445 = vadd.f32 0.0, %v2444
        %2446 = vdwg.mxu0
        %2447 = vrot.lane.b32.xlu0 %v583, 32
        %v2448 = vpop.permute.xlu0 %2447
        %2449 = vrot.lane.b32.xlu0 %v586, 32
        %v2450 = vpop.permute.xlu0 %2449
        %2451 = vrot.lane.b32.xlu0 %v624, 32
        %v2452 = vpop.permute.xlu0 %2451
        %2453 = vrot.lane.b32.xlu0 %v627, 32
        %v2454 = vpop.permute.xlu0 %2453
        %v2455 = vsel %vm692, %v2448, 0
        %v2457 = vsel %vm692, %v2450, 0
        %v2459 = vsel %vm692, %v2452, 0
        %v2461 = vsel %vm692, %v2454, 0
        %2463 = vmatpush.xpose.msra.mxu0 0.0
        %2464 = vmatpush.xpose.msra.mxu0 0.0
        %2465 = vmatpush.xpose.msra.mxu0 0.0
        %2466 = vmatpush.xpose.msra.mxu0 0.0
        %2467 = vmatpush.xpose.msra.mxu0 0.0
        %2468 = vmatpush.xpose.msra.mxu0 0.0
        %2469 = vmatpush.xpose.msra.mxu0 0.0
        %2470 = vmatpush.xpose.msra.mxu0 0.0
        %2471 = vmatpush.xpose.msra.mxu0 0.0
        %2472 = vmatpush.xpose.msra.mxu0 0.0
        %2473 = vmatpush.xpose.msra.mxu0 0.0
        %2474 = vmatpush.xpose.msra.mxu0 0.0
        %2475 = vmatpush.xpose.msra.mxu0 0.0
        %2476 = vmatpush.xpose.msra.mxu0 0.0
        %2477 = vmatpush.xpose.msra.mxu0 %v2461
        %2478 = vmatpush.xpose.msra.mxu0 %v2459
        %2479 = vmatmul.f32.gmra.mxu0 %v2455
        %v2480 = vpop.f32.mrf.mxu0
        %v2481 = vadd.f32 0.0, %v2480
        %2482 = vmatmul.f32.gmra.mxu0 %v2457
        %v2483 = vpop.f32.mrf.mxu0
        %v2484 = vadd.f32 0.0, %v2483
        %2485 = vdwg.mxu0
        %2486 = vrot.lane.b32.xlu0 %v589, 32
        %v2487 = vpop.permute.xlu0 %2486
        %2488 = vrot.lane.b32.xlu0 %v592, 32
        %v2489 = vpop.permute.xlu0 %2488
        %2490 = vrot.lane.b32.xlu0 %v630, 32
        %v2491 = vpop.permute.xlu0 %2490
        %2492 = vrot.lane.b32.xlu0 %v633, 32
        %v2493 = vpop.permute.xlu0 %2492
        %v2494 = vsel %vm692, %v2487, 0
        %v2496 = vsel %vm692, %v2489, 0
        %v2498 = vsel %vm692, %v2491, 0
        %v2500 = vsel %vm692, %v2493, 0
        %2502 = vmatpush.xpose.msra.mxu0 0.0
        %2503 = vmatpush.xpose.msra.mxu0 0.0
        %2504 = vmatpush.xpose.msra.mxu0 0.0
        %2505 = vmatpush.xpose.msra.mxu0 0.0
        %2506 = vmatpush.xpose.msra.mxu0 0.0
        %2507 = vmatpush.xpose.msra.mxu0 0.0
        %2508 = vmatpush.xpose.msra.mxu0 0.0
        %2509 = vmatpush.xpose.msra.mxu0 0.0
        %2510 = vmatpush.xpose.msra.mxu0 0.0
        %2511 = vmatpush.xpose.msra.mxu0 0.0
        %2512 = vmatpush.xpose.msra.mxu0 0.0
        %2513 = vmatpush.xpose.msra.mxu0 0.0
        %2514 = vmatpush.xpose.msra.mxu0 0.0
        %2515 = vmatpush.xpose.msra.mxu0 0.0
        %2516 = vmatpush.xpose.msra.mxu0 %v2500
        %2517 = vmatpush.xpose.msra.mxu0 %v2498
        %2518 = vmatmul.f32.gmra.mxu0 %v2494
        %v2519 = vpop.f32.mrf.mxu0
        %v2520 = vadd.f32 0.0, %v2519
        %2521 = vmatmul.f32.gmra.mxu0 %v2496
        %v2522 = vpop.f32.mrf.mxu0
        %v2523 = vadd.f32 0.0, %v2522
        %2524 = vdwg.mxu0
        %v2525 = vsel %vm440, -1e+09, %v2403
        %v2526 = vsel %vm441, -1e+09, %v2406
        %v2527 = vsel %vm442, -1e+09, %v2442
        %v2528 = vsel %vm443, -1e+09, %v2445
        %v2529 = vsel %vm444, -1e+09, %v2481
        %v2530 = vsel %vm445, -1e+09, %v2484
        %v2531 = vsel %vm446, -1e+09, %v2520
        %v2532 = vsel %vm447, -1e+09, %v2523
        %v2533 = vsel %vm841, %v2525, -inf
        %2534 = vmax.xlane.f32.xlu0 %v2533
        %v2535 = vpop.xlane.xlu0 %2534
        %v2536 = vsel %vm841, %v2526, -inf
        %2537 = vmax.xlane.f32.xlu0 %v2536
        %v2538 = vpop.xlane.xlu0 %2537
        %v2539 = vsel %vm841, %v2527, -inf
        %2540 = vmax.xlane.f32.xlu0 %v2539
        %v2541 = vpop.xlane.xlu0 %2540
        %v2542 = vsel %vm841, %v2528, -inf
        %2543 = vmax.xlane.f32.xlu0 %v2542
        %v2544 = vpop.xlane.xlu0 %2543
        %v2545 = vsel %vm841, %v2529, -inf
        %2546 = vmax.xlane.f32.xlu0 %v2545
        %v2547 = vpop.xlane.xlu0 %2546
        %v2548 = vsel %vm841, %v2530, -inf
        %2549 = vmax.xlane.f32.xlu0 %v2548
        %v2550 = vpop.xlane.xlu0 %2549
        %v2551 = vsel %vm841, %v2531, -inf
        %2552 = vmax.xlane.f32.xlu0 %v2551
        %v2553 = vpop.xlane.xlu0 %2552
        %v2554 = vsel %vm841, %v2532, -inf
        %2555 = vmax.xlane.f32.xlu0 %v2554
        %v2556 = vpop.xlane.xlu0 %2555
        %v2557 = vsub.f32 %v2525, %v2535
        %v2558 = vsub.f32 %v2526, %v2538
        %v2559 = vsub.f32 %v2527, %v2541
        %v2560 = vsub.f32 %v2528, %v2544
        %v2561 = vsub.f32 %v2529, %v2547
        %v2562 = vsub.f32 %v2530, %v2550
        %v2563 = vsub.f32 %v2531, %v2553
        %v2564 = vsub.f32 %v2532, %v2556
        %v2565 = vmul.f32 %v2557, 1.442695
        %v2566 = vpow.pop %v2565
        %v2567 = vmul.f32 %v2558, 1.442695
        %v2568 = vpow.pop %v2567
        %v2569 = vmul.f32 %v2559, 1.442695
        %v2570 = vpow.pop %v2569
        %v2571 = vmul.f32 %v2560, 1.442695
        %v2572 = vpow.pop %v2571
        %v2573 = vmul.f32 %v2561, 1.442695
        %v2574 = vpow.pop %v2573
        %v2575 = vmul.f32 %v2562, 1.442695
        %v2576 = vpow.pop %v2575
        %v2577 = vmul.f32 %v2563, 1.442695
        %v2578 = vpow.pop %v2577
        %v2579 = vmul.f32 %v2564, 1.442695
        %v2580 = vpow.pop %v2579
        %v2581 = vsel %vm841, %v2566, 0.0
        %2582 = vadd.xlane.f32.xlu0 %v2581
        %v2583 = vpop.xlane.xlu0 %2582
        %v2584 = vsel %vm841, %v2568, 0.0
        %2585 = vadd.xlane.f32.xlu0 %v2584
        %v2586 = vpop.xlane.xlu0 %2585
        %v2587 = vsel %vm841, %v2570, 0.0
        %2588 = vadd.xlane.f32.xlu0 %v2587
        %v2589 = vpop.xlane.xlu0 %2588
        %v2590 = vsel %vm841, %v2572, 0.0
        %2591 = vadd.xlane.f32.xlu0 %v2590
        %v2592 = vpop.xlane.xlu0 %2591
        %v2593 = vsel %vm841, %v2574, 0.0
        %2594 = vadd.xlane.f32.xlu0 %v2593
        %v2595 = vpop.xlane.xlu0 %2594
        %v2596 = vsel %vm841, %v2576, 0.0
        %2597 = vadd.xlane.f32.xlu0 %v2596
        %v2598 = vpop.xlane.xlu0 %2597
        %v2599 = vsel %vm841, %v2578, 0.0
        %2600 = vadd.xlane.f32.xlu0 %v2599
        %v2601 = vpop.xlane.xlu0 %2600
        %v2602 = vsel %vm841, %v2580, 0.0
        %2603 = vadd.xlane.f32.xlu0 %v2602
        %v2604 = vpop.xlane.xlu0 %2603
        %v2605 = vrcp.pop %v2583
        %v2606 = vmul.f32 %v2583, %v2605
        %v2607 = vsub.f32 1.0, %v2606
        %v2608 = vmul.f32 %v2605, %v2607
        %v2609 = vadd.f32 %v2605, %v2608
        %vm2610 = vweird.f32 %v2583
        %vm2611 = vweird.f32 %v2605
        %vm2612 = vmor %vm2610, %vm2611
        %v2613 = vsel %vm2612, %v2605, %v2609
        %v2614 = vand.u32 2147483647, %v2583
        %vm2615 = vcmp.eq.f32.partialorder %v2614, 8.507059e+37
        %v2616 = vand.u32 %v2583, 2147483648
        %v2617 = vor.u32 1.1754944e-38, %v2616
        %v2618 = vsel %vm2615, %v2617, %v2613
        %v2619 = vmul.f32 %v2566, %v2618
        %v2620 = vrcp.pop %v2586
        %v2621 = vmul.f32 %v2586, %v2620
        %v2622 = vsub.f32 1.0, %v2621
        %v2623 = vmul.f32 %v2620, %v2622
        %v2624 = vadd.f32 %v2620, %v2623
        %vm2625 = vweird.f32 %v2586
        %vm2626 = vweird.f32 %v2620
        %vm2627 = vmor %vm2625, %vm2626
        %v2628 = vsel %vm2627, %v2620, %v2624
        %v2629 = vand.u32 2147483647, %v2586
        %vm2630 = vcmp.eq.f32.partialorder %v2629, 8.507059e+37
        %v2631 = vand.u32 %v2586, 2147483648
        %v2632 = vor.u32 1.1754944e-38, %v2631
        %v2633 = vsel %vm2630, %v2632, %v2628
        %v2634 = vmul.f32 %v2568, %v2633
        %v2635 = vrcp.pop %v2589
        %v2636 = vmul.f32 %v2589, %v2635
        %v2637 = vsub.f32 1.0, %v2636
        %v2638 = vmul.f32 %v2635, %v2637
        %v2639 = vadd.f32 %v2635, %v2638
        %vm2640 = vweird.f32 %v2589
        %vm2641 = vweird.f32 %v2635
        %vm2642 = vmor %vm2640, %vm2641
        %v2643 = vsel %vm2642, %v2635, %v2639
        %v2644 = vand.u32 2147483647, %v2589
        %vm2645 = vcmp.eq.f32.partialorder %v2644, 8.507059e+37
        %v2646 = vand.u32 %v2589, 2147483648
        %v2647 = vor.u32 1.1754944e-38, %v2646
        %v2648 = vsel %vm2645, %v2647, %v2643
        %v2649 = vmul.f32 %v2570, %v2648
        %v2650 = vrcp.pop %v2592
        %v2651 = vmul.f32 %v2592, %v2650
        %v2652 = vsub.f32 1.0, %v2651
        %v2653 = vmul.f32 %v2650, %v2652
        %v2654 = vadd.f32 %v2650, %v2653
        %vm2655 = vweird.f32 %v2592
        %vm2656 = vweird.f32 %v2650
        %vm2657 = vmor %vm2655, %vm2656
        %v2658 = vsel %vm2657, %v2650, %v2654
        %v2659 = vand.u32 2147483647, %v2592
        %vm2660 = vcmp.eq.f32.partialorder %v2659, 8.507059e+37
        %v2661 = vand.u32 %v2592, 2147483648
        %v2662 = vor.u32 1.1754944e-38, %v2661
        %v2663 = vsel %vm2660, %v2662, %v2658
        %v2664 = vmul.f32 %v2572, %v2663
        %v2665 = vrcp.pop %v2595
        %v2666 = vmul.f32 %v2595, %v2665
        %v2667 = vsub.f32 1.0, %v2666
        %v2668 = vmul.f32 %v2665, %v2667
        %v2669 = vadd.f32 %v2665, %v2668
        %vm2670 = vweird.f32 %v2595
        %vm2671 = vweird.f32 %v2665
        %vm2672 = vmor %vm2670, %vm2671
        %v2673 = vsel %vm2672, %v2665, %v2669
        %v2674 = vand.u32 2147483647, %v2595
        %vm2675 = vcmp.eq.f32.partialorder %v2674, 8.507059e+37
        %v2676 = vand.u32 %v2595, 2147483648
        %v2677 = vor.u32 1.1754944e-38, %v2676
        %v2678 = vsel %vm2675, %v2677, %v2673
        %v2679 = vmul.f32 %v2574, %v2678
        %v2680 = vrcp.pop %v2598
        %v2681 = vmul.f32 %v2598, %v2680
        %v2682 = vsub.f32 1.0, %v2681
        %v2683 = vmul.f32 %v2680, %v2682
        %v2684 = vadd.f32 %v2680, %v2683
        %vm2685 = vweird.f32 %v2598
        %vm2686 = vweird.f32 %v2680
        %vm2687 = vmor %vm2685, %vm2686
        %v2688 = vsel %vm2687, %v2680, %v2684
        %v2689 = vand.u32 2147483647, %v2598
        %vm2690 = vcmp.eq.f32.partialorder %v2689, 8.507059e+37
        %v2691 = vand.u32 %v2598, 2147483648
        %v2692 = vor.u32 1.1754944e-38, %v2691
        %v2693 = vsel %vm2690, %v2692, %v2688
        %v2694 = vmul.f32 %v2576, %v2693
        %v2695 = vrcp.pop %v2601
        %v2696 = vmul.f32 %v2601, %v2695
        %v2697 = vsub.f32 1.0, %v2696
        %v2698 = vmul.f32 %v2695, %v2697
        %v2699 = vadd.f32 %v2695, %v2698
        %vm2700 = vweird.f32 %v2601
        %vm2701 = vweird.f32 %v2695
        %vm2702 = vmor %vm2700, %vm2701
        %v2703 = vsel %vm2702, %v2695, %v2699
        %v2704 = vand.u32 2147483647, %v2601
        %vm2705 = vcmp.eq.f32.partialorder %v2704, 8.507059e+37
        %v2706 = vand.u32 %v2601, 2147483648
        %v2707 = vor.u32 1.1754944e-38, %v2706
        %v2708 = vsel %vm2705, %v2707, %v2703
        %v2709 = vmul.f32 %v2578, %v2708
        %v2710 = vrcp.pop %v2604
        %v2711 = vmul.f32 %v2604, %v2710
        %v2712 = vsub.f32 1.0, %v2711
        %v2713 = vmul.f32 %v2710, %v2712
        %v2714 = vadd.f32 %v2710, %v2713
        %vm2715 = vweird.f32 %v2604
        %vm2716 = vweird.f32 %v2710
        %vm2717 = vmor %vm2715, %vm2716
        %v2718 = vsel %vm2717, %v2710, %v2714
        %v2719 = vand.u32 2147483647, %v2604
        %vm2720 = vcmp.eq.f32.partialorder %v2719, 8.507059e+37
        %v2721 = vand.u32 %v2604, 2147483648
        %v2722 = vor.u32 1.1754944e-38, %v2721
        %v2723 = vsel %vm2720, %v2722, %v2718
        %v2724 = vmul.f32 %v2580, %v2723
        %2725 = vrot.lane.b32.xlu0 %v653, 32
        %v2726 = vpop.permute.xlu0 %2725
        %2727 = vrot.lane.b32.xlu0 %v656, 32
        %v2728 = vpop.permute.xlu0 %2727
        %v2732 = vsel %vm841, %v2619, 0
        %v2735 = vsel %vm841, %v2634, 0
        %2737 = vmatpush.msra.mxu0 0.0
        %2738 = vmatpush.msra.mxu0 0.0
        %2739 = vmatpush.msra.mxu0 0.0
        %2740 = vmatpush.msra.mxu0 0.0
        %2741 = vmatpush.msra.mxu0 0.0
        %2742 = vmatpush.msra.mxu0 0.0
        %2743 = vmatpush.msra.mxu0 0.0
        %2744 = vmatpush.msra.mxu0 0.0
        %2745 = vmatpush.msra.mxu0 0.0
        %2746 = vmatpush.msra.mxu0 0.0
        %2747 = vmatpush.msra.mxu0 0.0
        %2748 = vmatpush.msra.mxu0 0.0
        %2749 = vmatpush.msra.mxu0 0.0
        %2750 = vmatpush.msra.mxu0 0.0
        %2751 = vmatpush.msra.mxu0 %v2728
        %2752 = vmatpush.msra.mxu0 %v2726
        %2753 = vmatmul.f32.gmra.mxu0 %v2732
        %v2754 = vpop.f32.mrf.mxu0
        %v2755 = vadd.f32 0.0, %v2754
        %2756 = vmatmul.f32.gmra.mxu0 %v2735
        %v2757 = vpop.f32.mrf.mxu0
        %v2758 = vadd.f32 0.0, %v2757
        %2759 = vdwg.mxu0
        %2760 = vrot.lane.b32.xlu0 %v659, 32
        %v2761 = vpop.permute.xlu0 %2760
        %2762 = vrot.lane.b32.xlu0 %v662, 32
        %v2763 = vpop.permute.xlu0 %2762
        %v2767 = vsel %vm841, %v2649, 0
        %v2770 = vsel %vm841, %v2664, 0
        %2772 = vmatpush.msra.mxu0 0.0
        %2773 = vmatpush.msra.mxu0 0.0
        %2774 = vmatpush.msra.mxu0 0.0
        %2775 = vmatpush.msra.mxu0 0.0
        %2776 = vmatpush.msra.mxu0 0.0
        %2777 = vmatpush.msra.mxu0 0.0
        %2778 = vmatpush.msra.mxu0 0.0
        %2779 = vmatpush.msra.mxu0 0.0
        %2780 = vmatpush.msra.mxu0 0.0
        %2781 = vmatpush.msra.mxu0 0.0
        %2782 = vmatpush.msra.mxu0 0.0
        %2783 = vmatpush.msra.mxu0 0.0
        %2784 = vmatpush.msra.mxu0 0.0
        %2785 = vmatpush.msra.mxu0 0.0
        %2786 = vmatpush.msra.mxu0 %v2763
        %2787 = vmatpush.msra.mxu0 %v2761
        %2788 = vmatmul.f32.gmra.mxu0 %v2767
        %v2789 = vpop.f32.mrf.mxu0
        %v2790 = vadd.f32 0.0, %v2789
        %2791 = vmatmul.f32.gmra.mxu0 %v2770
        %v2792 = vpop.f32.mrf.mxu0
        %v2793 = vadd.f32 0.0, %v2792
        %2794 = vdwg.mxu0
        %2795 = vrot.lane.b32.xlu0 %v665, 32
        %v2796 = vpop.permute.xlu0 %2795
        %2797 = vrot.lane.b32.xlu0 %v668, 32
        %v2798 = vpop.permute.xlu0 %2797
        %v2802 = vsel %vm841, %v2679, 0
        %v2805 = vsel %vm841, %v2694, 0
        %2807 = vmatpush.msra.mxu0 0.0
        %2808 = vmatpush.msra.mxu0 0.0
        %2809 = vmatpush.msra.mxu0 0.0
        %2810 = vmatpush.msra.mxu0 0.0
        %2811 = vmatpush.msra.mxu0 0.0
        %2812 = vmatpush.msra.mxu0 0.0
        %2813 = vmatpush.msra.mxu0 0.0
        %2814 = vmatpush.msra.mxu0 0.0
        %2815 = vmatpush.msra.mxu0 0.0
        %2816 = vmatpush.msra.mxu0 0.0
        %2817 = vmatpush.msra.mxu0 0.0
        %2818 = vmatpush.msra.mxu0 0.0
        %2819 = vmatpush.msra.mxu0 0.0
        %2820 = vmatpush.msra.mxu0 0.0
        %2821 = vmatpush.msra.mxu0 %v2798
        %2822 = vmatpush.msra.mxu0 %v2796
        %2823 = vmatmul.f32.gmra.mxu0 %v2802
        %v2824 = vpop.f32.mrf.mxu0
        %v2825 = vadd.f32 0.0, %v2824
        %2826 = vmatmul.f32.gmra.mxu0 %v2805
        %v2827 = vpop.f32.mrf.mxu0
        %v2828 = vadd.f32 0.0, %v2827
        %2829 = vdwg.mxu0
        %2830 = vrot.lane.b32.xlu0 %v671, 32
        %v2831 = vpop.permute.xlu0 %2830
        %2832 = vrot.lane.b32.xlu0 %v674, 32
        %v2833 = vpop.permute.xlu0 %2832
        %v2837 = vsel %vm841, %v2709, 0
        %v2840 = vsel %vm841, %v2724, 0
        %2842 = vmatpush.msra.mxu0 0.0
        %2843 = vmatpush.msra.mxu0 0.0
        %2844 = vmatpush.msra.mxu0 0.0
        %2845 = vmatpush.msra.mxu0 0.0
        %2846 = vmatpush.msra.mxu0 0.0
        %2847 = vmatpush.msra.mxu0 0.0
        %2848 = vmatpush.msra.mxu0 0.0
        %2849 = vmatpush.msra.mxu0 0.0
        %2850 = vmatpush.msra.mxu0 0.0
        %2851 = vmatpush.msra.mxu0 0.0
        %2852 = vmatpush.msra.mxu0 0.0
        %2853 = vmatpush.msra.mxu0 0.0
        %2854 = vmatpush.msra.mxu0 0.0
        %2855 = vmatpush.msra.mxu0 0.0
        %2856 = vmatpush.msra.mxu0 %v2833
        %2857 = vmatpush.msra.mxu0 %v2831
        %2858 = vmatmul.f32.gmra.mxu0 %v2837
        %v2859 = vpop.f32.mrf.mxu0
        %v2860 = vadd.f32 0.0, %v2859
        %2861 = vmatmul.f32.gmra.mxu0 %v2840
        %v2862 = vpop.f32.mrf.mxu0
        %v2863 = vadd.f32 0.0, %v2862
        %2864 = vdwg.mxu0
        %v2866 = vsel %vm692, %v2755, 0
        %v2869 = vsel %vm692, %v2758, 0
        %v2872 = vsel %vm692, %v2790, 0
        %v2875 = vsel %vm692, %v2793, 0
        %v2878 = vsel %vm692, %v2825, 0
        %v2881 = vsel %vm692, %v2828, 0
        %v2884 = vsel %vm692, %v2860, 0
        %v2887 = vsel %vm692, %v2863, 0
        %2889 = vmatpush.msra.mxu0 0.0
        %2890 = vmatpush.msra.mxu0 0.0
        %2891 = vmatpush.msra.mxu0 0.0
        %2892 = vmatpush.msra.mxu0 0.0
        %2893 = vmatpush.msra.mxu0 0.0
        %2894 = vmatpush.msra.mxu0 0.0
        %2895 = vmatpush.msra.mxu0 0.0
        %2896 = vmatpush.msra.mxu0 0.0
        %2897 = vmatpush.msra.mxu0 0.0
        %2898 = vmatpush.msra.mxu0 0.0
        %2899 = vmatpush.msra.mxu0 0.0
        %2900 = vmatpush.msra.mxu0 0.0
        %2901 = vmatpush.msra.mxu0 %v691
        %2902 = vmatpush.msra.mxu0 %v690
        %2903 = vmatpush.msra.mxu0 %v689
        %2904 = vmatpush.msra.mxu0 %v688
        %2905 = vmatmul.f32.gmra.mxu0 %v2866
        %v2906 = vpop.f32.mrf.mxu0
        %v2907 = vadd.f32 0.0, %v2906
        %2908 = vmatmul.f32.gmra.mxu0 %v2869
        %v2909 = vpop.f32.mrf.mxu0
        %v2910 = vadd.f32 0.0, %v2909
        %2911 = vmatmul.f32.gmra.mxu0 %v2872
        %v2912 = vpop.f32.mrf.mxu0
        %v2913 = vadd.f32 0.0, %v2912
        %2914 = vmatmul.f32.gmra.mxu0 %v2875
        %v2915 = vpop.f32.mrf.mxu0
        %v2916 = vadd.f32 0.0, %v2915
        %2917 = vmatmul.f32.gmra.mxu0 %v2878
        %v2918 = vpop.f32.mrf.mxu0
        %v2919 = vadd.f32 0.0, %v2918
        %2920 = vmatmul.f32.gmra.mxu0 %v2881
        %v2921 = vpop.f32.mrf.mxu0
        %v2922 = vadd.f32 0.0, %v2921
        %2923 = vmatmul.f32.gmra.mxu0 %v2884
        %v2924 = vpop.f32.mrf.mxu0
        %v2925 = vadd.f32 0.0, %v2924
        %2926 = vmatmul.f32.gmra.mxu0 %v2887
        %v2927 = vpop.f32.mrf.mxu0
        %v2928 = vadd.f32 0.0, %v2927
        %2929 = vdwg.mxu0
        %v2930 = vadd.f32 %v2361, %v2907
        %v2931 = vadd.f32 %v2362, %v2910
        %v2932 = vadd.f32 %v2363, %v2913
        %v2933 = vadd.f32 %v2364, %v2916
        %v2934 = vadd.f32 %v2365, %v2919
        %v2935 = vadd.f32 %v2366, %v2922
        %v2936 = vadd.f32 %v2367, %v2925
        %v2937 = vadd.f32 %v2368, %v2928
        %2938 = vst.msk [vmem:[%s419] sm:$0xff] %vm841, %v928
        %2939 = vst.msk [vmem:[%s419 + $0x8] sm:$0xff] %vm841, %v943
        %2940 = vst.msk [vmem:[%s419 + $0x10] sm:$0xff] %vm841, %v1473
        %2941 = vst.msk [vmem:[%s419 + $0x18] sm:$0xff] %vm841, %v1488
        %2942 = vst.msk [vmem:[%s419 + $0x20] sm:$0xff] %vm841, %v2050
        %2943 = vst.msk [vmem:[%s419 + $0x28] sm:$0xff] %vm841, %v2065
        %2944 = vst.msk [vmem:[%s419 + $0x30] sm:$0xff] %vm841, %v2619
        %2945 = vst.msk [vmem:[%s419 + $0x38] sm:$0xff] %vm841, %v2634
        %2946 = vst.msk [vmem:[%s419 + $0x40] sm:$0xff] %vm841, %v958
        %2947 = vst.msk [vmem:[%s419 + $0x48] sm:$0xff] %vm841, %v973
        %2948 = vst.msk [vmem:[%s419 + $0x50] sm:$0xff] %vm841, %v1503
        %2949 = vst.msk [vmem:[%s419 + $0x58] sm:$0xff] %vm841, %v1518
        %2950 = vst.msk [vmem:[%s419 + $0x60] sm:$0xff] %vm841, %v2080
        %2951 = vst.msk [vmem:[%s419 + $0x68] sm:$0xff] %vm841, %v2095
        %2952 = vst.msk [vmem:[%s419 + $0x70] sm:$0xff] %vm841, %v2649
        %2953 = vst.msk [vmem:[%s419 + $0x78] sm:$0xff] %vm841, %v2664
        %2954 = vst.msk [vmem:[%s419 + $0x80] sm:$0xff] %vm841, %v988
        %2955 = vst.msk [vmem:[%s419 + $0x88] sm:$0xff] %vm841, %v1003
        %2956 = vst.msk [vmem:[%s419 + $0x90] sm:$0xff] %vm841, %v1533
        %2957 = vst.msk [vmem:[%s419 + $0x98] sm:$0xff] %vm841, %v1548
        %2958 = vst.msk [vmem:[%s419 + $0xa0] sm:$0xff] %vm841, %v2110
        %2959 = vst.msk [vmem:[%s419 + $0xa8] sm:$0xff] %vm841, %v2125
        %2960 = vst.msk [vmem:[%s419 + $0xb0] sm:$0xff] %vm841, %v2679
        %2961 = vst.msk [vmem:[%s419 + $0xb8] sm:$0xff] %vm841, %v2694
        %2962 = vst.msk [vmem:[%s419 + $0xc0] sm:$0xff] %vm841, %v1018
        %2963 = vst.msk [vmem:[%s419 + $0xc8] sm:$0xff] %vm841, %v1033
        %2964 = vst.msk [vmem:[%s419 + $0xd0] sm:$0xff] %vm841, %v1563
        %2965 = vst.msk [vmem:[%s419 + $0xd8] sm:$0xff] %vm841, %v1578
        %2966 = vst.msk [vmem:[%s419 + $0xe0] sm:$0xff] %vm841, %v2140
        %2967 = vst.msk [vmem:[%s419 + $0xe8] sm:$0xff] %vm841, %v2155
        %2968 = vst.msk [vmem:[%s419 + $0xf0] sm:$0xff] %vm841, %v2709
        %2969 = vst.msk [vmem:[%s419 + $0xf8] sm:$0xff] %vm841, %v2724
        %2970 = vadd.xlane.f32.xlu0 %v2930
        %v2971 = vpop.xlane.xlu0 %2970
        %2972 = vadd.xlane.f32.xlu0 %v2931
        %v2973 = vpop.xlane.xlu0 %2972
        %2974 = vadd.xlane.f32.xlu0 %v2932
        %v2975 = vpop.xlane.xlu0 %2974
        %2976 = vadd.xlane.f32.xlu0 %v2933
        %v2977 = vpop.xlane.xlu0 %2976
        %2978 = vadd.xlane.f32.xlu0 %v2934
        %v2979 = vpop.xlane.xlu0 %2978
        %2980 = vadd.xlane.f32.xlu0 %v2935
        %v2981 = vpop.xlane.xlu0 %2980
        %2982 = vadd.xlane.f32.xlu0 %v2936
        %v2983 = vpop.xlane.xlu0 %2982
        %2984 = vadd.xlane.f32.xlu0 %v2937
        %v2985 = vpop.xlane.xlu0 %2984
        %v2986 = vrcp.pop 128.0
        %v2987 = vmul.f32 128.0, %v2986
        %v2988 = vsub.f32 1.0, %v2987
        %v2989 = vmul.f32 %v2986, %v2988
        %v2990 = vadd.f32 %v2986, %v2989
        %vm2991 = vweird.f32 %v2986
        %v2992 = vsel %vm2991, %v2986, %v2990
        %v2993 = vmul.f32 %v2971, %v2992
        %v2994 = vmul.f32 %v2973, %v2992
        %v2995 = vmul.f32 %v2975, %v2992
        %v2996 = vmul.f32 %v2977, %v2992
        %v2997 = vmul.f32 %v2979, %v2992
        %v2998 = vmul.f32 %v2981, %v2992
        %v2999 = vmul.f32 %v2983, %v2992
        %v3000 = vmul.f32 %v2985, %v2992
        %v3001 = vsub.f32 %v2930, %v2993
        %v3002 = vsub.f32 %v2931, %v2994
        %v3003 = vsub.f32 %v2932, %v2995
        %v3004 = vsub.f32 %v2933, %v2996
        %v3005 = vsub.f32 %v2934, %v2997
        %v3006 = vsub.f32 %v2935, %v2998
        %v3007 = vsub.f32 %v2936, %v2999
        %v3008 = vsub.f32 %v2937, %v3000
        %v3009 = vmul.f32 %v3001, %v3001
        %v3010 = vmul.f32 %v3002, %v3002
        %v3011 = vmul.f32 %v3003, %v3003
        %v3012 = vmul.f32 %v3004, %v3004
        %v3013 = vmul.f32 %v3005, %v3005
        %v3014 = vmul.f32 %v3006, %v3006
        %v3015 = vmul.f32 %v3007, %v3007
        %v3016 = vmul.f32 %v3008, %v3008
        %3017 = vadd.xlane.f32.xlu0 %v3009
        %v3018 = vpop.xlane.xlu0 %3017
        %3019 = vadd.xlane.f32.xlu0 %v3010
        %v3020 = vpop.xlane.xlu0 %3019
        %3021 = vadd.xlane.f32.xlu0 %v3011
        %v3022 = vpop.xlane.xlu0 %3021
        %3023 = vadd.xlane.f32.xlu0 %v3012
        %v3024 = vpop.xlane.xlu0 %3023
        %3025 = vadd.xlane.f32.xlu0 %v3013
        %v3026 = vpop.xlane.xlu0 %3025
        %3027 = vadd.xlane.f32.xlu0 %v3014
        %v3028 = vpop.xlane.xlu0 %3027
        %3029 = vadd.xlane.f32.xlu0 %v3015
        %v3030 = vpop.xlane.xlu0 %3029
        %3031 = vadd.xlane.f32.xlu0 %v3016
        %v3032 = vpop.xlane.xlu0 %3031
        %v3033 = vmul.f32 %v3018, %v2992
        %v3034 = vmul.f32 %v3020, %v2992
        %v3035 = vmul.f32 %v3022, %v2992
        %v3036 = vmul.f32 %v3024, %v2992
        %v3037 = vmul.f32 %v3026, %v2992
        %v3038 = vmul.f32 %v3028, %v2992
        %v3039 = vmul.f32 %v3030, %v2992
        %v3040 = vmul.f32 %v3032, %v2992
        %v3041 = vadd.f32 %v3033, 1e-05
        %v3042 = vadd.f32 %v3034, 1e-05
        %v3043 = vadd.f32 %v3035, 1e-05
        %v3044 = vadd.f32 %v3036, 1e-05
        %v3045 = vadd.f32 %v3037, 1e-05
        %v3046 = vadd.f32 %v3038, 1e-05
        %v3047 = vadd.f32 %v3039, 1e-05
        %v3048 = vadd.f32 %v3040, 1e-05
        %v3049 = vrsqrt.pop %v3041
        %v3050 = vmul.f32 %v3049, %v3041
        %v3051 = vmul.f32 %v3050, %v3049
        %v3052 = vmul.f32 0.5, %v3051
        %v3053 = vsub.f32 1.5, %v3052
        %v3054 = vmul.f32 %v3049, %v3053
        %vm3055 = vweird.f32 %v3041
        %vm3056 = vweird.f32 %v3049
        %vm3057 = vmor %vm3055, %vm3056
        %v3058 = vsel %vm3057, %v3049, %v3054
        %v3059 = vrsqrt.pop %v3042
        %v3060 = vmul.f32 %v3059, %v3042
        %v3061 = vmul.f32 %v3060, %v3059
        %v3062 = vmul.f32 0.5, %v3061
        %v3063 = vsub.f32 1.5, %v3062
        %v3064 = vmul.f32 %v3059, %v3063
        %vm3065 = vweird.f32 %v3042
        %vm3066 = vweird.f32 %v3059
        %vm3067 = vmor %vm3065, %vm3066
        %v3068 = vsel %vm3067, %v3059, %v3064
        %v3069 = vrsqrt.pop %v3043
        %v3070 = vmul.f32 %v3069, %v3043
        %v3071 = vmul.f32 %v3070, %v3069
        %v3072 = vmul.f32 0.5, %v3071
        %v3073 = vsub.f32 1.5, %v3072
        %v3074 = vmul.f32 %v3069, %v3073
        %vm3075 = vweird.f32 %v3043
        %vm3076 = vweird.f32 %v3069
        %vm3077 = vmor %vm3075, %vm3076
        %v3078 = vsel %vm3077, %v3069, %v3074
        %v3079 = vrsqrt.pop %v3044
        %v3080 = vmul.f32 %v3079, %v3044
        %v3081 = vmul.f32 %v3080, %v3079
        %v3082 = vmul.f32 0.5, %v3081
        %v3083 = vsub.f32 1.5, %v3082
        %v3084 = vmul.f32 %v3079, %v3083
        %vm3085 = vweird.f32 %v3044
        %vm3086 = vweird.f32 %v3079
        %vm3087 = vmor %vm3085, %vm3086
        %v3088 = vsel %vm3087, %v3079, %v3084
        %v3089 = vrsqrt.pop %v3045
        %v3090 = vmul.f32 %v3089, %v3045
        %v3091 = vmul.f32 %v3090, %v3089
        %v3092 = vmul.f32 0.5, %v3091
        %v3093 = vsub.f32 1.5, %v3092
        %v3094 = vmul.f32 %v3089, %v3093
        %vm3095 = vweird.f32 %v3045
        %vm3096 = vweird.f32 %v3089
        %vm3097 = vmor %vm3095, %vm3096
        %v3098 = vsel %vm3097, %v3089, %v3094
        %v3099 = vrsqrt.pop %v3046
        %v3100 = vmul.f32 %v3099, %v3046
        %v3101 = vmul.f32 %v3100, %v3099
        %v3102 = vmul.f32 0.5, %v3101
        %v3103 = vsub.f32 1.5, %v3102
        %v3104 = vmul.f32 %v3099, %v3103
        %vm3105 = vweird.f32 %v3046
        %vm3106 = vweird.f32 %v3099
        %vm3107 = vmor %vm3105, %vm3106
        %v3108 = vsel %vm3107, %v3099, %v3104
        %v3109 = vrsqrt.pop %v3047
        %v3110 = vmul.f32 %v3109, %v3047
        %v3111 = vmul.f32 %v3110, %v3109
        %v3112 = vmul.f32 0.5, %v3111
        %v3113 = vsub.f32 1.5, %v3112
        %v3114 = vmul.f32 %v3109, %v3113
        %vm3115 = vweird.f32 %v3047
        %vm3116 = vweird.f32 %v3109
        %vm3117 = vmor %vm3115, %vm3116
        %v3118 = vsel %vm3117, %v3109, %v3114
        %v3119 = vrsqrt.pop %v3048
        %v3120 = vmul.f32 %v3119, %v3048
        %v3121 = vmul.f32 %v3120, %v3119
        %v3122 = vmul.f32 0.5, %v3121
        %v3123 = vsub.f32 1.5, %v3122
        %v3124 = vmul.f32 %v3119, %v3123
        %vm3125 = vweird.f32 %v3048
        %vm3126 = vweird.f32 %v3119
        %vm3127 = vmor %vm3125, %vm3126
        %v3128 = vsel %vm3127, %v3119, %v3124
        %v3129 = vmul.f32 %v3001, %v3058
        %v3130 = vmul.f32 %v3002, %v3068
        %v3131 = vmul.f32 %v3003, %v3078
        %v3132 = vmul.f32 %v3004, %v3088
        %v3133 = vmul.f32 %v3005, %v3098
        %v3134 = vmul.f32 %v3006, %v3108
        %v3135 = vmul.f32 %v3007, %v3118
        %v3136 = vmul.f32 %v3008, %v3128
        %v3137 = vld [vmem:[#allocation10] sm:$0xff]
        %v3138 = vld [vmem:[#allocation10 + $0x8] sm:$0xff]
        %v3139 = vld [vmem:[#allocation10 + $0x10] sm:$0xff]
        %v3140 = vld [vmem:[#allocation10 + $0x18] sm:$0xff]
        %v3141 = vld [vmem:[#allocation10 + $0x20] sm:$0xff]
        %v3142 = vld [vmem:[#allocation10 + $0x28] sm:$0xff]
        %v3143 = vld [vmem:[#allocation10 + $0x30] sm:$0xff]
        %v3144 = vld [vmem:[#allocation10 + $0x38] sm:$0xff]
        %v3145 = vld [vmem:[#allocation10 + $0x40] sm:$0xff]
        %v3146 = vld [vmem:[#allocation10 + $0x48] sm:$0xff]
        %v3147 = vld [vmem:[#allocation10 + $0x50] sm:$0xff]
        %v3148 = vld [vmem:[#allocation10 + $0x58] sm:$0xff]
        %v3149 = vld [vmem:[#allocation10 + $0x60] sm:$0xff]
        %v3150 = vld [vmem:[#allocation10 + $0x68] sm:$0xff]
        %v3151 = vld [vmem:[#allocation10 + $0x70] sm:$0xff]
        %v3152 = vld [vmem:[#allocation10 + $0x78] sm:$0xff]
        %v3153 = vld [vmem:[#allocation10 + $0x80] sm:$0xff]
        %v3154 = vld [vmem:[#allocation10 + $0x88] sm:$0xff]
        %v3155 = vld [vmem:[#allocation10 + $0x90] sm:$0xff]
        %v3156 = vld [vmem:[#allocation10 + $0x98] sm:$0xff]
        %v3157 = vld [vmem:[#allocation10 + $0xa0] sm:$0xff]
        %v3158 = vld [vmem:[#allocation10 + $0xa8] sm:$0xff]
        %v3159 = vld [vmem:[#allocation10 + $0xb0] sm:$0xff]
        %v3160 = vld [vmem:[#allocation10 + $0xb8] sm:$0xff]
        %v3161 = vld [vmem:[#allocation10 + $0xc0] sm:$0xff]
        %v3162 = vld [vmem:[#allocation10 + $0xc8] sm:$0xff]
        %v3163 = vld [vmem:[#allocation10 + $0xd0] sm:$0xff]
        %v3164 = vld [vmem:[#allocation10 + $0xd8] sm:$0xff]
        %v3165 = vld [vmem:[#allocation10 + $0xe0] sm:$0xff]
        %v3166 = vld [vmem:[#allocation10 + $0xe8] sm:$0xff]
        %v3167 = vld [vmem:[#allocation10 + $0xf0] sm:$0xff]
        %v3168 = vld [vmem:[#allocation10 + $0xf8] sm:$0xff]
        %v3169 = vld [vmem:[#allocation10 + $0x100] sm:$0xff]
        %v3170 = vld [vmem:[#allocation10 + $0x108] sm:$0xff]
        %v3171 = vld [vmem:[#allocation10 + $0x110] sm:$0xff]
        %v3172 = vld [vmem:[#allocation10 + $0x118] sm:$0xff]
        %v3173 = vld [vmem:[#allocation10 + $0x120] sm:$0xff]
        %v3174 = vld [vmem:[#allocation10 + $0x128] sm:$0xff]
        %v3175 = vld [vmem:[#allocation10 + $0x130] sm:$0xff]
        %v3176 = vld [vmem:[#allocation10 + $0x138] sm:$0xff]
        %v3177 = vld [vmem:[#allocation10 + $0x140] sm:$0xff]
        %v3178 = vld [vmem:[#allocation10 + $0x148] sm:$0xff]
        %v3179 = vld [vmem:[#allocation10 + $0x150] sm:$0xff]
        %v3180 = vld [vmem:[#allocation10 + $0x158] sm:$0xff]
        %v3181 = vld [vmem:[#allocation10 + $0x160] sm:$0xff]
        %v3182 = vld [vmem:[#allocation10 + $0x168] sm:$0xff]
        %v3183 = vld [vmem:[#allocation10 + $0x170] sm:$0xff]
        %v3184 = vld [vmem:[#allocation10 + $0x178] sm:$0xff]
        %v3185 = vld [vmem:[#allocation10 + $0x180] sm:$0xff]
        %v3186 = vld [vmem:[#allocation10 + $0x188] sm:$0xff]
        %v3187 = vld [vmem:[#allocation10 + $0x190] sm:$0xff]
        %v3188 = vld [vmem:[#allocation10 + $0x198] sm:$0xff]
        %v3189 = vld [vmem:[#allocation10 + $0x1a0] sm:$0xff]
        %v3190 = vld [vmem:[#allocation10 + $0x1a8] sm:$0xff]
        %v3191 = vld [vmem:[#allocation10 + $0x1b0] sm:$0xff]
        %v3192 = vld [vmem:[#allocation10 + $0x1b8] sm:$0xff]
        %v3193 = vld [vmem:[#allocation10 + $0x1c0] sm:$0xff]
        %v3194 = vld [vmem:[#allocation10 + $0x1c8] sm:$0xff]
        %v3195 = vld [vmem:[#allocation10 + $0x1d0] sm:$0xff]
        %v3196 = vld [vmem:[#allocation10 + $0x1d8] sm:$0xff]
        %v3197 = vld [vmem:[#allocation10 + $0x1e0] sm:$0xff]
        %v3198 = vld [vmem:[#allocation10 + $0x1e8] sm:$0xff]
        %v3199 = vld [vmem:[#allocation10 + $0x1f0] sm:$0xff]
        %v3200 = vld [vmem:[#allocation10 + $0x1f8] sm:$0xff]
        %3201 = vmatpush.msra.mxu0 %v3197
        %3202 = vmatpush.msra.mxu0 %v3193
        %3203 = vmatpush.msra.mxu0 %v3189
        %3204 = vmatpush.msra.mxu0 %v3185
        %3205 = vmatpush.msra.mxu0 %v3181
        %3206 = vmatpush.msra.mxu0 %v3177
        %3207 = vmatpush.msra.mxu0 %v3173
        %3208 = vmatpush.msra.mxu0 %v3169
        %3209 = vmatpush.msra.mxu0 %v3165
        %3210 = vmatpush.msra.mxu0 %v3161
        %3211 = vmatpush.msra.mxu0 %v3157
        %3212 = vmatpush.msra.mxu0 %v3153
        %3213 = vmatpush.msra.mxu0 %v3149
        %3214 = vmatpush.msra.mxu0 %v3145
        %3215 = vmatpush.msra.mxu0 %v3141
        %3216 = vmatpush.msra.mxu0 %v3137
        %3217 = vmatmul.f32.gmra.mxu0 %v3129
        %v3218 = vpop.f32.mrf.mxu0
        %v3219 = vadd.f32 0.0, %v3218
        %3220 = vmatmul.f32.gmra.mxu0 %v3130
        %v3221 = vpop.f32.mrf.mxu0
        %v3222 = vadd.f32 0.0, %v3221
        %3223 = vmatmul.f32.gmra.mxu0 %v3131
        %v3224 = vpop.f32.mrf.mxu0
        %v3225 = vadd.f32 0.0, %v3224
        %3226 = vmatmul.f32.gmra.mxu0 %v3132
        %v3227 = vpop.f32.mrf.mxu0
        %v3228 = vadd.f32 0.0, %v3227
        %3229 = vmatmul.f32.gmra.mxu0 %v3133
        %v3230 = vpop.f32.mrf.mxu0
        %v3231 = vadd.f32 0.0, %v3230
        %3232 = vmatmul.f32.gmra.mxu0 %v3134
        %v3233 = vpop.f32.mrf.mxu0
        %v3234 = vadd.f32 0.0, %v3233
        %3235 = vmatmul.f32.gmra.mxu0 %v3135
        %v3236 = vpop.f32.mrf.mxu0
        %v3237 = vadd.f32 0.0, %v3236
        %3238 = vmatmul.f32.gmra.mxu0 %v3136
        %v3239 = vpop.f32.mrf.mxu0
        %v3240 = vadd.f32 0.0, %v3239
        %3241 = vdwg.mxu0
        %3242 = vmatpush.msra.mxu0 %v3198
        %3243 = vmatpush.msra.mxu0 %v3194
        %3244 = vmatpush.msra.mxu0 %v3190
        %3245 = vmatpush.msra.mxu0 %v3186
        %3246 = vmatpush.msra.mxu0 %v3182
        %3247 = vmatpush.msra.mxu0 %v3178
        %3248 = vmatpush.msra.mxu0 %v3174
        %3249 = vmatpush.msra.mxu0 %v3170
        %3250 = vmatpush.msra.mxu0 %v3166
        %3251 = vmatpush.msra.mxu0 %v3162
        %3252 = vmatpush.msra.mxu0 %v3158
        %3253 = vmatpush.msra.mxu0 %v3154
        %3254 = vmatpush.msra.mxu0 %v3150
        %3255 = vmatpush.msra.mxu0 %v3146
        %3256 = vmatpush.msra.mxu0 %v3142
        %3257 = vmatpush.msra.mxu0 %v3138
        %3258 = vmatmul.f32.gmra.mxu0 %v3129
        %v3259 = vpop.f32.mrf.mxu0
        %v3260 = vadd.f32 0.0, %v3259
        %3261 = vmatmul.f32.gmra.mxu0 %v3130
        %v3262 = vpop.f32.mrf.mxu0
        %v3263 = vadd.f32 0.0, %v3262
        %3264 = vmatmul.f32.gmra.mxu0 %v3131
        %v3265 = vpop.f32.mrf.mxu0
        %v3266 = vadd.f32 0.0, %v3265
        %3267 = vmatmul.f32.gmra.mxu0 %v3132
        %v3268 = vpop.f32.mrf.mxu0
        %v3269 = vadd.f32 0.0, %v3268
        %3270 = vmatmul.f32.gmra.mxu0 %v3133
        %v3271 = vpop.f32.mrf.mxu0
        %v3272 = vadd.f32 0.0, %v3271
        %3273 = vmatmul.f32.gmra.mxu0 %v3134
        %v3274 = vpop.f32.mrf.mxu0
        %v3275 = vadd.f32 0.0, %v3274
        %3276 = vmatmul.f32.gmra.mxu0 %v3135
        %v3277 = vpop.f32.mrf.mxu0
        %v3278 = vadd.f32 0.0, %v3277
        %3279 = vmatmul.f32.gmra.mxu0 %v3136
        %v3280 = vpop.f32.mrf.mxu0
        %v3281 = vadd.f32 0.0, %v3280
        %3282 = vdwg.mxu0
        %3283 = vmatpush.msra.mxu0 %v3199
        %3284 = vmatpush.msra.mxu0 %v3195
        %3285 = vmatpush.msra.mxu0 %v3191
        %3286 = vmatpush.msra.mxu0 %v3187
        %3287 = vmatpush.msra.mxu0 %v3183
        %3288 = vmatpush.msra.mxu0 %v3179
        %3289 = vmatpush.msra.mxu0 %v3175
        %3290 = vmatpush.msra.mxu0 %v3171
        %3291 = vmatpush.msra.mxu0 %v3167
        %3292 = vmatpush.msra.mxu0 %v3163
        %3293 = vmatpush.msra.mxu0 %v3159
        %3294 = vmatpush.msra.mxu0 %v3155
        %3295 = vmatpush.msra.mxu0 %v3151
        %3296 = vmatpush.msra.mxu0 %v3147
        %3297 = vmatpush.msra.mxu0 %v3143
        %3298 = vmatpush.msra.mxu0 %v3139
        %3299 = vmatmul.f32.gmra.mxu0 %v3129
        %v3300 = vpop.f32.mrf.mxu0
        %v3301 = vadd.f32 0.0, %v3300
        %3302 = vmatmul.f32.gmra.mxu0 %v3130
        %v3303 = vpop.f32.mrf.mxu0
        %v3304 = vadd.f32 0.0, %v3303
        %3305 = vmatmul.f32.gmra.mxu0 %v3131
        %v3306 = vpop.f32.mrf.mxu0
        %v3307 = vadd.f32 0.0, %v3306
        %3308 = vmatmul.f32.gmra.mxu0 %v3132
        %v3309 = vpop.f32.mrf.mxu0
        %v3310 = vadd.f32 0.0, %v3309
        %3311 = vmatmul.f32.gmra.mxu0 %v3133
        %v3312 = vpop.f32.mrf.mxu0
        %v3313 = vadd.f32 0.0, %v3312
        %3314 = vmatmul.f32.gmra.mxu0 %v3134
        %v3315 = vpop.f32.mrf.mxu0
        %v3316 = vadd.f32 0.0, %v3315
        %3317 = vmatmul.f32.gmra.mxu0 %v3135
        %v3318 = vpop.f32.mrf.mxu0
        %v3319 = vadd.f32 0.0, %v3318
        %3320 = vmatmul.f32.gmra.mxu0 %v3136
        %v3321 = vpop.f32.mrf.mxu0
        %v3322 = vadd.f32 0.0, %v3321
        %3323 = vdwg.mxu0
        %3324 = vmatpush.msra.mxu0 %v3200
        %3325 = vmatpush.msra.mxu0 %v3196
        %3326 = vmatpush.msra.mxu0 %v3192
        %3327 = vmatpush.msra.mxu0 %v3188
        %3328 = vmatpush.msra.mxu0 %v3184
        %3329 = vmatpush.msra.mxu0 %v3180
        %3330 = vmatpush.msra.mxu0 %v3176
        %3331 = vmatpush.msra.mxu0 %v3172
        %3332 = vmatpush.msra.mxu0 %v3168
        %3333 = vmatpush.msra.mxu0 %v3164
        %3334 = vmatpush.msra.mxu0 %v3160
        %3335 = vmatpush.msra.mxu0 %v3156
        %3336 = vmatpush.msra.mxu0 %v3152
        %3337 = vmatpush.msra.mxu0 %v3148
        %3338 = vmatpush.msra.mxu0 %v3144
        %3339 = vmatpush.msra.mxu0 %v3140
        %3340 = vmatmul.f32.gmra.mxu0 %v3129
        %v3341 = vpop.f32.mrf.mxu0
        %v3342 = vadd.f32 0.0, %v3341
        %3343 = vmatmul.f32.gmra.mxu0 %v3130
        %v3344 = vpop.f32.mrf.mxu0
        %v3345 = vadd.f32 0.0, %v3344
        %3346 = vmatmul.f32.gmra.mxu0 %v3131
        %v3347 = vpop.f32.mrf.mxu0
        %v3348 = vadd.f32 0.0, %v3347
        %3349 = vmatmul.f32.gmra.mxu0 %v3132
        %v3350 = vpop.f32.mrf.mxu0
        %v3351 = vadd.f32 0.0, %v3350
        %3352 = vmatmul.f32.gmra.mxu0 %v3133
        %v3353 = vpop.f32.mrf.mxu0
        %v3354 = vadd.f32 0.0, %v3353
        %3355 = vmatmul.f32.gmra.mxu0 %v3134
        %v3356 = vpop.f32.mrf.mxu0
        %v3357 = vadd.f32 0.0, %v3356
        %3358 = vmatmul.f32.gmra.mxu0 %v3135
        %v3359 = vpop.f32.mrf.mxu0
        %v3360 = vadd.f32 0.0, %v3359
        %3361 = vmatmul.f32.gmra.mxu0 %v3136
        %v3362 = vpop.f32.mrf.mxu0
        %v3363 = vadd.f32 0.0, %v3362
        %3364 = vdwg.mxu0
        %v3365 = vmax.f32 %v3219, 0.0
        %v3366 = vmax.f32 %v3260, 0.0
        %v3367 = vmax.f32 %v3301, 0.0
        %v3368 = vmax.f32 %v3342, 0.0
        %v3369 = vmax.f32 %v3222, 0.0
        %v3370 = vmax.f32 %v3263, 0.0
        %v3371 = vmax.f32 %v3304, 0.0
        %v3372 = vmax.f32 %v3345, 0.0
        %v3373 = vmax.f32 %v3225, 0.0
        %v3374 = vmax.f32 %v3266, 0.0
        %v3375 = vmax.f32 %v3307, 0.0
        %v3376 = vmax.f32 %v3348, 0.0
        %v3377 = vmax.f32 %v3228, 0.0
        %v3378 = vmax.f32 %v3269, 0.0
        %v3379 = vmax.f32 %v3310, 0.0
        %v3380 = vmax.f32 %v3351, 0.0
        %v3381 = vmax.f32 %v3231, 0.0
        %v3382 = vmax.f32 %v3272, 0.0
        %v3383 = vmax.f32 %v3313, 0.0
        %v3384 = vmax.f32 %v3354, 0.0
        %v3385 = vmax.f32 %v3234, 0.0
        %v3386 = vmax.f32 %v3275, 0.0
        %v3387 = vmax.f32 %v3316, 0.0
        %v3388 = vmax.f32 %v3357, 0.0
        %v3389 = vmax.f32 %v3237, 0.0
        %v3390 = vmax.f32 %v3278, 0.0
        %v3391 = vmax.f32 %v3319, 0.0
        %v3392 = vmax.f32 %v3360, 0.0
        %v3393 = vmax.f32 %v3240, 0.0
        %v3394 = vmax.f32 %v3281, 0.0
        %v3395 = vmax.f32 %v3322, 0.0
        %v3396 = vmax.f32 %v3363, 0.0
        %v3397 = vld [vmem:[#allocation11] sm:$0xff]
        %v3398 = vld [vmem:[#allocation11 + $0x8] sm:$0xff]
        %v3399 = vld [vmem:[#allocation11 + $0x10] sm:$0xff]
        %v3400 = vld [vmem:[#allocation11 + $0x18] sm:$0xff]
        %v3401 = vld [vmem:[#allocation11 + $0x20] sm:$0xff]
        %v3402 = vld [vmem:[#allocation11 + $0x28] sm:$0xff]
        %v3403 = vld [vmem:[#allocation11 + $0x30] sm:$0xff]
        %v3404 = vld [vmem:[#allocation11 + $0x38] sm:$0xff]
        %v3405 = vld [vmem:[#allocation11 + $0x40] sm:$0xff]
        %v3406 = vld [vmem:[#allocation11 + $0x48] sm:$0xff]
        %v3407 = vld [vmem:[#allocation11 + $0x50] sm:$0xff]
        %v3408 = vld [vmem:[#allocation11 + $0x58] sm:$0xff]
        %v3409 = vld [vmem:[#allocation11 + $0x60] sm:$0xff]
        %v3410 = vld [vmem:[#allocation11 + $0x68] sm:$0xff]
        %v3411 = vld [vmem:[#allocation11 + $0x70] sm:$0xff]
        %v3412 = vld [vmem:[#allocation11 + $0x78] sm:$0xff]
        %v3413 = vld [vmem:[#allocation11 + $0x80] sm:$0xff]
        %v3414 = vld [vmem:[#allocation11 + $0x88] sm:$0xff]
        %v3415 = vld [vmem:[#allocation11 + $0x90] sm:$0xff]
        %v3416 = vld [vmem:[#allocation11 + $0x98] sm:$0xff]
        %v3417 = vld [vmem:[#allocation11 + $0xa0] sm:$0xff]
        %v3418 = vld [vmem:[#allocation11 + $0xa8] sm:$0xff]
        %v3419 = vld [vmem:[#allocation11 + $0xb0] sm:$0xff]
        %v3420 = vld [vmem:[#allocation11 + $0xb8] sm:$0xff]
        %v3421 = vld [vmem:[#allocation11 + $0xc0] sm:$0xff]
        %v3422 = vld [vmem:[#allocation11 + $0xc8] sm:$0xff]
        %v3423 = vld [vmem:[#allocation11 + $0xd0] sm:$0xff]
        %v3424 = vld [vmem:[#allocation11 + $0xd8] sm:$0xff]
        %v3425 = vld [vmem:[#allocation11 + $0xe0] sm:$0xff]
        %v3426 = vld [vmem:[#allocation11 + $0xe8] sm:$0xff]
        %v3427 = vld [vmem:[#allocation11 + $0xf0] sm:$0xff]
        %v3428 = vld [vmem:[#allocation11 + $0xf8] sm:$0xff]
        %v3429 = vld [vmem:[#allocation11 + $0x100] sm:$0xff]
        %v3430 = vld [vmem:[#allocation11 + $0x108] sm:$0xff]
        %v3431 = vld [vmem:[#allocation11 + $0x110] sm:$0xff]
        %v3432 = vld [vmem:[#allocation11 + $0x118] sm:$0xff]
        %v3433 = vld [vmem:[#allocation11 + $0x120] sm:$0xff]
        %v3434 = vld [vmem:[#allocation11 + $0x128] sm:$0xff]
        %v3435 = vld [vmem:[#allocation11 + $0x130] sm:$0xff]
        %v3436 = vld [vmem:[#allocation11 + $0x138] sm:$0xff]
        %v3437 = vld [vmem:[#allocation11 + $0x140] sm:$0xff]
        %v3438 = vld [vmem:[#allocation11 + $0x148] sm:$0xff]
        %v3439 = vld [vmem:[#allocation11 + $0x150] sm:$0xff]
        %v3440 = vld [vmem:[#allocation11 + $0x158] sm:$0xff]
        %v3441 = vld [vmem:[#allocation11 + $0x160] sm:$0xff]
        %v3442 = vld [vmem:[#allocation11 + $0x168] sm:$0xff]
        %v3443 = vld [vmem:[#allocation11 + $0x170] sm:$0xff]
        %v3444 = vld [vmem:[#allocation11 + $0x178] sm:$0xff]
        %v3445 = vld [vmem:[#allocation11 + $0x180] sm:$0xff]
        %v3446 = vld [vmem:[#allocation11 + $0x188] sm:$0xff]
        %v3447 = vld [vmem:[#allocation11 + $0x190] sm:$0xff]
        %v3448 = vld [vmem:[#allocation11 + $0x198] sm:$0xff]
        %v3449 = vld [vmem:[#allocation11 + $0x1a0] sm:$0xff]
        %v3450 = vld [vmem:[#allocation11 + $0x1a8] sm:$0xff]
        %v3451 = vld [vmem:[#allocation11 + $0x1b0] sm:$0xff]
        %v3452 = vld [vmem:[#allocation11 + $0x1b8] sm:$0xff]
        %v3453 = vld [vmem:[#allocation11 + $0x1c0] sm:$0xff]
        %v3454 = vld [vmem:[#allocation11 + $0x1c8] sm:$0xff]
        %v3455 = vld [vmem:[#allocation11 + $0x1d0] sm:$0xff]
        %v3456 = vld [vmem:[#allocation11 + $0x1d8] sm:$0xff]
        %v3457 = vld [vmem:[#allocation11 + $0x1e0] sm:$0xff]
        %v3458 = vld [vmem:[#allocation11 + $0x1e8] sm:$0xff]
        %v3459 = vld [vmem:[#allocation11 + $0x1f0] sm:$0xff]
        %v3460 = vld [vmem:[#allocation11 + $0x1f8] sm:$0xff]
        %3461 = vmatpush.msra.mxu0 %v3412
        %3462 = vmatpush.msra.mxu0 %v3411
        %3463 = vmatpush.msra.mxu0 %v3410
        %3464 = vmatpush.msra.mxu0 %v3409
        %3465 = vmatpush.msra.mxu0 %v3408
        %3466 = vmatpush.msra.mxu0 %v3407
        %3467 = vmatpush.msra.mxu0 %v3406
        %3468 = vmatpush.msra.mxu0 %v3405
        %3469 = vmatpush.msra.mxu0 %v3404
        %3470 = vmatpush.msra.mxu0 %v3403
        %3471 = vmatpush.msra.mxu0 %v3402
        %3472 = vmatpush.msra.mxu0 %v3401
        %3473 = vmatpush.msra.mxu0 %v3400
        %3474 = vmatpush.msra.mxu0 %v3399
        %3475 = vmatpush.msra.mxu0 %v3398
        %3476 = vmatpush.msra.mxu0 %v3397
        %3477 = vmatmul.f32.gmra.mxu0 %v3365
        %v3478 = vpop.f32.mrf.mxu0
        %v3479 = vadd.f32 %v3129, %v3478
        %3480 = vmatmul.f32.gmra.mxu0 %v3369
        %v3481 = vpop.f32.mrf.mxu0
        %v3482 = vadd.f32 %v3130, %v3481
        %3483 = vmatmul.f32.gmra.mxu0 %v3373
        %v3484 = vpop.f32.mrf.mxu0
        %v3485 = vadd.f32 %v3131, %v3484
        %3486 = vmatmul.f32.gmra.mxu0 %v3377
        %v3487 = vpop.f32.mrf.mxu0
        %v3488 = vadd.f32 %v3132, %v3487
        %3489 = vmatmul.f32.gmra.mxu0 %v3381
        %v3490 = vpop.f32.mrf.mxu0
        %v3491 = vadd.f32 %v3133, %v3490
        %3492 = vmatmul.f32.gmra.mxu0 %v3385
        %v3493 = vpop.f32.mrf.mxu0
        %v3494 = vadd.f32 %v3134, %v3493
        %3495 = vmatmul.f32.gmra.mxu0 %v3389
        %v3496 = vpop.f32.mrf.mxu0
        %v3497 = vadd.f32 %v3135, %v3496
        %3498 = vmatmul.f32.gmra.mxu0 %v3393
        %v3499 = vpop.f32.mrf.mxu0
        %v3500 = vadd.f32 %v3136, %v3499
        %3501 = vdwg.mxu0
        %3502 = vmatpush.msra.mxu0 %v3428
        %3503 = vmatpush.msra.mxu0 %v3427
        %3504 = vmatpush.msra.mxu0 %v3426
        %3505 = vmatpush.msra.mxu0 %v3425
        %3506 = vmatpush.msra.mxu0 %v3424
        %3507 = vmatpush.msra.mxu0 %v3423
        %3508 = vmatpush.msra.mxu0 %v3422
        %3509 = vmatpush.msra.mxu0 %v3421
        %3510 = vmatpush.msra.mxu0 %v3420
        %3511 = vmatpush.msra.mxu0 %v3419
        %3512 = vmatpush.msra.mxu0 %v3418
        %3513 = vmatpush.msra.mxu0 %v3417
        %3514 = vmatpush.msra.mxu0 %v3416
        %3515 = vmatpush.msra.mxu0 %v3415
        %3516 = vmatpush.msra.mxu0 %v3414
        %3517 = vmatpush.msra.mxu0 %v3413
        %3518 = vmatmul.f32.gmra.mxu0 %v3366
        %v3519 = vpop.f32.mrf.mxu0
        %v3520 = vadd.f32 %v3479, %v3519
        %3521 = vmatmul.f32.gmra.mxu0 %v3370
        %v3522 = vpop.f32.mrf.mxu0
        %v3523 = vadd.f32 %v3482, %v3522
        %3524 = vmatmul.f32.gmra.mxu0 %v3374
        %v3525 = vpop.f32.mrf.mxu0
        %v3526 = vadd.f32 %v3485, %v3525
        %3527 = vmatmul.f32.gmra.mxu0 %v3378
        %v3528 = vpop.f32.mrf.mxu0
        %v3529 = vadd.f32 %v3488, %v3528
        %3530 = vmatmul.f32.gmra.mxu0 %v3382
        %v3531 = vpop.f32.mrf.mxu0
        %v3532 = vadd.f32 %v3491, %v3531
        %3533 = vmatmul.f32.gmra.mxu0 %v3386
        %v3534 = vpop.f32.mrf.mxu0
        %v3535 = vadd.f32 %v3494, %v3534
        %3536 = vmatmul.f32.gmra.mxu0 %v3390
        %v3537 = vpop.f32.mrf.mxu0
        %v3538 = vadd.f32 %v3497, %v3537
        %3539 = vmatmul.f32.gmra.mxu0 %v3394
        %v3540 = vpop.f32.mrf.mxu0
        %v3541 = vadd.f32 %v3500, %v3540
        %3542 = vdwg.mxu0
        %3543 = vmatpush.msra.mxu0 %v3444
        %3544 = vmatpush.msra.mxu0 %v3443
        %3545 = vmatpush.msra.mxu0 %v3442
        %3546 = vmatpush.msra.mxu0 %v3441
        %3547 = vmatpush.msra.mxu0 %v3440
        %3548 = vmatpush.msra.mxu0 %v3439
        %3549 = vmatpush.msra.mxu0 %v3438
        %3550 = vmatpush.msra.mxu0 %v3437
        %3551 = vmatpush.msra.mxu0 %v3436
        %3552 = vmatpush.msra.mxu0 %v3435
        %3553 = vmatpush.msra.mxu0 %v3434
        %3554 = vmatpush.msra.mxu0 %v3433
        %3555 = vmatpush.msra.mxu0 %v3432
        %3556 = vmatpush.msra.mxu0 %v3431
        %3557 = vmatpush.msra.mxu0 %v3430
        %3558 = vmatpush.msra.mxu0 %v3429
        %3559 = vmatmul.f32.gmra.mxu0 %v3367
        %v3560 = vpop.f32.mrf.mxu0
        %v3561 = vadd.f32 %v3520, %v3560
        %3562 = vmatmul.f32.gmra.mxu0 %v3371
        %v3563 = vpop.f32.mrf.mxu0
        %v3564 = vadd.f32 %v3523, %v3563
        %3565 = vmatmul.f32.gmra.mxu0 %v3375
        %v3566 = vpop.f32.mrf.mxu0
        %v3567 = vadd.f32 %v3526, %v3566
        %3568 = vmatmul.f32.gmra.mxu0 %v3379
        %v3569 = vpop.f32.mrf.mxu0
        %v3570 = vadd.f32 %v3529, %v3569
        %3571 = vmatmul.f32.gmra.mxu0 %v3383
        %v3572 = vpop.f32.mrf.mxu0
        %v3573 = vadd.f32 %v3532, %v3572
        %3574 = vmatmul.f32.gmra.mxu0 %v3387
        %v3575 = vpop.f32.mrf.mxu0
        %v3576 = vadd.f32 %v3535, %v3575
        %3577 = vmatmul.f32.gmra.mxu0 %v3391
        %v3578 = vpop.f32.mrf.mxu0
        %v3579 = vadd.f32 %v3538, %v3578
        %3580 = vmatmul.f32.gmra.mxu0 %v3395
        %v3581 = vpop.f32.mrf.mxu0
        %v3582 = vadd.f32 %v3541, %v3581
        %3583 = vdwg.mxu0
        %3584 = vmatpush.msra.mxu0 %v3460
        %3585 = vmatpush.msra.mxu0 %v3459
        %3586 = vmatpush.msra.mxu0 %v3458
        %3587 = vmatpush.msra.mxu0 %v3457
        %3588 = vmatpush.msra.mxu0 %v3456
        %3589 = vmatpush.msra.mxu0 %v3455
        %3590 = vmatpush.msra.mxu0 %v3454
        %3591 = vmatpush.msra.mxu0 %v3453
        %3592 = vmatpush.msra.mxu0 %v3452
        %3593 = vmatpush.msra.mxu0 %v3451
        %3594 = vmatpush.msra.mxu0 %v3450
        %3595 = vmatpush.msra.mxu0 %v3449
        %3596 = vmatpush.msra.mxu0 %v3448
        %3597 = vmatpush.msra.mxu0 %v3447
        %3598 = vmatpush.msra.mxu0 %v3446
        %3599 = vmatpush.msra.mxu0 %v3445
        %3600 = vmatmul.f32.gmra.mxu0 %v3368
        %v3601 = vpop.f32.mrf.mxu0
        %v3602 = vadd.f32 %v3561, %v3601
        %3603 = vmatmul.f32.gmra.mxu0 %v3372
        %v3604 = vpop.f32.mrf.mxu0
        %v3605 = vadd.f32 %v3564, %v3604
        %3606 = vmatmul.f32.gmra.mxu0 %v3376
        %v3607 = vpop.f32.mrf.mxu0
        %v3608 = vadd.f32 %v3567, %v3607
        %3609 = vmatmul.f32.gmra.mxu0 %v3380
        %v3610 = vpop.f32.mrf.mxu0
        %v3611 = vadd.f32 %v3570, %v3610
        %3612 = vmatmul.f32.gmra.mxu0 %v3384
        %v3613 = vpop.f32.mrf.mxu0
        %v3614 = vadd.f32 %v3573, %v3613
        %3615 = vmatmul.f32.gmra.mxu0 %v3388
        %v3616 = vpop.f32.mrf.mxu0
        %v3617 = vadd.f32 %v3576, %v3616
        %3618 = vmatmul.f32.gmra.mxu0 %v3392
        %v3619 = vpop.f32.mrf.mxu0
        %v3620 = vadd.f32 %v3579, %v3619
        %3621 = vmatmul.f32.gmra.mxu0 %v3396
        %v3622 = vpop.f32.mrf.mxu0
        %v3623 = vadd.f32 %v3582, %v3622
        %3624 = vdwg.mxu0
        %3625 = vadd.xlane.f32.xlu0 %v3602
        %v3626 = vpop.xlane.xlu0 %3625
        %3627 = vadd.xlane.f32.xlu0 %v3605
        %v3628 = vpop.xlane.xlu0 %3627
        %3629 = vadd.xlane.f32.xlu0 %v3608
        %v3630 = vpop.xlane.xlu0 %3629
        %3631 = vadd.xlane.f32.xlu0 %v3611
        %v3632 = vpop.xlane.xlu0 %3631
        %3633 = vadd.xlane.f32.xlu0 %v3614
        %v3634 = vpop.xlane.xlu0 %3633
        %3635 = vadd.xlane.f32.xlu0 %v3617
        %v3636 = vpop.xlane.xlu0 %3635
        %3637 = vadd.xlane.f32.xlu0 %v3620
        %v3638 = vpop.xlane.xlu0 %3637
        %3639 = vadd.xlane.f32.xlu0 %v3623
        %v3640 = vpop.xlane.xlu0 %3639
        %v3641 = vmul.f32 %v3626, %v2992
        %v3642 = vmul.f32 %v3628, %v2992
        %v3643 = vmul.f32 %v3630, %v2992
        %v3644 = vmul.f32 %v3632, %v2992
        %v3645 = vmul.f32 %v3634, %v2992
        %v3646 = vmul.f32 %v3636, %v2992
        %v3647 = vmul.f32 %v3638, %v2992
        %v3648 = vmul.f32 %v3640, %v2992
        %v3649 = vsub.f32 %v3602, %v3641
        %v3650 = vsub.f32 %v3605, %v3642
        %v3651 = vsub.f32 %v3608, %v3643
        %v3652 = vsub.f32 %v3611, %v3644
        %v3653 = vsub.f32 %v3614, %v3645
        %v3654 = vsub.f32 %v3617, %v3646
        %v3655 = vsub.f32 %v3620, %v3647
        %v3656 = vsub.f32 %v3623, %v3648
        %v3657 = vmul.f32 %v3649, %v3649
        %v3658 = vmul.f32 %v3650, %v3650
        %v3659 = vmul.f32 %v3651, %v3651
        %v3660 = vmul.f32 %v3652, %v3652
        %v3661 = vmul.f32 %v3653, %v3653
        %v3662 = vmul.f32 %v3654, %v3654
        %v3663 = vmul.f32 %v3655, %v3655
        %v3664 = vmul.f32 %v3656, %v3656
        %3665 = vadd.xlane.f32.xlu0 %v3657
        %v3666 = vpop.xlane.xlu0 %3665
        %3667 = vadd.xlane.f32.xlu0 %v3658
        %v3668 = vpop.xlane.xlu0 %3667
        %3669 = vadd.xlane.f32.xlu0 %v3659
        %v3670 = vpop.xlane.xlu0 %3669
        %3671 = vadd.xlane.f32.xlu0 %v3660
        %v3672 = vpop.xlane.xlu0 %3671
        %3673 = vadd.xlane.f32.xlu0 %v3661
        %v3674 = vpop.xlane.xlu0 %3673
        %3675 = vadd.xlane.f32.xlu0 %v3662
        %v3676 = vpop.xlane.xlu0 %3675
        %3677 = vadd.xlane.f32.xlu0 %v3663
        %v3678 = vpop.xlane.xlu0 %3677
        %3679 = vadd.xlane.f32.xlu0 %v3664
        %v3680 = vpop.xlane.xlu0 %3679
        %v3681 = vmul.f32 %v3666, %v2992
        %v3682 = vmul.f32 %v3668, %v2992
        %v3683 = vmul.f32 %v3670, %v2992
        %v3684 = vmul.f32 %v3672, %v2992
        %v3685 = vmul.f32 %v3674, %v2992
        %v3686 = vmul.f32 %v3676, %v2992
        %v3687 = vmul.f32 %v3678, %v2992
        %v3688 = vmul.f32 %v3680, %v2992
        %v3689 = vadd.f32 %v3681, 1e-05
        %v3690 = vadd.f32 %v3682, 1e-05
        %v3691 = vadd.f32 %v3683, 1e-05
        %v3692 = vadd.f32 %v3684, 1e-05
        %v3693 = vadd.f32 %v3685, 1e-05
        %v3694 = vadd.f32 %v3686, 1e-05
        %v3695 = vadd.f32 %v3687, 1e-05
        %v3696 = vadd.f32 %v3688, 1e-05
        %v3697 = vrsqrt.pop %v3689
        %v3698 = vmul.f32 %v3697, %v3689
        %v3699 = vmul.f32 %v3698, %v3697
        %v3700 = vmul.f32 0.5, %v3699
        %v3701 = vsub.f32 1.5, %v3700
        %v3702 = vmul.f32 %v3697, %v3701
        %vm3703 = vweird.f32 %v3689
        %vm3704 = vweird.f32 %v3697
        %vm3705 = vmor %vm3703, %vm3704
        %v3706 = vsel %vm3705, %v3697, %v3702
        %v3707 = vrsqrt.pop %v3690
        %v3708 = vmul.f32 %v3707, %v3690
        %v3709 = vmul.f32 %v3708, %v3707
        %v3710 = vmul.f32 0.5, %v3709
        %v3711 = vsub.f32 1.5, %v3710
        %v3712 = vmul.f32 %v3707, %v3711
        %vm3713 = vweird.f32 %v3690
        %vm3714 = vweird.f32 %v3707
        %vm3715 = vmor %vm3713, %vm3714
        %v3716 = vsel %vm3715, %v3707, %v3712
        %v3717 = vrsqrt.pop %v3691
        %v3718 = vmul.f32 %v3717, %v3691
        %v3719 = vmul.f32 %v3718, %v3717
        %v3720 = vmul.f32 0.5, %v3719
        %v3721 = vsub.f32 1.5, %v3720
        %v3722 = vmul.f32 %v3717, %v3721
        %vm3723 = vweird.f32 %v3691
        %vm3724 = vweird.f32 %v3717
        %vm3725 = vmor %vm3723, %vm3724
        %v3726 = vsel %vm3725, %v3717, %v3722
        %v3727 = vrsqrt.pop %v3692
        %v3728 = vmul.f32 %v3727, %v3692
        %v3729 = vmul.f32 %v3728, %v3727
        %v3730 = vmul.f32 0.5, %v3729
        %v3731 = vsub.f32 1.5, %v3730
        %v3732 = vmul.f32 %v3727, %v3731
        %vm3733 = vweird.f32 %v3692
        %vm3734 = vweird.f32 %v3727
        %vm3735 = vmor %vm3733, %vm3734
        %v3736 = vsel %vm3735, %v3727, %v3732
        %v3737 = vrsqrt.pop %v3693
        %v3738 = vmul.f32 %v3737, %v3693
        %v3739 = vmul.f32 %v3738, %v3737
        %v3740 = vmul.f32 0.5, %v3739
        %v3741 = vsub.f32 1.5, %v3740
        %v3742 = vmul.f32 %v3737, %v3741
        %vm3743 = vweird.f32 %v3693
        %vm3744 = vweird.f32 %v3737
        %vm3745 = vmor %vm3743, %vm3744
        %v3746 = vsel %vm3745, %v3737, %v3742
        %v3747 = vrsqrt.pop %v3694
        %v3748 = vmul.f32 %v3747, %v3694
        %v3749 = vmul.f32 %v3748, %v3747
        %v3750 = vmul.f32 0.5, %v3749
        %v3751 = vsub.f32 1.5, %v3750
        %v3752 = vmul.f32 %v3747, %v3751
        %vm3753 = vweird.f32 %v3694
        %vm3754 = vweird.f32 %v3747
        %vm3755 = vmor %vm3753, %vm3754
        %v3756 = vsel %vm3755, %v3747, %v3752
        %v3757 = vrsqrt.pop %v3695
        %v3758 = vmul.f32 %v3757, %v3695
        %v3759 = vmul.f32 %v3758, %v3757
        %v3760 = vmul.f32 0.5, %v3759
        %v3761 = vsub.f32 1.5, %v3760
        %v3762 = vmul.f32 %v3757, %v3761
        %vm3763 = vweird.f32 %v3695
        %vm3764 = vweird.f32 %v3757
        %vm3765 = vmor %vm3763, %vm3764
        %v3766 = vsel %vm3765, %v3757, %v3762
        %v3767 = vrsqrt.pop %v3696
        %v3768 = vmul.f32 %v3767, %v3696
        %v3769 = vmul.f32 %v3768, %v3767
        %v3770 = vmul.f32 0.5, %v3769
        %v3771 = vsub.f32 1.5, %v3770
        %v3772 = vmul.f32 %v3767, %v3771
        %vm3773 = vweird.f32 %v3696
        %vm3774 = vweird.f32 %v3767
        %vm3775 = vmor %vm3773, %vm3774
        %v3776 = vsel %vm3775, %v3767, %v3772
        %v3777 = vmul.f32 %v3649, %v3706
        %v3778 = vmul.f32 %v3650, %v3716
        %v3779 = vmul.f32 %v3651, %v3726
        %v3780 = vmul.f32 %v3652, %v3736
        %v3781 = vmul.f32 %v3653, %v3746
        %v3782 = vmul.f32 %v3654, %v3756
        %v3783 = vmul.f32 %v3655, %v3766
        %v3784 = vmul.f32 %v3656, %v3776
        %3785 = vst [vmem:[%s412] sm:$0xff] %v3777
        %3786 = vst [vmem:[%s412 + $0x8] sm:$0xff] %v3778
        %3787 = vst [vmem:[%s412 + $0x10] sm:$0xff] %v3779
        %3788 = vst [vmem:[%s412 + $0x18] sm:$0xff] %v3780
        %3789 = vst [vmem:[%s412 + $0x20] sm:$0xff] %v3781
        %3790 = vst [vmem:[%s412 + $0x28] sm:$0xff] %v3782
        %3791 = vst [vmem:[%s412 + $0x30] sm:$0xff] %v3783
        %3792 = vst [vmem:[%s412 + $0x38] sm:$0xff] %v3784
        %s3793 = sand.u32 %s177, 1
        %s3794 = scalar_lea.sflag [#allocation4], %s3793
        %s3795 = sand.u32 %s177, 1
        %s3796 = smul.addr %s3795, 64
        %s3797 = scalar_lea.vmem [#allocation13], %s3796
        %s3798 = sand.u32 %s203, 1
        %s3799 = scalar_lea.sflag [#allocation15], %s3798
        %s3800 = sand.u32 %s203, 1
        %s3801 = smul.addr %s3800, 256
        %s3802 = scalar_lea.vmem [#allocation14], %s3801
        // Predicated region
        $region69: #{tpu_custom_call.1} parent=43 // pred_check
          %p3803 = pneg %p187
        $region70: #{tpu_custom_call.1} parent=43 // pred_check_branch
          %3805 = sbr.rel (%p3803) target = $region72
        $region71: #{tpu_custom_call.1} parent=43 // pred_region
          %s3806 = smul.u32 4, %s33
          %3808 = vsyncadd %s3794, 0
          %s3809 = smul.addr %s3806, 2
          %s3810 = smul.addr %s3809, 8
          %s3811 = scalar_lea.hbm %s6, %s3810
          %s3812 = sshll.u32 %s3797, 4
          %s3813 = int_to_ptr.vmem [resolvable:$true] %s3812
          %s3814 = sshll.u32 %s3811, 4
          %s3815 = int_to_ptr.hbm [resolvable:$true] %s3814
          %3820 = dma.vmem_to_hbm [thread:$0]  %s3813, 1024, %s3815, %s3794, 128, 128, 8
        $region72: #{tpu_custom_call.1} parent=43 // pred_fallthru
          _
        // Predicated region
        $region73: #{tpu_custom_call.1} parent=43 // pred_check
          %p3821 = pneg %p213
        $region74: #{tpu_custom_call.1} parent=43 // pred_check_branch
          %3823 = sbr.rel (%p3821) target = $region76
        $region75: #{tpu_custom_call.1} parent=43 // pred_region
          %s3824 = smul.u32 4, %s33
          %3826 = vsyncadd %s3799, 0
          %s3827 = smul.addr %s3824, 8
          %s3828 = smul.addr %s3827, 8
          %s3829 = scalar_lea.hbm %s7, %s3828
          %s3830 = sshll.u32 %s3802, 4
          %s3831 = int_to_ptr.vmem [resolvable:$true] %s3830
          %s3832 = sshll.u32 %s3829, 4
          %s3833 = int_to_ptr.hbm [resolvable:$true] %s3832
          %3838 = dma.vmem_to_hbm [thread:$0]  %s3831, 4096, %s3833, %s3799, 128, 128, 8
        $region76: #{tpu_custom_call.1} parent=43 // pred_fallthru
          _
      $region44: #{tpu_custom_call.1} parent=5 // pred_fallthru
        _
      %p3839 = scmp.le.s32.totalorder 2, %s28
      // Predicated region
      $region77: #{tpu_custom_call.1} parent=5 // pred_check
        %p3840 = pneg %p3839
      $region78: #{tpu_custom_call.1} parent=5 // pred_check_branch
        %3842 = sbr.rel (%p3840) target = $region80
      $region79: #{tpu_custom_call.1} parent=5 // pred_region
        %s3843 = ssub.s32 %s28, 2
        // Predicated region
        $region81: #{tpu_custom_call.1} parent=79 // pred_check
          %p3844 = pneg %p193
        $region82: #{tpu_custom_call.1} parent=79 // pred_check_branch
          %3846 = sbr.rel (%p3844) target = $region84
        $region83: #{tpu_custom_call.1} parent=79 // pred_region
          %s3847 = sand.u32 %s178, 1
          %s3848 = scalar_lea.sflag [#allocation4], %s3847
          %s3849 = sand.u32 %s178, 1
          %s3850 = smul.addr %s3849, 64
          %s3851 = scalar_lea.vmem [#allocation13], %s3850
          %3853 = dma.done %s3848, 1024
        $region84: #{tpu_custom_call.1} parent=79 // pred_fallthru
          _
        // Predicated region
        $region85: #{tpu_custom_call.1} parent=79 // pred_check
          %p3854 = pneg %p219
        $region86: #{tpu_custom_call.1} parent=79 // pred_check_branch
          %3856 = sbr.rel (%p3854) target = $region88
        $region87: #{tpu_custom_call.1} parent=79 // pred_region
          %s3857 = sand.u32 %s204, 1
          %s3858 = scalar_lea.sflag [#allocation15], %s3857
          %s3859 = sand.u32 %s204, 1
          %s3860 = smul.addr %s3859, 256
          %s3861 = scalar_lea.vmem [#allocation14], %s3860
          %3863 = dma.done %s3858, 4096
        $region88: #{tpu_custom_call.1} parent=79 // pred_fallthru
          _
      $region80: #{tpu_custom_call.1} parent=5 // pred_fallthru
        _
    $region6: #{tpu_custom_call.1} parent=1 // loop_footer
      %s32 = sadd.s32 1, %s28
    $region7: #{tpu_custom_call.1} parent=1 // loop_footer_branch
      %27 = sbr.rel target = $region3
    $region8: #{tpu_custom_call.1} parent=1 // loop_exit
      _
    %3864 = vsyncpa [#allocation3], 1
    %s3865 = scalar_lea.sflag [#allocation3], 1
    %3866 = vsyncpa %s3865, 1
    %3867 = vsyncpa [#allocation6], 1
    %s3868 = scalar_lea.sflag [#allocation6], 1
    %3869 = vsyncpa %s3868, 1
    %3870 = vsyncpa [#allocation9], 1
    %3871 = vsyncpa [#allocation12], 1
    %3872 = vsyncpa [#allocation4], 1
    %s3873 = scalar_lea.sflag [#allocation4], 1
    %3874 = vsyncpa %s3873, 1
    %3875 = vsyncpa [#allocation15], 1
    %s3876 = scalar_lea.sflag [#allocation15], 1
    %3877 = vsyncpa %s3876, 1

</llo_original>
